<compile_context>
chip_gen: v7x
topology: tpu7x:2x2x1
jax: 0.10.0
libtpu: 0.0.40
codegen_flags: <defaults>
</compile_context>

<pallas_src>
import functools

import jax
import jax.numpy as jnp
import numpy as np
from jax import lax
from jax.experimental import pallas as pl
from jax.experimental.pallas import tpu as pltpu

PARAM_ORDER = [
    "cpe_w", "cpe_b",
    "n1_g", "n1_b",
    "qkv_w", "qkv_b",
    "lepe_w", "lepe_b",
    "n2_g", "n2_b",
    "fc1_w", "fc1_b",
    "fc2_w", "fc2_b",
]


# ---------------- the Pallas kernel -----------------------------------------

def mlla_block_kernel(x_ref, sp_ref, sn_ref, cos_ref, sin_ref, rp_ref, hm_ref,
                      cpe_w, cpe_b, n1g, n1b, qkv_w, qkv_b,
                      lepe_w, lepe_b, n2g, n2b, f1w, f1b, f2w, f2b,
                      o_ref, *, num_heads, seq_len, batch_block):
    M, C = x_ref.shape                      # M = batch_block * seq_len
    H, N, Bt = num_heads, seq_len, batch_block
    D = C // H
    scale = float(D) ** -0.5

    x = x_ref[...]                          # (M, C) float32
    sp = sp_ref[...]                        # (M, M) "previous row" shift (block-diag)
    sn = sn_ref[...]                        # (M, M) "next row" shift (block-diag)

    def dwconv3(inp, w, b):
        # depthwise conv1d (kernel=3, padding=1) along the sequence, per channel,
        # with the shifts (and zero boundaries) folded into tiny MXU matmuls.
        prev = jnp.dot(sp, inp, preferred_element_type=jnp.float32)
        nxt = jnp.dot(sn, inp, preferred_element_type=jnp.float32)
        return prev * w[0:1] + inp * w[1:2] + nxt * w[2:3] + b

    def layernorm(inp, g, b, eps=1e-5):
        mu = jnp.mean(inp, axis=-1, keepdims=True)
        var = jnp.mean(jnp.square(inp - mu), axis=-1, keepdims=True)
        return (inp - mu) * lax.rsqrt(var + eps) * g + b

    # --- x = x + cpe(x) ------------------------------------------------------
    x = x + dwconv3(x, cpe_w[...], cpe_b[...])
    res1 = x

    # --- norm1 -> qkv --------------------------------------------------------
    xn = layernorm(x, n1g[...], n1b[...])
    qkv = jnp.dot(xn, qkv_w[...], preferred_element_type=jnp.float32) + qkv_b[...]
    q = qkv[:, :C]
    k = qkv[:, C:2 * C]
    v = qkv[:, 2 * C:]

    # ELU(z) + 1  ==  z+1 if z>0 else exp(z)
    q = jnp.where(q > 0, q + 1.0, jnp.exp(q))
    k = jnp.where(k > 0, k + 1.0, jnp.exp(k))

    # --- interleaved RoPE as a fixed signed pair-swap matmul ------------------
    #   (q @ P)[:, 2i] = -q[:, 2i+1],  (q @ P)[:, 2i+1] = q[:, 2i]
    cosf = cos_ref[...]
    sinf = sin_ref[...]
    P = rp_ref[...]
    q = q * cosf + jnp.dot(q, P, preferred_element_type=jnp.float32) * sinf
    k = k * cosf + jnp.dot(k, P, preferred_element_type=jnp.float32) * sinf
    q = q * scale                            # fold the score scale into q once

    # --- per-head softmax attention, batched over the Bt sequences ------------
    # Head selection via lane masks (exact: masked lanes contribute 0 to the
    # contraction), so no unaligned lane slices and no concatenate; each head's
    # output lands directly in its own lanes of the accumulator.
    k3 = k.reshape(Bt, N, C)
    hm = hm_ref[...]                         # (H, C) 0/1 head lane masks
    attn = jnp.zeros((Bt, N, C), jnp.float32)
    for h in range(H):
        m_h = hm[h:h + 1, :]                 # (1, C)
        qh = (q * m_h).reshape(Bt, N, C)
        vh = (v * m_h).reshape(Bt, N, C)
        s = jnp.einsum("bnc,bmc->bnm", qh, k3,
                       preferred_element_type=jnp.float32)        # (Bt, N, N)
        s = s - jnp.max(s, axis=-1, keepdims=True)
        e = jnp.exp(s)
        w = e * pl.reciprocal(jnp.sum(e, axis=-1, keepdims=True), approx=True)
        attn = attn + jnp.einsum("bnm,bmc->bnc", w, vh,
                                 preferred_element_type=jnp.float32)
    attn = attn.reshape(M, C)

    # LePE: depthwise conv over the sequence on v (already (rows, C) layout)
    lepe = dwconv3(v, lepe_w[...], lepe_b[...])

    x = res1 + attn + lepe
    res2 = x

    # --- norm2 -> MLP (exact erf GELU, matching nn.GELU() default) -----------
    xn2 = layernorm(x, n2g[...], n2b[...])
    h1 = jnp.dot(xn2, f1w[...], preferred_element_type=jnp.float32) + f1b[...]
    h1 = 0.5 * h1 * (1.0 + lax.erf(h1 * 0.7071067811865476))
    mlp = jnp.dot(h1, f2w[...], preferred_element_type=jnp.float32) + f2b[...]

    o_ref[...] = res2 + mlp


# ---------------- wrapper ----------------------------------------------------

def mlla_eeg_block(x, params, num_heads, batch_block=None):
    B, N, C = x.shape
    H = num_heads
    D = C // H

    # Choose how many sequences each grid step processes (target >=256 rows so
    # the MXU M-dim and the sublane axis are filled; must tile B cleanly and
    # keep the row-block a multiple of 8 unless it covers the whole array).
    if batch_block is None:
        bt = min(B, max(1, (256 + N - 1) // N))
        while bt > 1 and bt != B and (B % bt != 0 or (bt * N) % 8 != 0):
            bt -= 1
        if B % bt != 0 or ((bt * N) % 8 != 0 and bt != B):
            bt = B
        batch_block = bt
    Bt = batch_block
    M = Bt * N
    num_blocks = B // Bt

    # --- host-precomputed structural constants -------------------------------
    # Block-diagonal shift matrices: prev[i] = x[i-1], next[i] = x[i+1] within
    # each length-N sequence, zero at sequence boundaries (dwconv as matmul).
    idx = np.arange(M)
    sp = np.zeros((M, M), np.float32)
    sn = np.zeros((M, M), np.float32)
    r = idx[idx % N != 0]
    sp[r, r - 1] = 1.0
    r = idx[idx % N != N - 1]
    sn[r, r + 1] = 1.0

    # RoPE pair swap-with-sign as a fixed (C, C) matrix.
    P = np.zeros((C, C), np.float32)
    ev = np.arange(0, C, 2)
    P[ev + 1, ev] = -1.0
    P[ev, ev + 1] = 1.0

    # Per-head lane masks (H, C).
    hm = np.zeros((H, C), np.float32)
    for h in range(H):
        hm[h, h * D:(h + 1) * D] = 1.0

    # RoPE cos/sin tables tiled over the Bt sequences of one block.
    cos_t = jnp.tile(params["rope_cos"], (Bt, 1))        # (Bt*N, C)
    sin_t = jnp.tile(params["rope_sin"], (Bt, 1))

    const_arrs = [jnp.asarray(sp), jnp.asarray(sn), cos_t, sin_t,
                  jnp.asarray(P), jnp.asarray(hm)]
    learned = [params[key] for key in PARAM_ORDER]

    xf = x.reshape(B * N, C)

    kernel = functools.partial(mlla_block_kernel, num_heads=H, seq_len=N,
                               batch_block=Bt)

    def const_spec(a):
        return pl.BlockSpec(a.shape, lambda i: (0, 0))

    in_specs = [pl.BlockSpec((M, C), lambda i: (i, 0))]
    in_specs += [const_spec(a) for a in const_arrs + learned]

    # Advisory cost estimate so XLA schedules neighbours sensibly.
    flops = int(num_blocks * (
        2 * (2 * 2 * M * M * C)            # cpe + lepe shift matmuls
        + 2 * M * C * (3 * C)              # qkv projection
        + 2 * (2 * M * C * C)              # RoPE pair-swap matmuls (q, k)
        + H * (2 * 2 * Bt * N * N * C)     # attention scores + weighted sums
        + 2 * (2 * M * C * C)))            # MLP fc1 + fc2 (hidden = C)
    transcendentals = int(num_blocks * (3 * M * C + H * Bt * N * N))
    bytes_accessed = int(4 * (2 * B * N * C
                              + sum(int(np.prod(a.shape))
                                    for a in const_arrs + learned)))

    out = pl.pallas_call(
        kernel,
        out_shape=jax.ShapeDtypeStruct((B * N, C), x.dtype),
        grid=(num_blocks,),
        in_specs=in_specs,
        out_specs=pl.BlockSpec((M, C), lambda i: (i, 0)),
        compiler_params=pltpu.CompilerParams(
            dimension_semantics=("parallel",)),
        cost_estimate=pl.CostEstimate(flops=flops,
                                      transcendentals=transcendentals,
                                      bytes_accessed=bytes_accessed),
    )(xf, *const_arrs, *learned)
    return out.reshape(B, N, C)


# ---------------- deterministic parameter init ------------------------------

def init_params(key, C, H, N):
    D = C // H
    ks = jax.random.split(key, 16)

    def nrm(k, shape, s=0.1):
        return jax.random.normal(k, shape, jnp.float32) * s

    params = {
        "cpe_w": nrm(ks[0], (3, C)),
        "cpe_b": nrm(ks[1], (1, C)),
        "n1_g": 1.0 + nrm(ks[2], (1, C)),
        "n1_b": nrm(ks[3], (1, C)),
        "qkv_w": nrm(ks[4], (C, 3 * C)),       # stored as x @ W
        "qkv_b": nrm(ks[5], (1, 3 * C)),
        "lepe_w": nrm(ks[6], (3, C)),
        "lepe_b": nrm(ks[7], (1, C)),
        "n2_g": 1.0 + nrm(ks[8], (1, C)),
        "n2_b": nrm(ks[9], (1, C)),
        "fc1_w": nrm(ks[10], (C, C)),          # mlp_ratio = 1.0 -> hidden = C
        "fc1_b": nrm(ks[11], (1, C)),
        "fc2_w": nrm(ks[12], (C, C)),
        "fc2_b": nrm(ks[13], (1, C)),
    }

    # RoPE tables (per head_dim D), pairwise-duplicated and tiled over heads.
    pos = jnp.arange(N, dtype=jnp.float32)[:, None]
    inv = jnp.exp(jnp.arange(0, D, 2, dtype=jnp.float32)
                  * (-jnp.log(jnp.float32(10000.0)) / D))
    ang = pos * inv                                        # (N, D//2)
    cos_f = jnp.repeat(jnp.cos(ang), 2, axis=1)            # (N, D) interleaved
    sin_f = jnp.repeat(jnp.sin(ang), 2, axis=1)
    params["rope_cos"] = jnp.tile(cos_f, (1, H))           # (N, C)
    params["rope_sin"] = jnp.tile(sin_f, (1, H))
    return params


# ---------------- pure-JAX reference (mirrors the PyTorch forward) ----------

def ref_forward(x, params, num_heads):
    B, N, C = x.shape
    D = C // num_heads

    def dwconv(inp, w, b):
        pad = jnp.pad(inp, ((0, 0), (1, 1), (0, 0)))
        return w[0] * pad[:, :-2] + w[1] * pad[:, 1:-1] + w[2] * pad[:, 2:] + b

    def ln(inp, g, b, eps=1e-5):
        mu = inp.mean(-1, keepdims=True)
        var = ((inp - mu) ** 2).mean(-1, keepdims=True)
        return (inp - mu) / jnp.sqrt(var + eps) * g + b

    x = x + dwconv(x, params["cpe_w"], params["cpe_b"][0])
    res = x
    xn = ln(x, params["n1_g"][0], params["n1_b"][0])
    qkv = xn @ params["qkv_w"] + params["qkv_b"][0]
    qkv = qkv.reshape(B, N, 3, num_heads, D).transpose(2, 0, 3, 1, 4)
    q, k, v = qkv[0], qkv[1], qkv[2]
    q = jax.nn.elu(q) + 1.0
    k = jax.nn.elu(k) + 1.0

    pos = jnp.arange(N, dtype=jnp.float32)[:, None]
    inv = jnp.exp(jnp.arange(0, D, 2, dtype=jnp.float32)
                  * (-jnp.log(jnp.float32(10000.0)) / D))
    ang = pos * inv
    cos_h, sin_h = jnp.cos(ang), jnp.sin(ang)

    def rope(z):
        z1, z2 = z[..., ::2], z[..., 1::2]
        out = jnp.stack([z1 * cos_h - z2 * sin_h, z1 * sin_h + z2 * cos_h], -1)
        return out.reshape(z.shape)

    q, k = rope(q), rope(k)
    scale = D ** -0.5
    s = jnp.einsum("bhnd,bhmd->bhnm", q, k) * scale
    w = jax.nn.softmax(s, axis=-1)
    attn = jnp.einsum("bhnm,bhmd->bhnd", w, v)
    attn = attn.transpose(0, 2, 1, 3).reshape(B, N, C)
    v_seq = v.transpose(0, 2, 1, 3).reshape(B, N, C)
    lepe = dwconv(v_seq, params["lepe_w"], params["lepe_b"][0])
    x = res + attn + lepe
    res = x
    xn = ln(x, params["n2_g"][0], params["n2_b"][0])
    h = xn @ params["fc1_w"] + params["fc1_b"][0]
    h = 0.5 * h * (1.0 + lax.erf(h * 0.7071067811865476))
    y = h @ params["fc2_w"] + params["fc2_b"][0]
    return res + y


# ---------------- main -------------------------------------------------------

if __name__ == "__main__":
    B, N, C, H = 2, 8, 32, 4        # batch, seq, dim, num_heads (head_dim = 8)
    key = jax.random.PRNGKey(0)
    kx, kp = jax.random.split(key)
    x = jax.random.normal(kx, (B, N, C), jnp.float32)
    params = init_params(kp, C, H, N)

    out = mlla_eeg_block(x, params, H)
    out = jax.block_until_ready(out)

    ref = ref_forward(x, params, H)
    # Tolerance accounts for the approximate (EUP) reciprocal used for the
    # softmax normalisation inside the kernel.
    np.testing.assert_allclose(np.asarray(out), np.asarray(ref),
                               rtol=5e-3, atol=5e-3)
    print("KERNEL_OK")
</pallas_src>

<mosaic_0001>
module attributes {stable_mosaic.version = 11 : i64} {
  func.func @mlla_block_kernel(%arg0: i32, %arg1: memref<16x32xf32, #tpu.memory_space<vmem>>, %arg2: memref<16x16xf32, #tpu.memory_space<vmem>>, %arg3: memref<16x16xf32, #tpu.memory_space<vmem>>, %arg4: memref<16x32xf32, #tpu.memory_space<vmem>>, %arg5: memref<16x32xf32, #tpu.memory_space<vmem>>, %arg6: memref<32x32xf32, #tpu.memory_space<vmem>>, %arg7: memref<4x32xf32, #tpu.memory_space<vmem>>, %arg8: memref<3x32xf32, #tpu.memory_space<vmem>>, %arg9: memref<1x32xf32, #tpu.memory_space<vmem>>, %arg10: memref<1x32xf32, #tpu.memory_space<vmem>>, %arg11: memref<1x32xf32, #tpu.memory_space<vmem>>, %arg12: memref<32x96xf32, #tpu.memory_space<vmem>>, %arg13: memref<1x96xf32, #tpu.memory_space<vmem>>, %arg14: memref<3x32xf32, #tpu.memory_space<vmem>>, %arg15: memref<1x32xf32, #tpu.memory_space<vmem>>, %arg16: memref<1x32xf32, #tpu.memory_space<vmem>>, %arg17: memref<1x32xf32, #tpu.memory_space<vmem>>, %arg18: memref<32x32xf32, #tpu.memory_space<vmem>>, %arg19: memref<1x32xf32, #tpu.memory_space<vmem>>, %arg20: memref<32x32xf32, #tpu.memory_space<vmem>>, %arg21: memref<1x32xf32, #tpu.memory_space<vmem>>, %arg22: memref<16x32xf32, #tpu.memory_space<vmem>>) attributes {dimension_semantics = [#tpu.dimension_semantics<parallel>], iteration_bounds = array<i64: 1>, scalar_prefetch = 0 : i64, scratch_operands = 0 : i64, tpu.core_type = #tpu.core_type<tc>, window_params = [{transform_indices = @transform_0, window_bounds = array<i64: 16, 32>}, {pipeline_mode = #tpu.pipeline_mode<synchronous>, transform_indices = @transform_1, window_bounds = array<i64: 16, 16>}, {pipeline_mode = #tpu.pipeline_mode<synchronous>, transform_indices = @transform_2, window_bounds = array<i64: 16, 16>}, {pipeline_mode = #tpu.pipeline_mode<synchronous>, transform_indices = @transform_3, window_bounds = array<i64: 16, 32>}, {pipeline_mode = #tpu.pipeline_mode<synchronous>, transform_indices = @transform_4, window_bounds = array<i64: 16, 32>}, {pipeline_mode = #tpu.pipeline_mode<synchronous>, transform_indices = @transform_5, window_bounds = array<i64: 32, 32>}, {pipeline_mode = #tpu.pipeline_mode<synchronous>, transform_indices = @transform_6, window_bounds = array<i64: 4, 32>}, {pipeline_mode = #tpu.pipeline_mode<synchronous>, transform_indices = @transform_7, window_bounds = array<i64: 3, 32>}, {pipeline_mode = #tpu.pipeline_mode<synchronous>, transform_indices = @transform_8, window_bounds = array<i64: 1, 32>}, {pipeline_mode = #tpu.pipeline_mode<synchronous>, transform_indices = @transform_9, window_bounds = array<i64: 1, 32>}, {pipeline_mode = #tpu.pipeline_mode<synchronous>, transform_indices = @transform_10, window_bounds = array<i64: 1, 32>}, {pipeline_mode = #tpu.pipeline_mode<synchronous>, transform_indices = @transform_11, window_bounds = array<i64: 32, 96>}, {pipeline_mode = #tpu.pipeline_mode<synchronous>, transform_indices = @transform_12, window_bounds = array<i64: 1, 96>}, {pipeline_mode = #tpu.pipeline_mode<synchronous>, transform_indices = @transform_13, window_bounds = array<i64: 3, 32>}, {pipeline_mode = #tpu.pipeline_mode<synchronous>, transform_indices = @transform_14, window_bounds = array<i64: 1, 32>}, {pipeline_mode = #tpu.pipeline_mode<synchronous>, transform_indices = @transform_15, window_bounds = array<i64: 1, 32>}, {pipeline_mode = #tpu.pipeline_mode<synchronous>, transform_indices = @transform_16, window_bounds = array<i64: 1, 32>}, {pipeline_mode = #tpu.pipeline_mode<synchronous>, transform_indices = @transform_17, window_bounds = array<i64: 32, 32>}, {pipeline_mode = #tpu.pipeline_mode<synchronous>, transform_indices = @transform_18, window_bounds = array<i64: 1, 32>}, {pipeline_mode = #tpu.pipeline_mode<synchronous>, transform_indices = @transform_19, window_bounds = array<i64: 32, 32>}, {pipeline_mode = #tpu.pipeline_mode<synchronous>, transform_indices = @transform_20, window_bounds = array<i64: 1, 32>}, {transform_indices = @transform_21, window_bounds = array<i64: 16, 32>}]} {
    %c0 = arith.constant 0 : index
    %c0_0 = arith.constant 0 : index
    %0 = vector.load %arg1[%c0, %c0_0] : memref<16x32xf32, #tpu.memory_space<vmem>>, vector<16x32xf32>
    %c0_1 = arith.constant 0 : index
    %c0_2 = arith.constant 0 : index
    %1 = vector.load %arg2[%c0_1, %c0_2] : memref<16x16xf32, #tpu.memory_space<vmem>>, vector<16x16xf32>
    %c0_3 = arith.constant 0 : index
    %c0_4 = arith.constant 0 : index
    %2 = vector.load %arg3[%c0_3, %c0_4] : memref<16x16xf32, #tpu.memory_space<vmem>>, vector<16x16xf32>
    %c0_5 = arith.constant 0 : index
    %c0_6 = arith.constant 0 : index
    %3 = vector.load %arg8[%c0_5, %c0_6] : memref<3x32xf32, #tpu.memory_space<vmem>>, vector<3x32xf32>
    %c0_7 = arith.constant 0 : index
    %c0_8 = arith.constant 0 : index
    %4 = vector.load %arg9[%c0_7, %c0_8] : memref<1x32xf32, #tpu.memory_space<vmem>>, vector<1x32xf32>
    %cst = arith.constant dense<0.000000e+00> : vector<16x32xf32>
    %5 = tpu.matmul %1, %0, %cst {dimension_numbers = #tpu.dot_dimension_numbers<[1], [0], [0], [1], [0, 0, 1, 1], [], []>} : vector<16x16xf32>, vector<16x32xf32>, vector<16x32xf32> -> vector<16x32xf32>
    %cst_9 = arith.constant dense<0.000000e+00> : vector<16x32xf32>
    %6 = tpu.matmul %2, %0, %cst_9 {dimension_numbers = #tpu.dot_dimension_numbers<[1], [0], [0], [1], [0, 0, 1, 1], [], []>} : vector<16x16xf32>, vector<16x32xf32>, vector<16x32xf32> -> vector<16x32xf32>
    %7 = vector.extract_strided_slice %3 {offsets = [0, 0], sizes = [1, 32], strides = [1, 1]} : vector<3x32xf32> to vector<1x32xf32>
    %8 = vector.broadcast %7 : vector<1x32xf32> to vector<16x32xf32>
    %9 = arith.mulf %5, %8 : vector<16x32xf32>
    %10 = vector.extract_strided_slice %3 {offsets = [1, 0], sizes = [1, 32], strides = [1, 1]} : vector<3x32xf32> to vector<1x32xf32>
    %11 = vector.broadcast %10 : vector<1x32xf32> to vector<16x32xf32>
    %12 = arith.mulf %0, %11 : vector<16x32xf32>
    %13 = arith.addf %9, %12 : vector<16x32xf32>
    %14 = vector.extract_strided_slice %3 {offsets = [2, 0], sizes = [1, 32], strides = [1, 1]} : vector<3x32xf32> to vector<1x32xf32>
    %15 = vector.broadcast %14 : vector<1x32xf32> to vector<16x32xf32>
    %16 = arith.mulf %6, %15 : vector<16x32xf32>
    %17 = arith.addf %13, %16 : vector<16x32xf32>
    %18 = vector.broadcast %4 : vector<1x32xf32> to vector<16x32xf32>
    %19 = arith.addf %17, %18 : vector<16x32xf32>
    %20 = arith.addf %0, %19 : vector<16x32xf32>
    %c0_10 = arith.constant 0 : index
    %c0_11 = arith.constant 0 : index
    %21 = vector.load %arg10[%c0_10, %c0_11] : memref<1x32xf32, #tpu.memory_space<vmem>>, vector<1x32xf32>
    %c0_12 = arith.constant 0 : index
    %c0_13 = arith.constant 0 : index
    %22 = vector.load %arg11[%c0_12, %c0_13] : memref<1x32xf32, #tpu.memory_space<vmem>>, vector<1x32xf32>
    %cst_14 = arith.constant dense<0.000000e+00> : vector<16xf32>
    %23 = vector.multi_reduction <add>, %20, %cst_14 [1] : vector<16x32xf32> to vector<16xf32>
    %24 = vector.shape_cast %23 : vector<16xf32> to vector<16x1xf32>
    %cst_15 = arith.constant 3.200000e+01 : f32
    %25 = vector.broadcast %cst_15 : f32 to vector<16x1xf32>
    %26 = arith.divf %24, %25 : vector<16x1xf32>
    %27 = vector.broadcast %26 : vector<16x1xf32> to vector<16x32xf32>
    %28 = arith.subf %20, %27 : vector<16x32xf32>
    %29 = arith.mulf %28, %28 : vector<16x32xf32>
    %cst_16 = arith.constant dense<0.000000e+00> : vector<16xf32>
    %30 = vector.multi_reduction <add>, %29, %cst_16 [1] : vector<16x32xf32> to vector<16xf32>
    %31 = vector.shape_cast %30 : vector<16xf32> to vector<16x1xf32>
    %cst_17 = arith.constant 3.200000e+01 : f32
    %32 = vector.broadcast %cst_17 : f32 to vector<16x1xf32>
    %33 = arith.divf %31, %32 : vector<16x1xf32>
    %34 = vector.broadcast %26 : vector<16x1xf32> to vector<16x32xf32>
    %35 = arith.subf %20, %34 : vector<16x32xf32>
    %cst_18 = arith.constant 9.99999974E-6 : f32
    %36 = vector.broadcast %cst_18 : f32 to vector<16x1xf32>
    %37 = arith.addf %33, %36 : vector<16x1xf32>
    %38 = math.rsqrt %37 : vector<16x1xf32>
    %39 = vector.broadcast %38 : vector<16x1xf32> to vector<16x32xf32>
    %40 = arith.mulf %35, %39 : vector<16x32xf32>
    %41 = vector.broadcast %21 : vector<1x32xf32> to vector<16x32xf32>
    %42 = arith.mulf %40, %41 : vector<16x32xf32>
    %43 = vector.broadcast %22 : vector<1x32xf32> to vector<16x32xf32>
    %44 = arith.addf %42, %43 : vector<16x32xf32>
    %c0_19 = arith.constant 0 : index
    %c0_20 = arith.constant 0 : index
    %45 = vector.load %arg12[%c0_19, %c0_20] : memref<32x96xf32, #tpu.memory_space<vmem>>, vector<32x96xf32>
    %cst_21 = arith.constant dense<0.000000e+00> : vector<16x96xf32>
    %46 = tpu.matmul %44, %45, %cst_21 {dimension_numbers = #tpu.dot_dimension_numbers<[1], [0], [0], [1], [0, 0, 1, 1], [], []>} : vector<16x32xf32>, vector<32x96xf32>, vector<16x96xf32> -> vector<16x96xf32>
    %c0_22 = arith.constant 0 : index
    %c0_23 = arith.constant 0 : index
    %47 = vector.load %arg13[%c0_22, %c0_23] : memref<1x96xf32, #tpu.memory_space<vmem>>, vector<1x96xf32>
    %48 = vector.broadcast %47 : vector<1x96xf32> to vector<16x96xf32>
    %49 = arith.addf %46, %48 : vector<16x96xf32>
    %50 = vector.extract_strided_slice %49 {offsets = [0, 0], sizes = [16, 32], strides = [1, 1]} : vector<16x96xf32> to vector<16x32xf32>
    %51 = vector.extract_strided_slice %49 {offsets = [0, 32], sizes = [16, 32], strides = [1, 1]} : vector<16x96xf32> to vector<16x32xf32>
    %52 = vector.extract_strided_slice %49 {offsets = [0, 64], sizes = [16, 32], strides = [1, 1]} : vector<16x96xf32> to vector<16x32xf32>
    %cst_24 = arith.constant 0.000000e+00 : f32
    %53 = vector.broadcast %cst_24 : f32 to vector<16x32xf32>
    %54 = arith.cmpf ogt, %50, %53 : vector<16x32xf32>
    %cst_25 = arith.constant 1.000000e+00 : f32
    %55 = vector.broadcast %cst_25 : f32 to vector<16x32xf32>
    %56 = arith.addf %50, %55 : vector<16x32xf32>
    %57 = math.exp %50 : vector<16x32xf32>
    %58 = arith.select %54, %56, %57 : vector<16x32xi1>, vector<16x32xf32>
    %cst_26 = arith.constant 0.000000e+00 : f32
    %59 = vector.broadcast %cst_26 : f32 to vector<16x32xf32>
    %60 = arith.cmpf ogt, %51, %59 : vector<16x32xf32>
    %cst_27 = arith.constant 1.000000e+00 : f32
    %61 = vector.broadcast %cst_27 : f32 to vector<16x32xf32>
    %62 = arith.addf %51, %61 : vector<16x32xf32>
    %63 = math.exp %51 : vector<16x32xf32>
    %64 = arith.select %60, %62, %63 : vector<16x32xi1>, vector<16x32xf32>
    %c0_28 = arith.constant 0 : index
    %c0_29 = arith.constant 0 : index
    %65 = vector.load %arg4[%c0_28, %c0_29] : memref<16x32xf32, #tpu.memory_space<vmem>>, vector<16x32xf32>
    %c0_30 = arith.constant 0 : index
    %c0_31 = arith.constant 0 : index
    %66 = vector.load %arg5[%c0_30, %c0_31] : memref<16x32xf32, #tpu.memory_space<vmem>>, vector<16x32xf32>
    %c0_32 = arith.constant 0 : index
    %c0_33 = arith.constant 0 : index
    %67 = vector.load %arg6[%c0_32, %c0_33] : memref<32x32xf32, #tpu.memory_space<vmem>>, vector<32x32xf32>
    %68 = arith.mulf %58, %65 : vector<16x32xf32>
    %cst_34 = arith.constant dense<0.000000e+00> : vector<16x32xf32>
    %69 = tpu.matmul %58, %67, %cst_34 {dimension_numbers = #tpu.dot_dimension_numbers<[1], [0], [0], [1], [0, 0, 1, 1], [], []>} : vector<16x32xf32>, vector<32x32xf32>, vector<16x32xf32> -> vector<16x32xf32>
    %70 = arith.mulf %69, %66 : vector<16x32xf32>
    %71 = arith.addf %68, %70 : vector<16x32xf32>
    %72 = arith.mulf %64, %65 : vector<16x32xf32>
    %cst_35 = arith.constant dense<0.000000e+00> : vector<16x32xf32>
    %73 = tpu.matmul %64, %67, %cst_35 {dimension_numbers = #tpu.dot_dimension_numbers<[1], [0], [0], [1], [0, 0, 1, 1], [], []>} : vector<16x32xf32>, vector<32x32xf32>, vector<16x32xf32> -> vector<16x32xf32>
    %74 = arith.mulf %73, %66 : vector<16x32xf32>
    %75 = arith.addf %72, %74 : vector<16x32xf32>
    %cst_36 = arith.constant 0.353553385 : f32
    %76 = vector.broadcast %cst_36 : f32 to vector<16x32xf32>
    %77 = arith.mulf %71, %76 : vector<16x32xf32>
    %78 = vector.shape_cast %75 : vector<16x32xf32> to vector<2x8x32xf32>
    %c0_37 = arith.constant 0 : index
    %c0_38 = arith.constant 0 : index
    %79 = vector.load %arg7[%c0_37, %c0_38] : memref<4x32xf32, #tpu.memory_space<vmem>>, vector<4x32xf32>
    %cst_39 = arith.constant 0.000000e+00 : f32
    %80 = vector.broadcast %cst_39 : f32 to vector<2x8x32xf32>
    %81 = vector.extract_strided_slice %79 {offsets = [0, 0], sizes = [1, 32], strides = [1, 1]} : vector<4x32xf32> to vector<1x32xf32>
    %82 = vector.broadcast %81 : vector<1x32xf32> to vector<16x32xf32>
    %83 = arith.mulf %77, %82 : vector<16x32xf32>
    %84 = vector.shape_cast %83 : vector<16x32xf32> to vector<2x8x32xf32>
    %85 = vector.broadcast %81 : vector<1x32xf32> to vector<16x32xf32>
    %86 = arith.mulf %52, %85 : vector<16x32xf32>
    %87 = vector.shape_cast %86 : vector<16x32xf32> to vector<2x8x32xf32>
    "tpu.trace_start"() <{level = 10 : i32, message = "bnc,bmc->bnm"}> : () -> ()
    %cst_40 = arith.constant dense<0.000000e+00> : vector<2x8x8xf32>
    %88 = tpu.matmul %84, %78, %cst_40 {dimension_numbers = #tpu.dot_dimension_numbers<[2], [2], [1], [1], [0, 0, 0, 1, 1, 1], [0], [0]>} : vector<2x8x32xf32>, vector<2x8x32xf32>, vector<2x8x8xf32> -> vector<2x8x8xf32>
    "tpu.trace_stop"() : () -> ()
    %cst_41 = arith.constant dense<0xFF800000> : vector<2x8xf32>
    %89 = vector.multi_reduction <maximumf>, %88, %cst_41 [2] : vector<2x8x8xf32> to vector<2x8xf32>
    %90 = vector.shape_cast %89 : vector<2x8xf32> to vector<2x8x1xf32>
    %91 = vector.broadcast %90 : vector<2x8x1xf32> to vector<2x8x8xf32>
    %92 = arith.subf %88, %91 : vector<2x8x8xf32>
    %93 = math.exp %92 : vector<2x8x8xf32>
    %cst_42 = arith.constant dense<0.000000e+00> : vector<2x8xf32>
    %94 = vector.multi_reduction <add>, %93, %cst_42 [2] : vector<2x8x8xf32> to vector<2x8xf32>
    %95 = vector.shape_cast %94 : vector<2x8xf32> to vector<2x8x1xf32>
    %96 = tpu.reciprocal %95 {approx = true} : vector<2x8x1xf32> -> vector<2x8x1xf32>
    %97 = vector.broadcast %96 : vector<2x8x1xf32> to vector<2x8x8xf32>
    %98 = arith.mulf %93, %97 : vector<2x8x8xf32>
    "tpu.trace_start"() <{level = 10 : i32, message = "bnm,bmc->bnc"}> : () -> ()
    %cst_43 = arith.constant dense<0.000000e+00> : vector<2x8x32xf32>
    %99 = tpu.matmul %98, %87, %cst_43 {dimension_numbers = #tpu.dot_dimension_numbers<[2], [1], [1], [2], [0, 0, 0, 1, 1, 2], [0], [0]>} : vector<2x8x8xf32>, vector<2x8x32xf32>, vector<2x8x32xf32> -> vector<2x8x32xf32>
    "tpu.trace_stop"() : () -> ()
    %100 = arith.addf %80, %99 : vector<2x8x32xf32>
    %101 = vector.extract_strided_slice %79 {offsets = [1, 0], sizes = [1, 32], strides = [1, 1]} : vector<4x32xf32> to vector<1x32xf32>
    %102 = vector.broadcast %101 : vector<1x32xf32> to vector<16x32xf32>
    %103 = arith.mulf %77, %102 : vector<16x32xf32>
    %104 = vector.shape_cast %103 : vector<16x32xf32> to vector<2x8x32xf32>
    %105 = vector.broadcast %101 : vector<1x32xf32> to vector<16x32xf32>
    %106 = arith.mulf %52, %105 : vector<16x32xf32>
    %107 = vector.shape_cast %106 : vector<16x32xf32> to vector<2x8x32xf32>
    "tpu.trace_start"() <{level = 10 : i32, message = "bnc,bmc->bnm"}> : () -> ()
    %cst_44 = arith.constant dense<0.000000e+00> : vector<2x8x8xf32>
    %108 = tpu.matmul %104, %78, %cst_44 {dimension_numbers = #tpu.dot_dimension_numbers<[2], [2], [1], [1], [0, 0, 0, 1, 1, 1], [0], [0]>} : vector<2x8x32xf32>, vector<2x8x32xf32>, vector<2x8x8xf32> -> vector<2x8x8xf32>
    "tpu.trace_stop"() : () -> ()
    %cst_45 = arith.constant dense<0xFF800000> : vector<2x8xf32>
    %109 = vector.multi_reduction <maximumf>, %108, %cst_45 [2] : vector<2x8x8xf32> to vector<2x8xf32>
    %110 = vector.shape_cast %109 : vector<2x8xf32> to vector<2x8x1xf32>
    %111 = vector.broadcast %110 : vector<2x8x1xf32> to vector<2x8x8xf32>
    %112 = arith.subf %108, %111 : vector<2x8x8xf32>
    %113 = math.exp %112 : vector<2x8x8xf32>
    %cst_46 = arith.constant dense<0.000000e+00> : vector<2x8xf32>
    %114 = vector.multi_reduction <add>, %113, %cst_46 [2] : vector<2x8x8xf32> to vector<2x8xf32>
    %115 = vector.shape_cast %114 : vector<2x8xf32> to vector<2x8x1xf32>
    %116 = tpu.reciprocal %115 {approx = true} : vector<2x8x1xf32> -> vector<2x8x1xf32>
    %117 = vector.broadcast %116 : vector<2x8x1xf32> to vector<2x8x8xf32>
    %118 = arith.mulf %113, %117 : vector<2x8x8xf32>
    "tpu.trace_start"() <{level = 10 : i32, message = "bnm,bmc->bnc"}> : () -> ()
    %cst_47 = arith.constant dense<0.000000e+00> : vector<2x8x32xf32>
    %119 = tpu.matmul %118, %107, %cst_47 {dimension_numbers = #tpu.dot_dimension_numbers<[2], [1], [1], [2], [0, 0, 0, 1, 1, 2], [0], [0]>} : vector<2x8x8xf32>, vector<2x8x32xf32>, vector<2x8x32xf32> -> vector<2x8x32xf32>
    "tpu.trace_stop"() : () -> ()
    %120 = arith.addf %100, %119 : vector<2x8x32xf32>
    %121 = vector.extract_strided_slice %79 {offsets = [2, 0], sizes = [1, 32], strides = [1, 1]} : vector<4x32xf32> to vector<1x32xf32>
    %122 = vector.broadcast %121 : vector<1x32xf32> to vector<16x32xf32>
    %123 = arith.mulf %77, %122 : vector<16x32xf32>
    %124 = vector.shape_cast %123 : vector<16x32xf32> to vector<2x8x32xf32>
    %125 = vector.broadcast %121 : vector<1x32xf32> to vector<16x32xf32>
    %126 = arith.mulf %52, %125 : vector<16x32xf32>
    %127 = vector.shape_cast %126 : vector<16x32xf32> to vector<2x8x32xf32>
    "tpu.trace_start"() <{level = 10 : i32, message = "bnc,bmc->bnm"}> : () -> ()
    %cst_48 = arith.constant dense<0.000000e+00> : vector<2x8x8xf32>
    %128 = tpu.matmul %124, %78, %cst_48 {dimension_numbers = #tpu.dot_dimension_numbers<[2], [2], [1], [1], [0, 0, 0, 1, 1, 1], [0], [0]>} : vector<2x8x32xf32>, vector<2x8x32xf32>, vector<2x8x8xf32> -> vector<2x8x8xf32>
    "tpu.trace_stop"() : () -> ()
    %cst_49 = arith.constant dense<0xFF800000> : vector<2x8xf32>
    %129 = vector.multi_reduction <maximumf>, %128, %cst_49 [2] : vector<2x8x8xf32> to vector<2x8xf32>
    %130 = vector.shape_cast %129 : vector<2x8xf32> to vector<2x8x1xf32>
    %131 = vector.broadcast %130 : vector<2x8x1xf32> to vector<2x8x8xf32>
    %132 = arith.subf %128, %131 : vector<2x8x8xf32>
    %133 = math.exp %132 : vector<2x8x8xf32>
    %cst_50 = arith.constant dense<0.000000e+00> : vector<2x8xf32>
    %134 = vector.multi_reduction <add>, %133, %cst_50 [2] : vector<2x8x8xf32> to vector<2x8xf32>
    %135 = vector.shape_cast %134 : vector<2x8xf32> to vector<2x8x1xf32>
    %136 = tpu.reciprocal %135 {approx = true} : vector<2x8x1xf32> -> vector<2x8x1xf32>
    %137 = vector.broadcast %136 : vector<2x8x1xf32> to vector<2x8x8xf32>
    %138 = arith.mulf %133, %137 : vector<2x8x8xf32>
    "tpu.trace_start"() <{level = 10 : i32, message = "bnm,bmc->bnc"}> : () -> ()
    %cst_51 = arith.constant dense<0.000000e+00> : vector<2x8x32xf32>
    %139 = tpu.matmul %138, %127, %cst_51 {dimension_numbers = #tpu.dot_dimension_numbers<[2], [1], [1], [2], [0, 0, 0, 1, 1, 2], [0], [0]>} : vector<2x8x8xf32>, vector<2x8x32xf32>, vector<2x8x32xf32> -> vector<2x8x32xf32>
    "tpu.trace_stop"() : () -> ()
    %140 = arith.addf %120, %139 : vector<2x8x32xf32>
    %141 = vector.extract_strided_slice %79 {offsets = [3, 0], sizes = [1, 32], strides = [1, 1]} : vector<4x32xf32> to vector<1x32xf32>
    %142 = vector.broadcast %141 : vector<1x32xf32> to vector<16x32xf32>
    %143 = arith.mulf %77, %142 : vector<16x32xf32>
    %144 = vector.shape_cast %143 : vector<16x32xf32> to vector<2x8x32xf32>
    %145 = vector.broadcast %141 : vector<1x32xf32> to vector<16x32xf32>
    %146 = arith.mulf %52, %145 : vector<16x32xf32>
    %147 = vector.shape_cast %146 : vector<16x32xf32> to vector<2x8x32xf32>
    "tpu.trace_start"() <{level = 10 : i32, message = "bnc,bmc->bnm"}> : () -> ()
    %cst_52 = arith.constant dense<0.000000e+00> : vector<2x8x8xf32>
    %148 = tpu.matmul %144, %78, %cst_52 {dimension_numbers = #tpu.dot_dimension_numbers<[2], [2], [1], [1], [0, 0, 0, 1, 1, 1], [0], [0]>} : vector<2x8x32xf32>, vector<2x8x32xf32>, vector<2x8x8xf32> -> vector<2x8x8xf32>
    "tpu.trace_stop"() : () -> ()
    %cst_53 = arith.constant dense<0xFF800000> : vector<2x8xf32>
    %149 = vector.multi_reduction <maximumf>, %148, %cst_53 [2] : vector<2x8x8xf32> to vector<2x8xf32>
    %150 = vector.shape_cast %149 : vector<2x8xf32> to vector<2x8x1xf32>
    %151 = vector.broadcast %150 : vector<2x8x1xf32> to vector<2x8x8xf32>
    %152 = arith.subf %148, %151 : vector<2x8x8xf32>
    %153 = math.exp %152 : vector<2x8x8xf32>
    %cst_54 = arith.constant dense<0.000000e+00> : vector<2x8xf32>
    %154 = vector.multi_reduction <add>, %153, %cst_54 [2] : vector<2x8x8xf32> to vector<2x8xf32>
    %155 = vector.shape_cast %154 : vector<2x8xf32> to vector<2x8x1xf32>
    %156 = tpu.reciprocal %155 {approx = true} : vector<2x8x1xf32> -> vector<2x8x1xf32>
    %157 = vector.broadcast %156 : vector<2x8x1xf32> to vector<2x8x8xf32>
    %158 = arith.mulf %153, %157 : vector<2x8x8xf32>
    "tpu.trace_start"() <{level = 10 : i32, message = "bnm,bmc->bnc"}> : () -> ()
    %cst_55 = arith.constant dense<0.000000e+00> : vector<2x8x32xf32>
    %159 = tpu.matmul %158, %147, %cst_55 {dimension_numbers = #tpu.dot_dimension_numbers<[2], [1], [1], [2], [0, 0, 0, 1, 1, 2], [0], [0]>} : vector<2x8x8xf32>, vector<2x8x32xf32>, vector<2x8x32xf32> -> vector<2x8x32xf32>
    "tpu.trace_stop"() : () -> ()
    %160 = arith.addf %140, %159 : vector<2x8x32xf32>
    %161 = vector.shape_cast %160 : vector<2x8x32xf32> to vector<16x32xf32>
    %c0_56 = arith.constant 0 : index
    %c0_57 = arith.constant 0 : index
    %162 = vector.load %arg14[%c0_56, %c0_57] : memref<3x32xf32, #tpu.memory_space<vmem>>, vector<3x32xf32>
    %c0_58 = arith.constant 0 : index
    %c0_59 = arith.constant 0 : index
    %163 = vector.load %arg15[%c0_58, %c0_59] : memref<1x32xf32, #tpu.memory_space<vmem>>, vector<1x32xf32>
    %cst_60 = arith.constant dense<0.000000e+00> : vector<16x32xf32>
    %164 = tpu.matmul %1, %52, %cst_60 {dimension_numbers = #tpu.dot_dimension_numbers<[1], [0], [0], [1], [0, 0, 1, 1], [], []>} : vector<16x16xf32>, vector<16x32xf32>, vector<16x32xf32> -> vector<16x32xf32>
    %cst_61 = arith.constant dense<0.000000e+00> : vector<16x32xf32>
    %165 = tpu.matmul %2, %52, %cst_61 {dimension_numbers = #tpu.dot_dimension_numbers<[1], [0], [0], [1], [0, 0, 1, 1], [], []>} : vector<16x16xf32>, vector<16x32xf32>, vector<16x32xf32> -> vector<16x32xf32>
    %166 = vector.extract_strided_slice %162 {offsets = [0, 0], sizes = [1, 32], strides = [1, 1]} : vector<3x32xf32> to vector<1x32xf32>
    %167 = vector.broadcast %166 : vector<1x32xf32> to vector<16x32xf32>
    %168 = arith.mulf %164, %167 : vector<16x32xf32>
    %169 = vector.extract_strided_slice %162 {offsets = [1, 0], sizes = [1, 32], strides = [1, 1]} : vector<3x32xf32> to vector<1x32xf32>
    %170 = vector.broadcast %169 : vector<1x32xf32> to vector<16x32xf32>
    %171 = arith.mulf %52, %170 : vector<16x32xf32>
    %172 = arith.addf %168, %171 : vector<16x32xf32>
    %173 = vector.extract_strided_slice %162 {offsets = [2, 0], sizes = [1, 32], strides = [1, 1]} : vector<3x32xf32> to vector<1x32xf32>
    %174 = vector.broadcast %173 : vector<1x32xf32> to vector<16x32xf32>
    %175 = arith.mulf %165, %174 : vector<16x32xf32>
    %176 = arith.addf %172, %175 : vector<16x32xf32>
    %177 = vector.broadcast %163 : vector<1x32xf32> to vector<16x32xf32>
    %178 = arith.addf %176, %177 : vector<16x32xf32>
    %179 = arith.addf %20, %161 : vector<16x32xf32>
    %180 = arith.addf %179, %178 : vector<16x32xf32>
    %c0_62 = arith.constant 0 : index
    %c0_63 = arith.constant 0 : index
    %181 = vector.load %arg16[%c0_62, %c0_63] : memref<1x32xf32, #tpu.memory_space<vmem>>, vector<1x32xf32>
    %c0_64 = arith.constant 0 : index
    %c0_65 = arith.constant 0 : index
    %182 = vector.load %arg17[%c0_64, %c0_65] : memref<1x32xf32, #tpu.memory_space<vmem>>, vector<1x32xf32>
    %cst_66 = arith.constant dense<0.000000e+00> : vector<16xf32>
    %183 = vector.multi_reduction <add>, %180, %cst_66 [1] : vector<16x32xf32> to vector<16xf32>
    %184 = vector.shape_cast %183 : vector<16xf32> to vector<16x1xf32>
    %cst_67 = arith.constant 3.200000e+01 : f32
    %185 = vector.broadcast %cst_67 : f32 to vector<16x1xf32>
    %186 = arith.divf %184, %185 : vector<16x1xf32>
    %187 = vector.broadcast %186 : vector<16x1xf32> to vector<16x32xf32>
    %188 = arith.subf %180, %187 : vector<16x32xf32>
    %189 = arith.mulf %188, %188 : vector<16x32xf32>
    %cst_68 = arith.constant dense<0.000000e+00> : vector<16xf32>
    %190 = vector.multi_reduction <add>, %189, %cst_68 [1] : vector<16x32xf32> to vector<16xf32>
    %191 = vector.shape_cast %190 : vector<16xf32> to vector<16x1xf32>
    %cst_69 = arith.constant 3.200000e+01 : f32
    %192 = vector.broadcast %cst_69 : f32 to vector<16x1xf32>
    %193 = arith.divf %191, %192 : vector<16x1xf32>
    %194 = vector.broadcast %186 : vector<16x1xf32> to vector<16x32xf32>
    %195 = arith.subf %180, %194 : vector<16x32xf32>
    %cst_70 = arith.constant 9.99999974E-6 : f32
    %196 = vector.broadcast %cst_70 : f32 to vector<16x1xf32>
    %197 = arith.addf %193, %196 : vector<16x1xf32>
    %198 = math.rsqrt %197 : vector<16x1xf32>
    %199 = vector.broadcast %198 : vector<16x1xf32> to vector<16x32xf32>
    %200 = arith.mulf %195, %199 : vector<16x32xf32>
    %201 = vector.broadcast %181 : vector<1x32xf32> to vector<16x32xf32>
    %202 = arith.mulf %200, %201 : vector<16x32xf32>
    %203 = vector.broadcast %182 : vector<1x32xf32> to vector<16x32xf32>
    %204 = arith.addf %202, %203 : vector<16x32xf32>
    %c0_71 = arith.constant 0 : index
    %c0_72 = arith.constant 0 : index
    %205 = vector.load %arg18[%c0_71, %c0_72] : memref<32x32xf32, #tpu.memory_space<vmem>>, vector<32x32xf32>
    %cst_73 = arith.constant dense<0.000000e+00> : vector<16x32xf32>
    %206 = tpu.matmul %204, %205, %cst_73 {dimension_numbers = #tpu.dot_dimension_numbers<[1], [0], [0], [1], [0, 0, 1, 1], [], []>} : vector<16x32xf32>, vector<32x32xf32>, vector<16x32xf32> -> vector<16x32xf32>
    %c0_74 = arith.constant 0 : index
    %c0_75 = arith.constant 0 : index
    %207 = vector.load %arg19[%c0_74, %c0_75] : memref<1x32xf32, #tpu.memory_space<vmem>>, vector<1x32xf32>
    %208 = vector.broadcast %207 : vector<1x32xf32> to vector<16x32xf32>
    %209 = arith.addf %206, %208 : vector<16x32xf32>
    %cst_76 = arith.constant 5.000000e-01 : f32
    %210 = vector.broadcast %cst_76 : f32 to vector<16x32xf32>
    %211 = arith.mulf %210, %209 : vector<16x32xf32>
    %cst_77 = arith.constant 0.707106769 : f32
    %212 = vector.broadcast %cst_77 : f32 to vector<16x32xf32>
    %213 = arith.mulf %209, %212 : vector<16x32xf32>
    %214 = math.erf %213 : vector<16x32xf32>
    %cst_78 = arith.constant 1.000000e+00 : f32
    %215 = vector.broadcast %cst_78 : f32 to vector<16x32xf32>
    %216 = arith.addf %215, %214 : vector<16x32xf32>
    %217 = arith.mulf %211, %216 : vector<16x32xf32>
    %c0_79 = arith.constant 0 : index
    %c0_80 = arith.constant 0 : index
    %218 = vector.load %arg20[%c0_79, %c0_80] : memref<32x32xf32, #tpu.memory_space<vmem>>, vector<32x32xf32>
    %cst_81 = arith.constant dense<0.000000e+00> : vector<16x32xf32>
    %219 = tpu.matmul %217, %218, %cst_81 {dimension_numbers = #tpu.dot_dimension_numbers<[1], [0], [0], [1], [0, 0, 1, 1], [], []>} : vector<16x32xf32>, vector<32x32xf32>, vector<16x32xf32> -> vector<16x32xf32>
    %c0_82 = arith.constant 0 : index
    %c0_83 = arith.constant 0 : index
    %220 = vector.load %arg21[%c0_82, %c0_83] : memref<1x32xf32, #tpu.memory_space<vmem>>, vector<1x32xf32>
    %221 = vector.broadcast %220 : vector<1x32xf32> to vector<16x32xf32>
    %222 = arith.addf %219, %221 : vector<16x32xf32>
    %223 = arith.addf %180, %222 : vector<16x32xf32>
    %c0_84 = arith.constant 0 : index
    %c0_85 = arith.constant 0 : index
    %224 = vector.load %arg22[%c0_84, %c0_85] : memref<16x32xf32, #tpu.memory_space<vmem>>, vector<16x32xf32>
    tpu.vector_store %arg22[%c0_84, %c0_85], %223 {strides = array<i32>} : memref<16x32xf32, #tpu.memory_space<vmem>>, vector<16x32xf32>,
    return
  }
  func.func @transform_0(%arg0: i32) -> (i32, i32) {
    %c0_i32 = arith.constant 0 : i32
    %c0_i32_0 = arith.constant 0 : i32
    return %arg0, %c0_i32 : i32, i32
  }
  func.func @transform_1(%arg0: i32) -> (i32, i32) {
    %c0_i32 = arith.constant 0 : i32
    %c0_i32_0 = arith.constant 0 : i32
    %c0_i32_1 = arith.constant 0 : i32
    return %c0_i32, %c0_i32_0 : i32, i32
  }
  func.func @transform_2(%arg0: i32) -> (i32, i32) {
    %c0_i32 = arith.constant 0 : i32
    %c0_i32_0 = arith.constant 0 : i32
    %c0_i32_1 = arith.constant 0 : i32
    return %c0_i32, %c0_i32_0 : i32, i32
  }
  func.func @transform_3(%arg0: i32) -> (i32, i32) {
    %c0_i32 = arith.constant 0 : i32
    %c0_i32_0 = arith.constant 0 : i32
    %c0_i32_1 = arith.constant 0 : i32
    return %c0_i32, %c0_i32_0 : i32, i32
  }
  func.func @transform_4(%arg0: i32) -> (i32, i32) {
    %c0_i32 = arith.constant 0 : i32
    %c0_i32_0 = arith.constant 0 : i32
    %c0_i32_1 = arith.constant 0 : i32
    return %c0_i32, %c0_i32_0 : i32, i32
  }
  func.func @transform_5(%arg0: i32) -> (i32, i32) {
    %c0_i32 = arith.constant 0 : i32
    %c0_i32_0 = arith.constant 0 : i32
    %c0_i32_1 = arith.constant 0 : i32
    return %c0_i32, %c0_i32_0 : i32, i32
  }
  func.func @transform_6(%arg0: i32) -> (i32, i32) {
    %c0_i32 = arith.constant 0 : i32
    %c0_i32_0 = arith.constant 0 : i32
    %c0_i32_1 = arith.constant 0 : i32
    return %c0_i32, %c0_i32_0 : i32, i32
  }
  func.func @transform_7(%arg0: i32) -> (i32, i32) {
    %c0_i32 = arith.constant 0 : i32
    %c0_i32_0 = arith.constant 0 : i32
    %c0_i32_1 = arith.constant 0 : i32
    return %c0_i32, %c0_i32_0 : i32, i32
  }
  func.func @transform_8(%arg0: i32) -> (i32, i32) {
    %c0_i32 = arith.constant 0 : i32
    %c0_i32_0 = arith.constant 0 : i32
    %c0_i32_1 = arith.constant 0 : i32
    return %c0_i32, %c0_i32_0 : i32, i32
  }
  func.func @transform_9(%arg0: i32) -> (i32, i32) {
    %c0_i32 = arith.constant 0 : i32
    %c0_i32_0 = arith.constant 0 : i32
    %c0_i32_1 = arith.constant 0 : i32
    return %c0_i32, %c0_i32_0 : i32, i32
  }
  func.func @transform_10(%arg0: i32) -> (i32, i32) {
    %c0_i32 = arith.constant 0 : i32
    %c0_i32_0 = arith.constant 0 : i32
    %c0_i32_1 = arith.constant 0 : i32
    return %c0_i32, %c0_i32_0 : i32, i32
  }
  func.func @transform_11(%arg0: i32) -> (i32, i32) {
    %c0_i32 = arith.constant 0 : i32
    %c0_i32_0 = arith.constant 0 : i32
    %c0_i32_1 = arith.constant 0 : i32
    return %c0_i32, %c0_i32_0 : i32, i32
  }
  func.func @transform_12(%arg0: i32) -> (i32, i32) {
    %c0_i32 = arith.constant 0 : i32
    %c0_i32_0 = arith.constant 0 : i32
    %c0_i32_1 = arith.constant 0 : i32
    return %c0_i32, %c0_i32_0 : i32, i32
  }
  func.func @transform_13(%arg0: i32) -> (i32, i32) {
    %c0_i32 = arith.constant 0 : i32
    %c0_i32_0 = arith.constant 0 : i32
    %c0_i32_1 = arith.constant 0 : i32
    return %c0_i32, %c0_i32_0 : i32, i32
  }
  func.func @transform_14(%arg0: i32) -> (i32, i32) {
    %c0_i32 = arith.constant 0 : i32
    %c0_i32_0 = arith.constant 0 : i32
    %c0_i32_1 = arith.constant 0 : i32
    return %c0_i32, %c0_i32_0 : i32, i32
  }
  func.func @transform_15(%arg0: i32) -> (i32, i32) {
    %c0_i32 = arith.constant 0 : i32
    %c0_i32_0 = arith.constant 0 : i32
    %c0_i32_1 = arith.constant 0 : i32
    return %c0_i32, %c0_i32_0 : i32, i32
  }
  func.func @transform_16(%arg0: i32) -> (i32, i32) {
    %c0_i32 = arith.constant 0 : i32
    %c0_i32_0 = arith.constant 0 : i32
    %c0_i32_1 = arith.constant 0 : i32
    return %c0_i32, %c0_i32_0 : i32, i32
  }
  func.func @transform_17(%arg0: i32) -> (i32, i32) {
    %c0_i32 = arith.constant 0 : i32
    %c0_i32_0 = arith.constant 0 : i32
    %c0_i32_1 = arith.constant 0 : i32
    return %c0_i32, %c0_i32_0 : i32, i32
  }
  func.func @transform_18(%arg0: i32) -> (i32, i32) {
    %c0_i32 = arith.constant 0 : i32
    %c0_i32_0 = arith.constant 0 : i32
    %c0_i32_1 = arith.constant 0 : i32
    return %c0_i32, %c0_i32_0 : i32, i32
  }
  func.func @transform_19(%arg0: i32) -> (i32, i32) {
    %c0_i32 = arith.constant 0 : i32
    %c0_i32_0 = arith.constant 0 : i32
    %c0_i32_1 = arith.constant 0 : i32
    return %c0_i32, %c0_i32_0 : i32, i32
  }
  func.func @transform_20(%arg0: i32) -> (i32, i32) {
    %c0_i32 = arith.constant 0 : i32
    %c0_i32_0 = arith.constant 0 : i32
    %c0_i32_1 = arith.constant 0 : i32
    return %c0_i32, %c0_i32_0 : i32, i32
  }
  func.func @transform_21(%arg0: i32) -> (i32, i32) {
    %c0_i32 = arith.constant 0 : i32
    %c0_i32_0 = arith.constant 0 : i32
    return %arg0, %c0_i32 : i32, i32
  }
}

</mosaic_0001>

<llo_original>
// kernel: tpu_custom_call.1
$region0: #{tpu_custom_call.1}
  #allocation0 [shape = 'u32[]', space=smem, size = 0x4, offset = 0x4, fixed_abs, tag = 'smem constant byte address 0x4 - core index']
  #allocation1 [shape = 'u32[144,128]{1,0:T(1,128)}', space=vmem, size = 0x12000, scoped, tag = 'internal scratch']
  %s0 = inlined_call_operand.hbm [shape: f32[16,32], index: 0, kind: input, shape index: {}]
  %s1 = inlined_call_operand.hbm [shape: f32[16,16], index: 1, kind: input, shape index: {}]
  %s2 = inlined_call_operand.hbm [shape: f32[16,16], index: 2, kind: input, shape index: {}]
  %s3 = inlined_call_operand.hbm [shape: f32[16,32], index: 3, kind: input, shape index: {}]
  %s4 = inlined_call_operand.hbm [shape: f32[16,32], index: 4, kind: input, shape index: {}]
  %s5 = inlined_call_operand.hbm [shape: f32[32,32], index: 5, kind: input, shape index: {}]
  %s6 = inlined_call_operand.hbm [shape: f32[4,32], index: 6, kind: input, shape index: {}]
  %s7 = inlined_call_operand.hbm [shape: f32[3,32], index: 7, kind: input, shape index: {}]
  %s8 = inlined_call_operand.hbm [shape: f32[1,32], index: 8, kind: input, shape index: {}]
  %s9 = inlined_call_operand.hbm [shape: f32[1,32], index: 9, kind: input, shape index: {}]
  %s10 = inlined_call_operand.hbm [shape: f32[1,32], index: 10, kind: input, shape index: {}]
  %s11 = inlined_call_operand.vmem [shape: f32[32,96], index: 11, kind: input, shape index: {}]
  %s12 = inlined_call_operand.hbm [shape: f32[1,96], index: 12, kind: input, shape index: {}]
  %s13 = inlined_call_operand.hbm [shape: f32[3,32], index: 13, kind: input, shape index: {}]
  %s14 = inlined_call_operand.hbm [shape: f32[1,32], index: 14, kind: input, shape index: {}]
  %s15 = inlined_call_operand.hbm [shape: f32[1,32], index: 15, kind: input, shape index: {}]
  %s16 = inlined_call_operand.hbm [shape: f32[1,32], index: 16, kind: input, shape index: {}]
  %s17 = inlined_call_operand.vmem [shape: f32[32,32], index: 17, kind: input, shape index: {}]
  %s18 = inlined_call_operand.vmem [shape: f32[1,32], index: 18, kind: input, shape index: {}]
  %s19 = inlined_call_operand.hbm [shape: f32[32,32], index: 19, kind: input, shape index: {}]
  %s20 = inlined_call_operand.vmem [shape: f32[1,32], index: 20, kind: input, shape index: {}]
  %s21 = inlined_call_operand.hbm [shape: f32[16,32], index: 21, kind: output, shape index: {}]
  %s22 = sld [smem:[#allocation0]]
  $region162: #{tpu_custom_call.1} parent=0
    _
  %s24 = ssub.s32 1, %s22
  %s25 = scalar_select 0, %s24, %s22
  $region1: #{tpu_custom_call.1} parent=0
    #allocation2 [shape = 'u8[8192]{0}', space=vmem, size = 0x2000, scoped, tag = 'input window, operand 0, single buffered']
    #allocation3 [shape = 's32[1]{0}', space=sflag, size = 0x4, scoped, tag = 'scoped memory for tpu_custom_call.1']
    #allocation4 [shape = 's32[1]{0}', space=sflag, size = 0x4, scoped, tag = 'scoped memory for tpu_custom_call.1']
    #allocation5 [shape = 'u8[8192]{0}', space=vmem, size = 0x2000, scoped, tag = 'input window, operand 1, single buffered']
    #allocation6 [shape = 's32[1]{0}', space=sflag, size = 0x4, scoped, tag = 'scoped memory for tpu_custom_call.1']
    #allocation7 [shape = 'u8[8192]{0}', space=vmem, size = 0x2000, scoped, tag = 'input window, operand 2, single buffered']
    #allocation8 [shape = 'u8[8192]{0}', space=vmem, size = 0x2000, scoped, tag = 'input window, operand 3, single buffered']
    #allocation9 [shape = 's32[1]{0}', space=sflag, size = 0x4, scoped, tag = 'scoped memory for tpu_custom_call.1']
    #allocation10 [shape = 'u8[8192]{0}', space=vmem, size = 0x2000, scoped, tag = 'input window, operand 4, single buffered']
    #allocation11 [shape = 'u8[16384]{0}', space=vmem, size = 0x4000, scoped, tag = 'input window, operand 5, single buffered']
    #allocation12 [shape = 's32[1]{0}', space=sflag, size = 0x4, scoped, tag = 'scoped memory for tpu_custom_call.1']
    #allocation13 [shape = 'u8[2048]{0}', space=vmem, size = 0x800, scoped, tag = 'input window, operand 6, single buffered']
    #allocation14 [shape = 'u8[2048]{0}', space=vmem, size = 0x800, scoped, tag = 'input window, operand 7, single buffered']
    #allocation15 [shape = 's32[1]{0}', space=sflag, size = 0x4, scoped, tag = 'scoped memory for tpu_custom_call.1']
    #allocation16 [shape = 'u8[512]{0}', space=vmem, size = 0x400, scoped, tag = 'input window, operand 8, single buffered']
    #allocation17 [shape = 'u8[512]{0}', space=vmem, size = 0x400, scoped, tag = 'input window, operand 9, single buffered']
    #allocation18 [shape = 's32[1]{0}', space=sflag, size = 0x4, scoped, tag = 'scoped memory for tpu_custom_call.1']
    #allocation19 [shape = 'u8[512]{0}', space=vmem, size = 0x400, scoped, tag = 'input window, operand 10, single buffered']
    #allocation20 [shape = 'u8[512]{0}', space=vmem, size = 0x400, scoped, tag = 'input window, operand 12, single buffered']
    #allocation21 [shape = 's32[1]{0}', space=sflag, size = 0x4, scoped, tag = 'scoped memory for tpu_custom_call.1']
    #allocation22 [shape = 'u8[2048]{0}', space=vmem, size = 0x800, scoped, tag = 'input window, operand 13, single buffered']
    #allocation23 [shape = 'u8[512]{0}', space=vmem, size = 0x400, scoped, tag = 'input window, operand 14, single buffered']
    #allocation24 [shape = 's32[1]{0}', space=sflag, size = 0x4, scoped, tag = 'scoped memory for tpu_custom_call.1']
    #allocation25 [shape = 'u8[512]{0}', space=vmem, size = 0x400, scoped, tag = 'input window, operand 15, single buffered']
    #allocation26 [shape = 'u8[512]{0}', space=vmem, size = 0x400, scoped, tag = 'input window, operand 16, single buffered']
    #allocation27 [shape = 's32[1]{0}', space=sflag, size = 0x4, scoped, tag = 'scoped memory for tpu_custom_call.1']
    #allocation28 [shape = 'u8[16384]{0}', space=vmem, size = 0x4000, scoped, tag = 'input window, operand 19, single buffered']
    #allocation29 [shape = 'u8[8192]{0}', space=vmem, size = 0x2000, scoped, tag = 'output window, operand 0, single buffered']
    %26 = vsyncpa [#allocation3], 0
    %27 = vsyncpa [#allocation6], 0
    %28 = vsyncpa [#allocation9], 0
    %29 = vsyncpa [#allocation12], 0
    %30 = vsyncpa [#allocation15], 0
    %31 = vsyncpa [#allocation18], 0
    %32 = vsyncpa [#allocation21], 0
    %33 = vsyncpa [#allocation24], 0
    %34 = vsyncpa [#allocation27], 0
    %35 = vsyncpa [#allocation4], 0
    // Predicated region
    $region2: #{tpu_custom_call.1} parent=1 // pred_check
      _
    $region3: #{tpu_custom_call.1} parent=1 // pred_check_branch
      %37 = sbr.rel (0) target = $region5
    $region4: #{tpu_custom_call.1} parent=1 // pred_region
      %s39 = ssub.s32 256, 256
      %40 = vsyncadd [#allocation3], %s39
      %s41 = sshll.u32 [#allocation2], 4
      %s42 = int_to_ptr.vmem [resolvable:$true] %s41
      %47 = dma.hbm_to_vmem [thread:$0]  %s0, 256, %s42, [#allocation3], 128, 128, 8
    $region5: #{tpu_custom_call.1} parent=1 // pred_fallthru
      _
    // Predicated region
    $region6: #{tpu_custom_call.1} parent=1 // pred_check
      _
    $region7: #{tpu_custom_call.1} parent=1 // pred_check_branch
      %49 = sbr.rel (0) target = $region9
    $region8: #{tpu_custom_call.1} parent=1 // pred_region
      %s51 = ssub.s32 256, 256
      %52 = vsyncadd [#allocation6], %s51
      %s53 = sshll.u32 [#allocation5], 4
      %s54 = int_to_ptr.vmem [resolvable:$true] %s53
      %59 = dma.hbm_to_vmem [thread:$0]  %s1, 256, %s54, [#allocation6], 128, 128, 8
    $region9: #{tpu_custom_call.1} parent=1 // pred_fallthru
      _
    // Predicated region
    $region10: #{tpu_custom_call.1} parent=1 // pred_check
      _
    $region11: #{tpu_custom_call.1} parent=1 // pred_check_branch
      %61 = sbr.rel (0) target = $region13
    $region12: #{tpu_custom_call.1} parent=1 // pred_region
      %s63 = ssub.s32 256, 256
      %64 = vsyncadd [#allocation6], %s63
      %s65 = sshll.u32 [#allocation7], 4
      %s66 = int_to_ptr.vmem [resolvable:$true] %s65
      %71 = dma.hbm_to_vmem [thread:$0]  %s2, 256, %s66, [#allocation6], 128, 128, 8
    $region13: #{tpu_custom_call.1} parent=1 // pred_fallthru
      _
    // Predicated region
    $region14: #{tpu_custom_call.1} parent=1 // pred_check
      _
    $region15: #{tpu_custom_call.1} parent=1 // pred_check_branch
      %73 = sbr.rel (0) target = $region17
    $region16: #{tpu_custom_call.1} parent=1 // pred_region
      %s75 = ssub.s32 256, 256
      %76 = vsyncadd [#allocation9], %s75
      %s77 = sshll.u32 [#allocation8], 4
      %s78 = int_to_ptr.vmem [resolvable:$true] %s77
      %83 = dma.hbm_to_vmem [thread:$0]  %s3, 256, %s78, [#allocation9], 128, 128, 8
    $region17: #{tpu_custom_call.1} parent=1 // pred_fallthru
      _
    // Predicated region
    $region18: #{tpu_custom_call.1} parent=1 // pred_check
      _
    $region19: #{tpu_custom_call.1} parent=1 // pred_check_branch
      %85 = sbr.rel (0) target = $region21
    $region20: #{tpu_custom_call.1} parent=1 // pred_region
      %s87 = ssub.s32 256, 256
      %88 = vsyncadd [#allocation9], %s87
      %s89 = sshll.u32 [#allocation10], 4
      %s90 = int_to_ptr.vmem [resolvable:$true] %s89
      %95 = dma.hbm_to_vmem [thread:$0]  %s4, 256, %s90, [#allocation9], 128, 128, 8
    $region21: #{tpu_custom_call.1} parent=1 // pred_fallthru
      _
    // Predicated region
    $region22: #{tpu_custom_call.1} parent=1 // pred_check
      _
    $region23: #{tpu_custom_call.1} parent=1 // pred_check_branch
      %97 = sbr.rel (0) target = $region25
    $region24: #{tpu_custom_call.1} parent=1 // pred_region
      %s99 = ssub.s32 512, 512
      %100 = vsyncadd [#allocation12], %s99
      %s101 = sshll.u32 [#allocation11], 4
      %s102 = int_to_ptr.vmem [resolvable:$true] %s101
      %107 = dma.hbm_to_vmem [thread:$0]  %s5, 512, %s102, [#allocation12], 128, 128, 8
    $region25: #{tpu_custom_call.1} parent=1 // pred_fallthru
      _
    // Predicated region
    $region26: #{tpu_custom_call.1} parent=1 // pred_check
      _
    $region27: #{tpu_custom_call.1} parent=1 // pred_check_branch
      %109 = sbr.rel (0) target = $region29
    $region28: #{tpu_custom_call.1} parent=1 // pred_region
      %s111 = ssub.s32 64, 64
      %112 = vsyncadd [#allocation12], %s111
      %s114 = sshll.u32 [#allocation13], 4
      %s115 = int_to_ptr.vmem [resolvable:$true] %s114
      %117 = dma.hbm_to_vmem [thread:$0]  %s6, 64, %s115, [#allocation12]
    $region29: #{tpu_custom_call.1} parent=1 // pred_fallthru
      _
    // Predicated region
    $region30: #{tpu_custom_call.1} parent=1 // pred_check
      _
    $region31: #{tpu_custom_call.1} parent=1 // pred_check_branch
      %119 = sbr.rel (0) target = $region33
    $region32: #{tpu_custom_call.1} parent=1 // pred_region
      %s121 = ssub.s32 64, 64
      %122 = vsyncadd [#allocation15], %s121
      %s124 = sshll.u32 [#allocation14], 4
      %s125 = int_to_ptr.vmem [resolvable:$true] %s124
      %127 = dma.hbm_to_vmem [thread:$0]  %s7, 64, %s125, [#allocation15]
    $region33: #{tpu_custom_call.1} parent=1 // pred_fallthru
      _
    // Predicated region
    $region34: #{tpu_custom_call.1} parent=1 // pred_check
      _
    $region35: #{tpu_custom_call.1} parent=1 // pred_check_branch
      %129 = sbr.rel (0) target = $region37
    $region36: #{tpu_custom_call.1} parent=1 // pred_region
      %s131 = ssub.s32 16, 16
      %132 = vsyncadd [#allocation15], %s131
      %s134 = sshll.u32 [#allocation16], 4
      %s135 = int_to_ptr.vmem [resolvable:$true] %s134
      %137 = dma.hbm_to_vmem [thread:$0]  %s8, 16, %s135, [#allocation15]
    $region37: #{tpu_custom_call.1} parent=1 // pred_fallthru
      _
    // Predicated region
    $region38: #{tpu_custom_call.1} parent=1 // pred_check
      _
    $region39: #{tpu_custom_call.1} parent=1 // pred_check_branch
      %139 = sbr.rel (0) target = $region41
    $region40: #{tpu_custom_call.1} parent=1 // pred_region
      %s141 = ssub.s32 16, 16
      %142 = vsyncadd [#allocation18], %s141
      %s144 = sshll.u32 [#allocation17], 4
      %s145 = int_to_ptr.vmem [resolvable:$true] %s144
      %147 = dma.hbm_to_vmem [thread:$0]  %s9, 16, %s145, [#allocation18]
    $region41: #{tpu_custom_call.1} parent=1 // pred_fallthru
      _
    // Predicated region
    $region42: #{tpu_custom_call.1} parent=1 // pred_check
      _
    $region43: #{tpu_custom_call.1} parent=1 // pred_check_branch
      %149 = sbr.rel (0) target = $region45
    $region44: #{tpu_custom_call.1} parent=1 // pred_region
      %s151 = ssub.s32 16, 16
      %152 = vsyncadd [#allocation18], %s151
      %s154 = sshll.u32 [#allocation19], 4
      %s155 = int_to_ptr.vmem [resolvable:$true] %s154
      %157 = dma.hbm_to_vmem [thread:$0]  %s10, 16, %s155, [#allocation18]
    $region45: #{tpu_custom_call.1} parent=1 // pred_fallthru
      _
    // Predicated region
    $region46: #{tpu_custom_call.1} parent=1 // pred_check
      _
    $region47: #{tpu_custom_call.1} parent=1 // pred_check_branch
      %159 = sbr.rel (0) target = $region49
    $region48: #{tpu_custom_call.1} parent=1 // pred_region
      _
    $region49: #{tpu_custom_call.1} parent=1 // pred_fallthru
      _
    // Predicated region
    $region50: #{tpu_custom_call.1} parent=1 // pred_check
      _
    $region51: #{tpu_custom_call.1} parent=1 // pred_check_branch
      %161 = sbr.rel (0) target = $region53
    $region52: #{tpu_custom_call.1} parent=1 // pred_region
      %s163 = ssub.s32 16, 16
      %164 = vsyncadd [#allocation21], %s163
      %s166 = sshll.u32 [#allocation20], 4
      %s167 = int_to_ptr.vmem [resolvable:$true] %s166
      %169 = dma.hbm_to_vmem [thread:$0]  %s12, 16, %s167, [#allocation21]
    $region53: #{tpu_custom_call.1} parent=1 // pred_fallthru
      _
    // Predicated region
    $region54: #{tpu_custom_call.1} parent=1 // pred_check
      _
    $region55: #{tpu_custom_call.1} parent=1 // pred_check_branch
      %171 = sbr.rel (0) target = $region57
    $region56: #{tpu_custom_call.1} parent=1 // pred_region
      %s173 = ssub.s32 64, 64
      %174 = vsyncadd [#allocation21], %s173
      %s176 = sshll.u32 [#allocation22], 4
      %s177 = int_to_ptr.vmem [resolvable:$true] %s176
      %179 = dma.hbm_to_vmem [thread:$0]  %s13, 64, %s177, [#allocation21]
    $region57: #{tpu_custom_call.1} parent=1 // pred_fallthru
      _
    // Predicated region
    $region58: #{tpu_custom_call.1} parent=1 // pred_check
      _
    $region59: #{tpu_custom_call.1} parent=1 // pred_check_branch
      %181 = sbr.rel (0) target = $region61
    $region60: #{tpu_custom_call.1} parent=1 // pred_region
      %s183 = ssub.s32 16, 16
      %184 = vsyncadd [#allocation24], %s183
      %s186 = sshll.u32 [#allocation23], 4
      %s187 = int_to_ptr.vmem [resolvable:$true] %s186
      %189 = dma.hbm_to_vmem [thread:$0]  %s14, 16, %s187, [#allocation24]
    $region61: #{tpu_custom_call.1} parent=1 // pred_fallthru
      _
    // Predicated region
    $region62: #{tpu_custom_call.1} parent=1 // pred_check
      _
    $region63: #{tpu_custom_call.1} parent=1 // pred_check_branch
      %191 = sbr.rel (0) target = $region65
    $region64: #{tpu_custom_call.1} parent=1 // pred_region
      %s193 = ssub.s32 16, 16
      %194 = vsyncadd [#allocation24], %s193
      %s196 = sshll.u32 [#allocation25], 4
      %s197 = int_to_ptr.vmem [resolvable:$true] %s196
      %199 = dma.hbm_to_vmem [thread:$0]  %s15, 16, %s197, [#allocation24]
    $region65: #{tpu_custom_call.1} parent=1 // pred_fallthru
      _
    // Predicated region
    $region66: #{tpu_custom_call.1} parent=1 // pred_check
      _
    $region67: #{tpu_custom_call.1} parent=1 // pred_check_branch
      %201 = sbr.rel (0) target = $region69
    $region68: #{tpu_custom_call.1} parent=1 // pred_region
      %s203 = ssub.s32 16, 16
      %204 = vsyncadd [#allocation27], %s203
      %s206 = sshll.u32 [#allocation26], 4
      %s207 = int_to_ptr.vmem [resolvable:$true] %s206
      %209 = dma.hbm_to_vmem [thread:$0]  %s16, 16, %s207, [#allocation27]
    $region69: #{tpu_custom_call.1} parent=1 // pred_fallthru
      _
    // Predicated region
    $region70: #{tpu_custom_call.1} parent=1 // pred_check
      _
    $region71: #{tpu_custom_call.1} parent=1 // pred_check_branch
      %211 = sbr.rel (0) target = $region73
    $region72: #{tpu_custom_call.1} parent=1 // pred_region
      _
    $region73: #{tpu_custom_call.1} parent=1 // pred_fallthru
      _
    // Predicated region
    $region74: #{tpu_custom_call.1} parent=1 // pred_check
      _
    $region75: #{tpu_custom_call.1} parent=1 // pred_check_branch
      %213 = sbr.rel (0) target = $region77
    $region76: #{tpu_custom_call.1} parent=1 // pred_region
      _
    $region77: #{tpu_custom_call.1} parent=1 // pred_fallthru
      _
    // Predicated region
    $region78: #{tpu_custom_call.1} parent=1 // pred_check
      _
    $region79: #{tpu_custom_call.1} parent=1 // pred_check_branch
      %215 = sbr.rel (0) target = $region81
    $region80: #{tpu_custom_call.1} parent=1 // pred_region
      %s217 = ssub.s32 512, 512
      %218 = vsyncadd [#allocation27], %s217
      %s219 = sshll.u32 [#allocation28], 4
      %s220 = int_to_ptr.vmem [resolvable:$true] %s219
      %225 = dma.hbm_to_vmem [thread:$0]  %s19, 512, %s220, [#allocation27], 128, 128, 8
    $region81: #{tpu_custom_call.1} parent=1 // pred_fallthru
      _
    // Predicated region
    $region82: #{tpu_custom_call.1} parent=1 // pred_check
      _
    $region83: #{tpu_custom_call.1} parent=1 // pred_check_branch
      %227 = sbr.rel (0) target = $region85
    $region84: #{tpu_custom_call.1} parent=1 // pred_region
      _
    $region85: #{tpu_custom_call.1} parent=1 // pred_fallthru
      _
    // Predicated region
    $region86: #{tpu_custom_call.1} parent=1 // pred_check
      _
    $region87: #{tpu_custom_call.1} parent=1 // pred_check_branch
      %229 = sbr.rel (0) target = $region89
    $region88: #{tpu_custom_call.1} parent=1 // pred_region
      %230 = dma.done [#allocation3], 256
    $region89: #{tpu_custom_call.1} parent=1 // pred_fallthru
      _
    // Predicated region
    $region90: #{tpu_custom_call.1} parent=1 // pred_check
      _
    $region91: #{tpu_custom_call.1} parent=1 // pred_check_branch
      %232 = sbr.rel (0) target = $region93
    $region92: #{tpu_custom_call.1} parent=1 // pred_region
      %233 = dma.done [#allocation6], 256
    $region93: #{tpu_custom_call.1} parent=1 // pred_fallthru
      _
    // Predicated region
    $region94: #{tpu_custom_call.1} parent=1 // pred_check
      _
    $region95: #{tpu_custom_call.1} parent=1 // pred_check_branch
      %235 = sbr.rel (0) target = $region97
    $region96: #{tpu_custom_call.1} parent=1 // pred_region
      %236 = dma.done [#allocation6], 256
    $region97: #{tpu_custom_call.1} parent=1 // pred_fallthru
      _
    // Predicated region
    $region98: #{tpu_custom_call.1} parent=1 // pred_check
      _
    $region99: #{tpu_custom_call.1} parent=1 // pred_check_branch
      %238 = sbr.rel (0) target = $region101
    $region100: #{tpu_custom_call.1} parent=1 // pred_region
      %239 = dma.done [#allocation9], 256
    $region101: #{tpu_custom_call.1} parent=1 // pred_fallthru
      _
    // Predicated region
    $region102: #{tpu_custom_call.1} parent=1 // pred_check
      _
    $region103: #{tpu_custom_call.1} parent=1 // pred_check_branch
      %241 = sbr.rel (0) target = $region105
    $region104: #{tpu_custom_call.1} parent=1 // pred_region
      %242 = dma.done [#allocation9], 256
    $region105: #{tpu_custom_call.1} parent=1 // pred_fallthru
      _
    // Predicated region
    $region106: #{tpu_custom_call.1} parent=1 // pred_check
      _
    $region107: #{tpu_custom_call.1} parent=1 // pred_check_branch
      %244 = sbr.rel (0) target = $region109
    $region108: #{tpu_custom_call.1} parent=1 // pred_region
      %245 = dma.done [#allocation12], 512
    $region109: #{tpu_custom_call.1} parent=1 // pred_fallthru
      _
    // Predicated region
    $region110: #{tpu_custom_call.1} parent=1 // pred_check
      _
    $region111: #{tpu_custom_call.1} parent=1 // pred_check_branch
      %247 = sbr.rel (0) target = $region113
    $region112: #{tpu_custom_call.1} parent=1 // pred_region
      %248 = dma.done [#allocation12], 64
    $region113: #{tpu_custom_call.1} parent=1 // pred_fallthru
      _
    // Predicated region
    $region114: #{tpu_custom_call.1} parent=1 // pred_check
      _
    $region115: #{tpu_custom_call.1} parent=1 // pred_check_branch
      %250 = sbr.rel (0) target = $region117
    $region116: #{tpu_custom_call.1} parent=1 // pred_region
      %251 = dma.done [#allocation15], 64
    $region117: #{tpu_custom_call.1} parent=1 // pred_fallthru
      _
    // Predicated region
    $region118: #{tpu_custom_call.1} parent=1 // pred_check
      _
    $region119: #{tpu_custom_call.1} parent=1 // pred_check_branch
      %253 = sbr.rel (0) target = $region121
    $region120: #{tpu_custom_call.1} parent=1 // pred_region
      %254 = dma.done [#allocation15], 16
    $region121: #{tpu_custom_call.1} parent=1 // pred_fallthru
      _
    // Predicated region
    $region122: #{tpu_custom_call.1} parent=1 // pred_check
      _
    $region123: #{tpu_custom_call.1} parent=1 // pred_check_branch
      %256 = sbr.rel (0) target = $region125
    $region124: #{tpu_custom_call.1} parent=1 // pred_region
      %257 = dma.done [#allocation18], 16
    $region125: #{tpu_custom_call.1} parent=1 // pred_fallthru
      _
    // Predicated region
    $region126: #{tpu_custom_call.1} parent=1 // pred_check
      _
    $region127: #{tpu_custom_call.1} parent=1 // pred_check_branch
      %259 = sbr.rel (0) target = $region129
    $region128: #{tpu_custom_call.1} parent=1 // pred_region
      %260 = dma.done [#allocation18], 16
    $region129: #{tpu_custom_call.1} parent=1 // pred_fallthru
      _
    // Predicated region
    $region130: #{tpu_custom_call.1} parent=1 // pred_check
      _
    $region131: #{tpu_custom_call.1} parent=1 // pred_check_branch
      %262 = sbr.rel (0) target = $region133
    $region132: #{tpu_custom_call.1} parent=1 // pred_region
      %263 = dma.done [#allocation21], 16
    $region133: #{tpu_custom_call.1} parent=1 // pred_fallthru
      _
    // Predicated region
    $region134: #{tpu_custom_call.1} parent=1 // pred_check
      _
    $region135: #{tpu_custom_call.1} parent=1 // pred_check_branch
      %265 = sbr.rel (0) target = $region137
    $region136: #{tpu_custom_call.1} parent=1 // pred_region
      %266 = dma.done [#allocation21], 64
    $region137: #{tpu_custom_call.1} parent=1 // pred_fallthru
      _
    // Predicated region
    $region138: #{tpu_custom_call.1} parent=1 // pred_check
      _
    $region139: #{tpu_custom_call.1} parent=1 // pred_check_branch
      %268 = sbr.rel (0) target = $region141
    $region140: #{tpu_custom_call.1} parent=1 // pred_region
      %269 = dma.done [#allocation24], 16
    $region141: #{tpu_custom_call.1} parent=1 // pred_fallthru
      _
    // Predicated region
    $region142: #{tpu_custom_call.1} parent=1 // pred_check
      _
    $region143: #{tpu_custom_call.1} parent=1 // pred_check_branch
      %271 = sbr.rel (0) target = $region145
    $region144: #{tpu_custom_call.1} parent=1 // pred_region
      %272 = dma.done [#allocation24], 16
    $region145: #{tpu_custom_call.1} parent=1 // pred_fallthru
      _
    // Predicated region
    $region146: #{tpu_custom_call.1} parent=1 // pred_check
      _
    $region147: #{tpu_custom_call.1} parent=1 // pred_check_branch
      %274 = sbr.rel (0) target = $region149
    $region148: #{tpu_custom_call.1} parent=1 // pred_region
      %275 = dma.done [#allocation27], 16
    $region149: #{tpu_custom_call.1} parent=1 // pred_fallthru
      _
    // Predicated region
    $region150: #{tpu_custom_call.1} parent=1 // pred_check
      _
    $region151: #{tpu_custom_call.1} parent=1 // pred_check_branch
      %277 = sbr.rel (0) target = $region153
    $region152: #{tpu_custom_call.1} parent=1 // pred_region
      %278 = dma.done [#allocation27], 512
    $region153: #{tpu_custom_call.1} parent=1 // pred_fallthru
      _
    %v279 = vld [vmem:[#allocation2] sm:$0xff]
    %v280 = vld [vmem:[#allocation2 + $0x8] sm:$0xff]
    %v281 = vld [vmem:[#allocation5] sm:$0xff]
    %v282 = vld [vmem:[#allocation5 + $0x8] sm:$0xff]
    %v283 = vld [vmem:[#allocation7] sm:$0xff]
    %v284 = vld [vmem:[#allocation7 + $0x8] sm:$0xff]
    %v285 = vld [vmem:[#allocation14] sm:$0x7]
    %v286 = vld [vmem:[#allocation16] sm:$0x1]
    %vm287 = vcmask 130048
    %v289 = vsel %vm287, %v281, 0
    %v292 = vsel %vm287, %v282, 0
    %294 = vmatprep.subr.mxu0 0.0
    %295 = vmatpush1.msra.mxu0 %v279
    %296 = vmatprep.subr.mxu0 0.0
    %297 = vmatpush1.msra.mxu0 %v280
    %298 = vmatprep.subr.mxu0 0.0
    %299 = vmatpush1.msra.mxu0 0.0
    %300 = vmatprep.subr.mxu0 0.0
    %301 = vmatpush1.msra.mxu0 0.0
    %302 = vmatprep.subr.mxu0 0.0
    %303 = vmatpush1.msra.mxu0 0.0
    %304 = vmatprep.subr.mxu0 0.0
    %305 = vmatpush1.msra.mxu0 0.0
    %306 = vmatprep.subr.mxu0 0.0
    %307 = vmatpush1.msra.mxu0 0.0
    %308 = vmatprep.subr.mxu0 0.0
    %309 = vmatpush1.msra.mxu0 0.0
    %310 = vmatprep.subr.mxu0 0.0
    %311 = vmatpush1.msra.mxu0 0.0
    %312 = vmatprep.subr.mxu0 0.0
    %313 = vmatpush1.msra.mxu0 0.0
    %314 = vmatprep.subr.mxu0 0.0
    %315 = vmatpush1.msra.mxu0 0.0
    %316 = vmatprep.subr.mxu0 0.0
    %317 = vmatpush1.msra.mxu0 0.0
    %318 = vmatprep.subr.mxu0 0.0
    %319 = vmatpush1.msra.mxu0 0.0
    %320 = vmatprep.subr.mxu0 0.0
    %321 = vmatpush1.msra.mxu0 0.0
    %322 = vmatprep.subr.mxu0 0.0
    %323 = vmatpush1.msra.mxu0 0.0
    %324 = vmatprep.subr.mxu0 0.0
    %325 = vmatpush1.msra.mxu0 0.0
    %326 = vmatprep.subr.mxu0 0.0
    %327 = vmatpush1.msra.mxu0 0.0
    %328 = vmatprep.subr.mxu0 0.0
    %329 = vmatpush1.msra.mxu0 0.0
    %330 = vmatprep.subr.mxu0 0.0
    %331 = vmatpush1.msra.mxu0 0.0
    %332 = vmatprep.subr.mxu0 0.0
    %333 = vmatpush1.msra.mxu0 0.0
    %334 = vmatprep.subr.mxu0 0.0
    %335 = vmatpush1.msra.mxu0 0.0
    %336 = vmatprep.subr.mxu0 0.0
    %337 = vmatpush1.msra.mxu0 0.0
    %338 = vmatprep.subr.mxu0 0.0
    %339 = vmatpush1.msra.mxu0 0.0
    %340 = vmatprep.subr.mxu0 0.0
    %341 = vmatpush1.msra.mxu0 0.0
    %342 = vmatprep.subr.mxu0 0.0
    %343 = vmatpush1.msra.mxu0 0.0
    %344 = vmatprep.subr.mxu0 0.0
    %345 = vmatpush1.msra.mxu0 0.0
    %346 = vmatprep.subr.mxu0 0.0
    %347 = vmatpush1.msra.mxu0 0.0
    %348 = vmatprep.subr.mxu0 0.0
    %349 = vmatpush1.msra.mxu0 0.0
    %350 = vmatprep.subr.mxu0 0.0
    %351 = vmatpush1.msra.mxu0 0.0
    %352 = vmatprep.subr.mxu0 0.0
    %353 = vmatpush1.msra.mxu0 0.0
    %354 = vmatprep.subr.mxu0 0.0
    %355 = vmatpush1.msra.mxu0 0.0
    %356 = vmatprep.subr.mxu0 0.0
    %357 = vmatpush1.msra.mxu0 0.0
    %358 = vmatprep.mubr.f32.mxu0 0.0
    %359 = vmatmul.mubr.f32.gmra.mrb[0].mxu0 %v289
    %v360 = vpop.f32.mrb[0].mxu0
    %v361 = vadd.f32 0.0, %v360
    %v362 = vpop.f32.mrb[0].mxu0
    %363 = vmatprep.mubr.f32.mxu0 0.0
    %364 = vmatmul.mubr.f32.gmra.mrb[0].mxu0 %v292
    %v365 = vpop.f32.mrb[0].mxu0
    %v366 = vadd.f32 0.0, %v365
    %v367 = vpop.f32.mrb[0].mxu0
    %368 = vdwg.mxu0
    %v370 = vsel %vm287, %v283, 0
    %v373 = vsel %vm287, %v284, 0
    %375 = vmatprep.subr.mxu0 0.0
    %376 = vmatpush1.msra.mxu0 %v279
    %377 = vmatprep.subr.mxu0 0.0
    %378 = vmatpush1.msra.mxu0 %v280
    %379 = vmatprep.subr.mxu0 0.0
    %380 = vmatpush1.msra.mxu0 0.0
    %381 = vmatprep.subr.mxu0 0.0
    %382 = vmatpush1.msra.mxu0 0.0
    %383 = vmatprep.subr.mxu0 0.0
    %384 = vmatpush1.msra.mxu0 0.0
    %385 = vmatprep.subr.mxu0 0.0
    %386 = vmatpush1.msra.mxu0 0.0
    %387 = vmatprep.subr.mxu0 0.0
    %388 = vmatpush1.msra.mxu0 0.0
    %389 = vmatprep.subr.mxu0 0.0
    %390 = vmatpush1.msra.mxu0 0.0
    %391 = vmatprep.subr.mxu0 0.0
    %392 = vmatpush1.msra.mxu0 0.0
    %393 = vmatprep.subr.mxu0 0.0
    %394 = vmatpush1.msra.mxu0 0.0
    %395 = vmatprep.subr.mxu0 0.0
    %396 = vmatpush1.msra.mxu0 0.0
    %397 = vmatprep.subr.mxu0 0.0
    %398 = vmatpush1.msra.mxu0 0.0
    %399 = vmatprep.subr.mxu0 0.0
    %400 = vmatpush1.msra.mxu0 0.0
    %401 = vmatprep.subr.mxu0 0.0
    %402 = vmatpush1.msra.mxu0 0.0
    %403 = vmatprep.subr.mxu0 0.0
    %404 = vmatpush1.msra.mxu0 0.0
    %405 = vmatprep.subr.mxu0 0.0
    %406 = vmatpush1.msra.mxu0 0.0
    %407 = vmatprep.subr.mxu0 0.0
    %408 = vmatpush1.msra.mxu0 0.0
    %409 = vmatprep.subr.mxu0 0.0
    %410 = vmatpush1.msra.mxu0 0.0
    %411 = vmatprep.subr.mxu0 0.0
    %412 = vmatpush1.msra.mxu0 0.0
    %413 = vmatprep.subr.mxu0 0.0
    %414 = vmatpush1.msra.mxu0 0.0
    %415 = vmatprep.subr.mxu0 0.0
    %416 = vmatpush1.msra.mxu0 0.0
    %417 = vmatprep.subr.mxu0 0.0
    %418 = vmatpush1.msra.mxu0 0.0
    %419 = vmatprep.subr.mxu0 0.0
    %420 = vmatpush1.msra.mxu0 0.0
    %421 = vmatprep.subr.mxu0 0.0
    %422 = vmatpush1.msra.mxu0 0.0
    %423 = vmatprep.subr.mxu0 0.0
    %424 = vmatpush1.msra.mxu0 0.0
    %425 = vmatprep.subr.mxu0 0.0
    %426 = vmatpush1.msra.mxu0 0.0
    %427 = vmatprep.subr.mxu0 0.0
    %428 = vmatpush1.msra.mxu0 0.0
    %429 = vmatprep.subr.mxu0 0.0
    %430 = vmatpush1.msra.mxu0 0.0
    %431 = vmatprep.subr.mxu0 0.0
    %432 = vmatpush1.msra.mxu0 0.0
    %433 = vmatprep.subr.mxu0 0.0
    %434 = vmatpush1.msra.mxu0 0.0
    %435 = vmatprep.subr.mxu0 0.0
    %436 = vmatpush1.msra.mxu0 0.0
    %437 = vmatprep.subr.mxu0 0.0
    %438 = vmatpush1.msra.mxu0 0.0
    %439 = vmatprep.mubr.f32.mxu0 0.0
    %440 = vmatmul.mubr.f32.gmra.mrb[0].mxu0 %v370
    %v441 = vpop.f32.mrb[0].mxu0
    %v442 = vadd.f32 0.0, %v441
    %v443 = vpop.f32.mrb[0].mxu0
    %444 = vmatprep.mubr.f32.mxu0 0.0
    %445 = vmatmul.mubr.f32.gmra.mrb[0].mxu0 %v373
    %v446 = vpop.f32.mrb[0].mxu0
    %v447 = vadd.f32 0.0, %v446
    %v448 = vpop.f32.mrb[0].mxu0
    %449 = vdwg.mxu0
    %v450 = vlaneseq
    %v451 = vshrl.u32 %v450, 7
    %v452 = vsub.s32 0, %v451
    %v453 = vrot.slane %v285, %v452
    %v454 = vmul.f32 %v361, %v453
    %v455 = vmul.f32 %v366, %v453
    %v456 = vlaneseq
    %v457 = vshrl.u32 %v456, 7
    %v458 = vsub.s32 1, %v457
    %v459 = vrot.slane %v285, %v458
    %v460 = vmul.f32 %v279, %v459
    %v461 = vmul.f32 %v280, %v459
    %v462 = vadd.f32 %v454, %v460
    %v463 = vadd.f32 %v455, %v461
    %v464 = vlaneseq
    %v465 = vshrl.u32 %v464, 7
    %v466 = vsub.s32 2, %v465
    %v467 = vrot.slane %v285, %v466
    %v468 = vmul.f32 %v442, %v467
    %v469 = vmul.f32 %v447, %v467
    %v470 = vadd.f32 %v462, %v468
    %v471 = vadd.f32 %v463, %v469
    %v473 = vlaneseq
    %v474 = vshrl.u32 %v473, 7
    %v475 = vsub.s32 0, %v474
    %v476 = vrot.slane %v286, %v475
    %v478 = vadd.f32 %v470, %v476
    %v479 = vadd.f32 %v471, %v476
    %v480 = vadd.f32 %v279, %v478
    %v481 = vadd.f32 %v280, %v479
    %v482 = vld [vmem:[#allocation17] sm:$0x1]
    %v483 = vld [vmem:[#allocation19] sm:$0x1]
    %vm484 = vcmask 261120
    %v485 = vsel %vm484, %v480, 0.0
    %486 = vadd.xlane.f32.xlu0 %v485
    %v487 = vpop.xlane.xlu0 %486
    %v488 = vsel %vm484, %v481, 0.0
    %489 = vadd.xlane.f32.xlu0 %v488
    %v490 = vpop.xlane.xlu0 %489
    %v491 = vrcp.pop 32.0
    %v492 = vmul.f32 %v487, %v491
    %v493 = vmul.f32 %v490, %v491
    %v494 = vsub.f32 %v480, %v492
    %v495 = vsub.f32 %v481, %v493
    %v496 = vmul.f32 %v494, %v494
    %v497 = vmul.f32 %v495, %v495
    %v498 = vsel %vm484, %v496, 0.0
    %499 = vadd.xlane.f32.xlu0 %v498
    %v500 = vpop.xlane.xlu0 %499
    %v501 = vsel %vm484, %v497, 0.0
    %502 = vadd.xlane.f32.xlu0 %v501
    %v503 = vpop.xlane.xlu0 %502
    %v504 = vmul.f32 %v500, %v491
    %v505 = vmul.f32 %v503, %v491
    %v506 = vadd.f32 %v504, 1e-05
    %v507 = vadd.f32 %v505, 1e-05
    %v508 = vrsqrt.pop %v506
    %v509 = vrsqrt.pop %v507
    %v510 = vmul.f32 %v494, %v508
    %v511 = vmul.f32 %v495, %v509
    %v513 = vlaneseq
    %v514 = vshrl.u32 %v513, 7
    %v515 = vsub.s32 0, %v514
    %v516 = vrot.slane %v482, %v515
    %v518 = vmul.f32 %v510, %v516
    %v519 = vmul.f32 %v511, %v516
    %v521 = vlaneseq
    %v522 = vshrl.u32 %v521, 7
    %v523 = vsub.s32 0, %v522
    %v524 = vrot.slane %v483, %v523
    %v526 = vadd.f32 %v518, %v524
    %v527 = vadd.f32 %v519, %v524
    %v528 = vld [vmem:[%s11] sm:$0xff]
    %v529 = vld [vmem:[%s11 + $0x8] sm:$0xff]
    %v530 = vld [vmem:[%s11 + $0x10] sm:$0xff]
    %v531 = vld [vmem:[%s11 + $0x18] sm:$0xff]
    %v532 = vld [vmem:[#allocation20] sm:$0x1]
    %v534 = vlaneseq
    %v535 = vshrl.u32 %v534, 7
    %v536 = vsub.s32 0, %v535
    %v537 = vrot.slane %v532, %v536
    %v540 = vsel %vm484, %v526, 0
    %v543 = vsel %vm484, %v527, 0
    %545 = vmatprep.subr.mxu0 0.0
    %546 = vmatpush1.msra.mxu0 %v528
    %547 = vmatprep.subr.mxu0 0.0
    %548 = vmatpush1.msra.mxu0 %v529
    %549 = vmatprep.subr.mxu0 0.0
    %550 = vmatpush1.msra.mxu0 %v530
    %551 = vmatprep.subr.mxu0 0.0
    %552 = vmatpush1.msra.mxu0 %v531
    %553 = vmatprep.subr.mxu0 0.0
    %554 = vmatpush1.msra.mxu0 0.0
    %555 = vmatprep.subr.mxu0 0.0
    %556 = vmatpush1.msra.mxu0 0.0
    %557 = vmatprep.subr.mxu0 0.0
    %558 = vmatpush1.msra.mxu0 0.0
    %559 = vmatprep.subr.mxu0 0.0
    %560 = vmatpush1.msra.mxu0 0.0
    %561 = vmatprep.subr.mxu0 0.0
    %562 = vmatpush1.msra.mxu0 0.0
    %563 = vmatprep.subr.mxu0 0.0
    %564 = vmatpush1.msra.mxu0 0.0
    %565 = vmatprep.subr.mxu0 0.0
    %566 = vmatpush1.msra.mxu0 0.0
    %567 = vmatprep.subr.mxu0 0.0
    %568 = vmatpush1.msra.mxu0 0.0
    %569 = vmatprep.subr.mxu0 0.0
    %570 = vmatpush1.msra.mxu0 0.0
    %571 = vmatprep.subr.mxu0 0.0
    %572 = vmatpush1.msra.mxu0 0.0
    %573 = vmatprep.subr.mxu0 0.0
    %574 = vmatpush1.msra.mxu0 0.0
    %575 = vmatprep.subr.mxu0 0.0
    %576 = vmatpush1.msra.mxu0 0.0
    %577 = vmatprep.subr.mxu0 0.0
    %578 = vmatpush1.msra.mxu0 0.0
    %579 = vmatprep.subr.mxu0 0.0
    %580 = vmatpush1.msra.mxu0 0.0
    %581 = vmatprep.subr.mxu0 0.0
    %582 = vmatpush1.msra.mxu0 0.0
    %583 = vmatprep.subr.mxu0 0.0
    %584 = vmatpush1.msra.mxu0 0.0
    %585 = vmatprep.subr.mxu0 0.0
    %586 = vmatpush1.msra.mxu0 0.0
    %587 = vmatprep.subr.mxu0 0.0
    %588 = vmatpush1.msra.mxu0 0.0
    %589 = vmatprep.subr.mxu0 0.0
    %590 = vmatpush1.msra.mxu0 0.0
    %591 = vmatprep.subr.mxu0 0.0
    %592 = vmatpush1.msra.mxu0 0.0
    %593 = vmatprep.subr.mxu0 0.0
    %594 = vmatpush1.msra.mxu0 0.0
    %595 = vmatprep.subr.mxu0 0.0
    %596 = vmatpush1.msra.mxu0 0.0
    %597 = vmatprep.subr.mxu0 0.0
    %598 = vmatpush1.msra.mxu0 0.0
    %599 = vmatprep.subr.mxu0 0.0
    %600 = vmatpush1.msra.mxu0 0.0
    %601 = vmatprep.subr.mxu0 0.0
    %602 = vmatpush1.msra.mxu0 0.0
    %603 = vmatprep.subr.mxu0 0.0
    %604 = vmatpush1.msra.mxu0 0.0
    %605 = vmatprep.subr.mxu0 0.0
    %606 = vmatpush1.msra.mxu0 0.0
    %607 = vmatprep.subr.mxu0 0.0
    %608 = vmatpush1.msra.mxu0 0.0
    %609 = vmatprep.mubr.f32.mxu0 0.0
    %610 = vmatmul.mubr.f32.gmra.mrb[0].mxu0 %v540
    %v611 = vpop.f32.mrb[0].mxu0
    %v612 = vadd.f32 %v537, %v611
    %v613 = vpop.f32.mrb[0].mxu0
    %614 = vmatprep.mubr.f32.mxu0 0.0
    %615 = vmatmul.mubr.f32.gmra.mrb[0].mxu0 %v543
    %v616 = vpop.f32.mrb[0].mxu0
    %v617 = vadd.f32 %v537, %v616
    %v618 = vpop.f32.mrb[0].mxu0
    %619 = vdwg.mxu0
    %vm620 = vcmp.gt.f32.partialorder %v612, 0.0
    %vm621 = vcmp.gt.f32.partialorder %v617, 0.0
    %v622 = vadd.f32 %v612, 1.0
    %v623 = vadd.f32 %v617, 1.0
    %v624 = vmul.f32 %v612, 1.442695
    %v625 = vpow.pop %v624
    %v626 = vmul.f32 %v617, 1.442695
    %v627 = vpow.pop %v626
    %v628 = vsel %vm620, %v622, %v625
    %v629 = vsel %vm621, %v623, %v627
    %v630 = vld [vmem:[#allocation8] sm:$0xff]
    %v631 = vld [vmem:[#allocation8 + $0x8] sm:$0xff]
    %v632 = vld [vmem:[#allocation10] sm:$0xff]
    %v633 = vld [vmem:[#allocation10 + $0x8] sm:$0xff]
    %v634 = vld [vmem:[#allocation11] sm:$0xff]
    %v635 = vld [vmem:[#allocation11 + $0x8] sm:$0xff]
    %v636 = vld [vmem:[#allocation11 + $0x10] sm:$0xff]
    %v637 = vld [vmem:[#allocation11 + $0x18] sm:$0xff]
    %v638 = vmul.f32 %v628, %v630
    %v639 = vmul.f32 %v629, %v631
    %v641 = vsel %vm484, %v628, 0
    %v644 = vsel %vm484, %v629, 0
    %646 = vmatprep.subr.mxu0 0.0
    %647 = vmatpush1.msra.mxu0 %v634
    %648 = vmatprep.subr.mxu0 0.0
    %649 = vmatpush1.msra.mxu0 %v635
    %650 = vmatprep.subr.mxu0 0.0
    %651 = vmatpush1.msra.mxu0 %v636
    %652 = vmatprep.subr.mxu0 0.0
    %653 = vmatpush1.msra.mxu0 %v637
    %654 = vmatprep.subr.mxu0 0.0
    %655 = vmatpush1.msra.mxu0 0.0
    %656 = vmatprep.subr.mxu0 0.0
    %657 = vmatpush1.msra.mxu0 0.0
    %658 = vmatprep.subr.mxu0 0.0
    %659 = vmatpush1.msra.mxu0 0.0
    %660 = vmatprep.subr.mxu0 0.0
    %661 = vmatpush1.msra.mxu0 0.0
    %662 = vmatprep.subr.mxu0 0.0
    %663 = vmatpush1.msra.mxu0 0.0
    %664 = vmatprep.subr.mxu0 0.0
    %665 = vmatpush1.msra.mxu0 0.0
    %666 = vmatprep.subr.mxu0 0.0
    %667 = vmatpush1.msra.mxu0 0.0
    %668 = vmatprep.subr.mxu0 0.0
    %669 = vmatpush1.msra.mxu0 0.0
    %670 = vmatprep.subr.mxu0 0.0
    %671 = vmatpush1.msra.mxu0 0.0
    %672 = vmatprep.subr.mxu0 0.0
    %673 = vmatpush1.msra.mxu0 0.0
    %674 = vmatprep.subr.mxu0 0.0
    %675 = vmatpush1.msra.mxu0 0.0
    %676 = vmatprep.subr.mxu0 0.0
    %677 = vmatpush1.msra.mxu0 0.0
    %678 = vmatprep.subr.mxu0 0.0
    %679 = vmatpush1.msra.mxu0 0.0
    %680 = vmatprep.subr.mxu0 0.0
    %681 = vmatpush1.msra.mxu0 0.0
    %682 = vmatprep.subr.mxu0 0.0
    %683 = vmatpush1.msra.mxu0 0.0
    %684 = vmatprep.subr.mxu0 0.0
    %685 = vmatpush1.msra.mxu0 0.0
    %686 = vmatprep.subr.mxu0 0.0
    %687 = vmatpush1.msra.mxu0 0.0
    %688 = vmatprep.subr.mxu0 0.0
    %689 = vmatpush1.msra.mxu0 0.0
    %690 = vmatprep.subr.mxu0 0.0
    %691 = vmatpush1.msra.mxu0 0.0
    %692 = vmatprep.subr.mxu0 0.0
    %693 = vmatpush1.msra.mxu0 0.0
    %694 = vmatprep.subr.mxu0 0.0
    %695 = vmatpush1.msra.mxu0 0.0
    %696 = vmatprep.subr.mxu0 0.0
    %697 = vmatpush1.msra.mxu0 0.0
    %698 = vmatprep.subr.mxu0 0.0
    %699 = vmatpush1.msra.mxu0 0.0
    %700 = vmatprep.subr.mxu0 0.0
    %701 = vmatpush1.msra.mxu0 0.0
    %702 = vmatprep.subr.mxu0 0.0
    %703 = vmatpush1.msra.mxu0 0.0
    %704 = vmatprep.subr.mxu0 0.0
    %705 = vmatpush1.msra.mxu0 0.0
    %706 = vmatprep.subr.mxu0 0.0
    %707 = vmatpush1.msra.mxu0 0.0
    %708 = vmatprep.subr.mxu0 0.0
    %709 = vmatpush1.msra.mxu0 0.0
    %710 = vmatprep.mubr.f32.mxu0 0.0
    %711 = vmatmul.mubr.f32.gmra.mrb[0].mxu0 %v641
    %v712 = vpop.f32.mrb[0].mxu0
    %v713 = vadd.f32 0.0, %v712
    %v714 = vpop.f32.mrb[0].mxu0
    %715 = vmatprep.mubr.f32.mxu0 0.0
    %716 = vmatmul.mubr.f32.gmra.mrb[0].mxu0 %v644
    %v717 = vpop.f32.mrb[0].mxu0
    %v718 = vadd.f32 0.0, %v717
    %v719 = vpop.f32.mrb[0].mxu0
    %720 = vdwg.mxu0
    %v721 = vmul.f32 %v713, %v632
    %v722 = vmul.f32 %v718, %v633
    %v723 = vadd.f32 %v638, %v721
    %v724 = vadd.f32 %v639, %v722
    %727 = vrot.lane.b32.xlu0 %v630, 32
    %v728 = vpop.permute.xlu0 %727
    %729 = vrot.lane.b32.xlu0 %v631, 32
    %v730 = vpop.permute.xlu0 %729
    %v733 = vmul.f32 %v628, %v728
    %v734 = vmul.f32 %v629, %v730
    %735 = vrot.lane.b32.xlu0 %v628, 96
    %v736 = vpop.permute.xlu0 %735
    %737 = vrot.lane.b32.xlu0 %v629, 96
    %v738 = vpop.permute.xlu0 %737
    %v739 = vsel %vm484, %v736, 0
    %v741 = vsel %vm484, %v738, 0
    %743 = vmatprep.subr.mxu0 0.0
    %744 = vmatpush1.msra.mxu0 %v634
    %745 = vmatprep.subr.mxu0 0.0
    %746 = vmatpush1.msra.mxu0 %v635
    %747 = vmatprep.subr.mxu0 0.0
    %748 = vmatpush1.msra.mxu0 %v636
    %749 = vmatprep.subr.mxu0 0.0
    %750 = vmatpush1.msra.mxu0 %v637
    %751 = vmatprep.subr.mxu0 0.0
    %752 = vmatpush1.msra.mxu0 0.0
    %753 = vmatprep.subr.mxu0 0.0
    %754 = vmatpush1.msra.mxu0 0.0
    %755 = vmatprep.subr.mxu0 0.0
    %756 = vmatpush1.msra.mxu0 0.0
    %757 = vmatprep.subr.mxu0 0.0
    %758 = vmatpush1.msra.mxu0 0.0
    %759 = vmatprep.subr.mxu0 0.0
    %760 = vmatpush1.msra.mxu0 0.0
    %761 = vmatprep.subr.mxu0 0.0
    %762 = vmatpush1.msra.mxu0 0.0
    %763 = vmatprep.subr.mxu0 0.0
    %764 = vmatpush1.msra.mxu0 0.0
    %765 = vmatprep.subr.mxu0 0.0
    %766 = vmatpush1.msra.mxu0 0.0
    %767 = vmatprep.subr.mxu0 0.0
    %768 = vmatpush1.msra.mxu0 0.0
    %769 = vmatprep.subr.mxu0 0.0
    %770 = vmatpush1.msra.mxu0 0.0
    %771 = vmatprep.subr.mxu0 0.0
    %772 = vmatpush1.msra.mxu0 0.0
    %773 = vmatprep.subr.mxu0 0.0
    %774 = vmatpush1.msra.mxu0 0.0
    %775 = vmatprep.subr.mxu0 0.0
    %776 = vmatpush1.msra.mxu0 0.0
    %777 = vmatprep.subr.mxu0 0.0
    %778 = vmatpush1.msra.mxu0 0.0
    %779 = vmatprep.subr.mxu0 0.0
    %780 = vmatpush1.msra.mxu0 0.0
    %781 = vmatprep.subr.mxu0 0.0
    %782 = vmatpush1.msra.mxu0 0.0
    %783 = vmatprep.subr.mxu0 0.0
    %784 = vmatpush1.msra.mxu0 0.0
    %785 = vmatprep.subr.mxu0 0.0
    %786 = vmatpush1.msra.mxu0 0.0
    %787 = vmatprep.subr.mxu0 0.0
    %788 = vmatpush1.msra.mxu0 0.0
    %789 = vmatprep.subr.mxu0 0.0
    %790 = vmatpush1.msra.mxu0 0.0
    %791 = vmatprep.subr.mxu0 0.0
    %792 = vmatpush1.msra.mxu0 0.0
    %793 = vmatprep.subr.mxu0 0.0
    %794 = vmatpush1.msra.mxu0 0.0
    %795 = vmatprep.subr.mxu0 0.0
    %796 = vmatpush1.msra.mxu0 0.0
    %797 = vmatprep.subr.mxu0 0.0
    %798 = vmatpush1.msra.mxu0 0.0
    %799 = vmatprep.subr.mxu0 0.0
    %800 = vmatpush1.msra.mxu0 0.0
    %801 = vmatprep.subr.mxu0 0.0
    %802 = vmatpush1.msra.mxu0 0.0
    %803 = vmatprep.subr.mxu0 0.0
    %804 = vmatpush1.msra.mxu0 0.0
    %805 = vmatprep.subr.mxu0 0.0
    %806 = vmatpush1.msra.mxu0 0.0
    %807 = vmatprep.mubr.f32.mxu0 0.0
    %808 = vmatmul.mubr.f32.gmra.mrb[0].mxu0 %v739
    %v809 = vpop.f32.mrb[0].mxu0
    %v810 = vadd.f32 0.0, %v809
    %v811 = vpop.f32.mrb[0].mxu0
    %812 = vmatprep.mubr.f32.mxu0 0.0
    %813 = vmatmul.mubr.f32.gmra.mrb[0].mxu0 %v741
    %v814 = vpop.f32.mrb[0].mxu0
    %v815 = vadd.f32 0.0, %v814
    %v816 = vpop.f32.mrb[0].mxu0
    %817 = vdwg.mxu0
    %v818 = vmul.f32 %v810, %v632
    %v819 = vmul.f32 %v815, %v633
    %822 = vrot.lane.b32.xlu0 %v818, 32
    %v823 = vpop.permute.xlu0 %822
    %824 = vrot.lane.b32.xlu0 %v819, 32
    %v825 = vpop.permute.xlu0 %824
    %v828 = vadd.f32 %v733, %v823
    %v829 = vadd.f32 %v734, %v825
    %v830 = vmul.f32 %v723, 0.35355338
    %v831 = vmul.f32 %v724, 0.35355338
    %v832 = vld [vmem:[#allocation13] sm:$0xf]
    %v833 = vlaneseq
    %v834 = vshrl.u32 %v833, 7
    %v835 = vsub.s32 0, %v834
    %v836 = vrot.slane %v832, %v835
    %v837 = vmul.f32 %v830, %v836
    %v838 = vmul.f32 %v831, %v836
    %840 = vrot.lane.b32.xlu0 %v836, 64
    %v841 = vpop.permute.xlu0 %840
    %v843 = vmul.f32 %v612, %v841
    %v844 = vmul.f32 %v617, %v841
    %846 = vrot.lane.b32.xlu0 %v828, 96
    %v847 = vpop.permute.xlu0 %846
    %v849 = vsel %vm484, %v837, 0
    %v851 = vsel %vm484, %v847, 0
    %853 = vmatprep.subr.mxu0 0.0
    %854 = vmatpush1.xpose.msra.mxu0 %v851
    %855 = vmatprep.subr.mxu0 0.0
    %856 = vmatpush1.xpose.msra.mxu0 0.0
    %857 = vmatprep.subr.mxu0 0.0
    %858 = vmatpush1.xpose.msra.mxu0 0.0
    %859 = vmatprep.subr.mxu0 0.0
    %860 = vmatpush1.xpose.msra.mxu0 0.0
    %861 = vmatprep.subr.mxu0 0.0
    %862 = vmatpush1.xpose.msra.mxu0 0.0
    %863 = vmatprep.subr.mxu0 0.0
    %864 = vmatpush1.xpose.msra.mxu0 0.0
    %865 = vmatprep.subr.mxu0 0.0
    %866 = vmatpush1.xpose.msra.mxu0 0.0
    %867 = vmatprep.subr.mxu0 0.0
    %868 = vmatpush1.xpose.msra.mxu0 0.0
    %869 = vmatprep.subr.mxu0 0.0
    %870 = vmatpush1.xpose.msra.mxu0 0.0
    %871 = vmatprep.subr.mxu0 0.0
    %872 = vmatpush1.xpose.msra.mxu0 0.0
    %873 = vmatprep.subr.mxu0 0.0
    %874 = vmatpush1.xpose.msra.mxu0 0.0
    %875 = vmatprep.subr.mxu0 0.0
    %876 = vmatpush1.xpose.msra.mxu0 0.0
    %877 = vmatprep.subr.mxu0 0.0
    %878 = vmatpush1.xpose.msra.mxu0 0.0
    %879 = vmatprep.subr.mxu0 0.0
    %880 = vmatpush1.xpose.msra.mxu0 0.0
    %881 = vmatprep.subr.mxu0 0.0
    %882 = vmatpush1.xpose.msra.mxu0 0.0
    %883 = vmatprep.subr.mxu0 0.0
    %884 = vmatpush1.xpose.msra.mxu0 0.0
    %885 = vmatprep.subr.mxu0 0.0
    %886 = vmatpush1.xpose.msra.mxu0 0.0
    %887 = vmatprep.subr.mxu0 0.0
    %888 = vmatpush1.xpose.msra.mxu0 0.0
    %889 = vmatprep.subr.mxu0 0.0
    %890 = vmatpush1.xpose.msra.mxu0 0.0
    %891 = vmatprep.subr.mxu0 0.0
    %892 = vmatpush1.xpose.msra.mxu0 0.0
    %893 = vmatprep.subr.mxu0 0.0
    %894 = vmatpush1.xpose.msra.mxu0 0.0
    %895 = vmatprep.subr.mxu0 0.0
    %896 = vmatpush1.xpose.msra.mxu0 0.0
    %897 = vmatprep.subr.mxu0 0.0
    %898 = vmatpush1.xpose.msra.mxu0 0.0
    %899 = vmatprep.subr.mxu0 0.0
    %900 = vmatpush1.xpose.msra.mxu0 0.0
    %901 = vmatprep.subr.mxu0 0.0
    %902 = vmatpush1.xpose.msra.mxu0 0.0
    %903 = vmatprep.subr.mxu0 0.0
    %904 = vmatpush1.xpose.msra.mxu0 0.0
    %905 = vmatprep.subr.mxu0 0.0
    %906 = vmatpush1.xpose.msra.mxu0 0.0
    %907 = vmatprep.subr.mxu0 0.0
    %908 = vmatpush1.xpose.msra.mxu0 0.0
    %909 = vmatprep.subr.mxu0 0.0
    %910 = vmatpush1.xpose.msra.mxu0 0.0
    %911 = vmatprep.subr.mxu0 0.0
    %912 = vmatpush1.xpose.msra.mxu0 0.0
    %913 = vmatprep.subr.mxu0 0.0
    %914 = vmatpush1.xpose.msra.mxu0 0.0
    %915 = vmatprep.subr.mxu0 0.0
    %916 = vmatpush1.xpose.msra.mxu0 0.0
    %917 = vmatprep.mubr.f32.mxu0 0.0
    %918 = vmatmul.mubr.f32.gmra.mrb[0].mxu0 %v849
    %v919 = vpop.f32.mrb[0].mxu0
    %v920 = vadd.f32 0.0, %v919
    %v921 = vpop.f32.mrb[0].mxu0
    %922 = vdwg.mxu0
    %924 = vrot.lane.b32.xlu0 %v829, 96
    %v925 = vpop.permute.xlu0 %924
    %v927 = vsel %vm484, %v838, 0
    %v929 = vsel %vm484, %v925, 0
    %931 = vmatprep.subr.mxu0 0.0
    %932 = vmatpush1.xpose.msra.mxu0 %v929
    %933 = vmatprep.subr.mxu0 0.0
    %934 = vmatpush1.xpose.msra.mxu0 0.0
    %935 = vmatprep.subr.mxu0 0.0
    %936 = vmatpush1.xpose.msra.mxu0 0.0
    %937 = vmatprep.subr.mxu0 0.0
    %938 = vmatpush1.xpose.msra.mxu0 0.0
    %939 = vmatprep.subr.mxu0 0.0
    %940 = vmatpush1.xpose.msra.mxu0 0.0
    %941 = vmatprep.subr.mxu0 0.0
    %942 = vmatpush1.xpose.msra.mxu0 0.0
    %943 = vmatprep.subr.mxu0 0.0
    %944 = vmatpush1.xpose.msra.mxu0 0.0
    %945 = vmatprep.subr.mxu0 0.0
    %946 = vmatpush1.xpose.msra.mxu0 0.0
    %947 = vmatprep.subr.mxu0 0.0
    %948 = vmatpush1.xpose.msra.mxu0 0.0
    %949 = vmatprep.subr.mxu0 0.0
    %950 = vmatpush1.xpose.msra.mxu0 0.0
    %951 = vmatprep.subr.mxu0 0.0
    %952 = vmatpush1.xpose.msra.mxu0 0.0
    %953 = vmatprep.subr.mxu0 0.0
    %954 = vmatpush1.xpose.msra.mxu0 0.0
    %955 = vmatprep.subr.mxu0 0.0
    %956 = vmatpush1.xpose.msra.mxu0 0.0
    %957 = vmatprep.subr.mxu0 0.0
    %958 = vmatpush1.xpose.msra.mxu0 0.0
    %959 = vmatprep.subr.mxu0 0.0
    %960 = vmatpush1.xpose.msra.mxu0 0.0
    %961 = vmatprep.subr.mxu0 0.0
    %962 = vmatpush1.xpose.msra.mxu0 0.0
    %963 = vmatprep.subr.mxu0 0.0
    %964 = vmatpush1.xpose.msra.mxu0 0.0
    %965 = vmatprep.subr.mxu0 0.0
    %966 = vmatpush1.xpose.msra.mxu0 0.0
    %967 = vmatprep.subr.mxu0 0.0
    %968 = vmatpush1.xpose.msra.mxu0 0.0
    %969 = vmatprep.subr.mxu0 0.0
    %970 = vmatpush1.xpose.msra.mxu0 0.0
    %971 = vmatprep.subr.mxu0 0.0
    %972 = vmatpush1.xpose.msra.mxu0 0.0
    %973 = vmatprep.subr.mxu0 0.0
    %974 = vmatpush1.xpose.msra.mxu0 0.0
    %975 = vmatprep.subr.mxu0 0.0
    %976 = vmatpush1.xpose.msra.mxu0 0.0
    %977 = vmatprep.subr.mxu0 0.0
    %978 = vmatpush1.xpose.msra.mxu0 0.0
    %979 = vmatprep.subr.mxu0 0.0
    %980 = vmatpush1.xpose.msra.mxu0 0.0
    %981 = vmatprep.subr.mxu0 0.0
    %982 = vmatpush1.xpose.msra.mxu0 0.0
    %983 = vmatprep.subr.mxu0 0.0
    %984 = vmatpush1.xpose.msra.mxu0 0.0
    %985 = vmatprep.subr.mxu0 0.0
    %986 = vmatpush1.xpose.msra.mxu0 0.0
    %987 = vmatprep.subr.mxu0 0.0
    %988 = vmatpush1.xpose.msra.mxu0 0.0
    %989 = vmatprep.subr.mxu0 0.0
    %990 = vmatpush1.xpose.msra.mxu0 0.0
    %991 = vmatprep.subr.mxu0 0.0
    %992 = vmatpush1.xpose.msra.mxu0 0.0
    %993 = vmatprep.subr.mxu0 0.0
    %994 = vmatpush1.xpose.msra.mxu0 0.0
    %995 = vmatprep.mubr.f32.mxu0 0.0
    %996 = vmatmul.mubr.f32.gmra.mrb[0].mxu0 %v927
    %v997 = vpop.f32.mrb[0].mxu0
    %v998 = vadd.f32 0.0, %v997
    %v999 = vpop.f32.mrb[0].mxu0
    %1000 = vdwg.mxu0
    %vm1001 = vcmask 64512
    %v1002 = vsel %vm1001, %v920, -inf
    %1003 = vmax.xlane.f32.xlu0 %v1002
    %v1004 = vpop.xlane.xlu0 %1003
    %v1005 = vsel %vm1001, %v998, -inf
    %1006 = vmax.xlane.f32.xlu0 %v1005
    %v1007 = vpop.xlane.xlu0 %1006
    %v1008 = vsub.f32 %v920, %v1004
    %v1009 = vsub.f32 %v998, %v1007
    %v1010 = vmul.f32 %v1008, 1.442695
    %v1011 = vpow.pop %v1010
    %v1012 = vmul.f32 %v1009, 1.442695
    %v1013 = vpow.pop %v1012
    %v1014 = vsel %vm1001, %v1011, 0.0
    %1015 = vadd.xlane.f32.xlu0 %v1014
    %v1016 = vpop.xlane.xlu0 %1015
    %v1017 = vsel %vm1001, %v1013, 0.0
    %1018 = vadd.xlane.f32.xlu0 %v1017
    %v1019 = vpop.xlane.xlu0 %1018
    %v1020 = vrcp.pop %v1016
    %v1021 = vrcp.pop %v1019
    %v1022 = vmul.f32 %v1011, %v1020
    %v1023 = vmul.f32 %v1013, %v1021
    %v1024 = vlaneseq
    %v1025 = vshrl.u32 %v1024, 7
    %v1026 = vsub.s32 1, %v1025
    %v1027 = vrot.slane %v832, %v1026
    %v1028 = vmul.f32 %v830, %v1027
    %v1029 = vmul.f32 %v831, %v1027
    %1031 = vrot.lane.b32.xlu0 %v1027, 64
    %v1032 = vpop.permute.xlu0 %1031
    %v1034 = vmul.f32 %v612, %v1032
    %v1035 = vmul.f32 %v617, %v1032
    %v1037 = vsel %vm484, %v1028, 0
    %1039 = vmatprep.subr.mxu0 0.0
    %1040 = vmatpush1.xpose.msra.mxu0 %v851
    %1041 = vmatprep.subr.mxu0 0.0
    %1042 = vmatpush1.xpose.msra.mxu0 0.0
    %1043 = vmatprep.subr.mxu0 0.0
    %1044 = vmatpush1.xpose.msra.mxu0 0.0
    %1045 = vmatprep.subr.mxu0 0.0
    %1046 = vmatpush1.xpose.msra.mxu0 0.0
    %1047 = vmatprep.subr.mxu0 0.0
    %1048 = vmatpush1.xpose.msra.mxu0 0.0
    %1049 = vmatprep.subr.mxu0 0.0
    %1050 = vmatpush1.xpose.msra.mxu0 0.0
    %1051 = vmatprep.subr.mxu0 0.0
    %1052 = vmatpush1.xpose.msra.mxu0 0.0
    %1053 = vmatprep.subr.mxu0 0.0
    %1054 = vmatpush1.xpose.msra.mxu0 0.0
    %1055 = vmatprep.subr.mxu0 0.0
    %1056 = vmatpush1.xpose.msra.mxu0 0.0
    %1057 = vmatprep.subr.mxu0 0.0
    %1058 = vmatpush1.xpose.msra.mxu0 0.0
    %1059 = vmatprep.subr.mxu0 0.0
    %1060 = vmatpush1.xpose.msra.mxu0 0.0
    %1061 = vmatprep.subr.mxu0 0.0
    %1062 = vmatpush1.xpose.msra.mxu0 0.0
    %1063 = vmatprep.subr.mxu0 0.0
    %1064 = vmatpush1.xpose.msra.mxu0 0.0
    %1065 = vmatprep.subr.mxu0 0.0
    %1066 = vmatpush1.xpose.msra.mxu0 0.0
    %1067 = vmatprep.subr.mxu0 0.0
    %1068 = vmatpush1.xpose.msra.mxu0 0.0
    %1069 = vmatprep.subr.mxu0 0.0
    %1070 = vmatpush1.xpose.msra.mxu0 0.0
    %1071 = vmatprep.subr.mxu0 0.0
    %1072 = vmatpush1.xpose.msra.mxu0 0.0
    %1073 = vmatprep.subr.mxu0 0.0
    %1074 = vmatpush1.xpose.msra.mxu0 0.0
    %1075 = vmatprep.subr.mxu0 0.0
    %1076 = vmatpush1.xpose.msra.mxu0 0.0
    %1077 = vmatprep.subr.mxu0 0.0
    %1078 = vmatpush1.xpose.msra.mxu0 0.0
    %1079 = vmatprep.subr.mxu0 0.0
    %1080 = vmatpush1.xpose.msra.mxu0 0.0
    %1081 = vmatprep.subr.mxu0 0.0
    %1082 = vmatpush1.xpose.msra.mxu0 0.0
    %1083 = vmatprep.subr.mxu0 0.0
    %1084 = vmatpush1.xpose.msra.mxu0 0.0
    %1085 = vmatprep.subr.mxu0 0.0
    %1086 = vmatpush1.xpose.msra.mxu0 0.0
    %1087 = vmatprep.subr.mxu0 0.0
    %1088 = vmatpush1.xpose.msra.mxu0 0.0
    %1089 = vmatprep.subr.mxu0 0.0
    %1090 = vmatpush1.xpose.msra.mxu0 0.0
    %1091 = vmatprep.subr.mxu0 0.0
    %1092 = vmatpush1.xpose.msra.mxu0 0.0
    %1093 = vmatprep.subr.mxu0 0.0
    %1094 = vmatpush1.xpose.msra.mxu0 0.0
    %1095 = vmatprep.subr.mxu0 0.0
    %1096 = vmatpush1.xpose.msra.mxu0 0.0
    %1097 = vmatprep.subr.mxu0 0.0
    %1098 = vmatpush1.xpose.msra.mxu0 0.0
    %1099 = vmatprep.subr.mxu0 0.0
    %1100 = vmatpush1.xpose.msra.mxu0 0.0
    %1101 = vmatprep.subr.mxu0 0.0
    %1102 = vmatpush1.xpose.msra.mxu0 0.0
    %1103 = vmatprep.mubr.f32.mxu0 0.0
    %1104 = vmatmul.mubr.f32.gmra.mrb[0].mxu0 %v1037
    %v1105 = vpop.f32.mrb[0].mxu0
    %v1106 = vadd.f32 0.0, %v1105
    %v1107 = vpop.f32.mrb[0].mxu0
    %1108 = vdwg.mxu0
    %v1110 = vsel %vm484, %v1029, 0
    %1112 = vmatprep.subr.mxu0 0.0
    %1113 = vmatpush1.xpose.msra.mxu0 %v929
    %1114 = vmatprep.subr.mxu0 0.0
    %1115 = vmatpush1.xpose.msra.mxu0 0.0
    %1116 = vmatprep.subr.mxu0 0.0
    %1117 = vmatpush1.xpose.msra.mxu0 0.0
    %1118 = vmatprep.subr.mxu0 0.0
    %1119 = vmatpush1.xpose.msra.mxu0 0.0
    %1120 = vmatprep.subr.mxu0 0.0
    %1121 = vmatpush1.xpose.msra.mxu0 0.0
    %1122 = vmatprep.subr.mxu0 0.0
    %1123 = vmatpush1.xpose.msra.mxu0 0.0
    %1124 = vmatprep.subr.mxu0 0.0
    %1125 = vmatpush1.xpose.msra.mxu0 0.0
    %1126 = vmatprep.subr.mxu0 0.0
    %1127 = vmatpush1.xpose.msra.mxu0 0.0
    %1128 = vmatprep.subr.mxu0 0.0
    %1129 = vmatpush1.xpose.msra.mxu0 0.0
    %1130 = vmatprep.subr.mxu0 0.0
    %1131 = vmatpush1.xpose.msra.mxu0 0.0
    %1132 = vmatprep.subr.mxu0 0.0
    %1133 = vmatpush1.xpose.msra.mxu0 0.0
    %1134 = vmatprep.subr.mxu0 0.0
    %1135 = vmatpush1.xpose.msra.mxu0 0.0
    %1136 = vmatprep.subr.mxu0 0.0
    %1137 = vmatpush1.xpose.msra.mxu0 0.0
    %1138 = vmatprep.subr.mxu0 0.0
    %1139 = vmatpush1.xpose.msra.mxu0 0.0
    %1140 = vmatprep.subr.mxu0 0.0
    %1141 = vmatpush1.xpose.msra.mxu0 0.0
    %1142 = vmatprep.subr.mxu0 0.0
    %1143 = vmatpush1.xpose.msra.mxu0 0.0
    %1144 = vmatprep.subr.mxu0 0.0
    %1145 = vmatpush1.xpose.msra.mxu0 0.0
    %1146 = vmatprep.subr.mxu0 0.0
    %1147 = vmatpush1.xpose.msra.mxu0 0.0
    %1148 = vmatprep.subr.mxu0 0.0
    %1149 = vmatpush1.xpose.msra.mxu0 0.0
    %1150 = vmatprep.subr.mxu0 0.0
    %1151 = vmatpush1.xpose.msra.mxu0 0.0
    %1152 = vmatprep.subr.mxu0 0.0
    %1153 = vmatpush1.xpose.msra.mxu0 0.0
    %1154 = vmatprep.subr.mxu0 0.0
    %1155 = vmatpush1.xpose.msra.mxu0 0.0
    %1156 = vmatprep.subr.mxu0 0.0
    %1157 = vmatpush1.xpose.msra.mxu0 0.0
    %1158 = vmatprep.subr.mxu0 0.0
    %1159 = vmatpush1.xpose.msra.mxu0 0.0
    %1160 = vmatprep.subr.mxu0 0.0
    %1161 = vmatpush1.xpose.msra.mxu0 0.0
    %1162 = vmatprep.subr.mxu0 0.0
    %1163 = vmatpush1.xpose.msra.mxu0 0.0
    %1164 = vmatprep.subr.mxu0 0.0
    %1165 = vmatpush1.xpose.msra.mxu0 0.0
    %1166 = vmatprep.subr.mxu0 0.0
    %1167 = vmatpush1.xpose.msra.mxu0 0.0
    %1168 = vmatprep.subr.mxu0 0.0
    %1169 = vmatpush1.xpose.msra.mxu0 0.0
    %1170 = vmatprep.subr.mxu0 0.0
    %1171 = vmatpush1.xpose.msra.mxu0 0.0
    %1172 = vmatprep.subr.mxu0 0.0
    %1173 = vmatpush1.xpose.msra.mxu0 0.0
    %1174 = vmatprep.subr.mxu0 0.0
    %1175 = vmatpush1.xpose.msra.mxu0 0.0
    %1176 = vmatprep.mubr.f32.mxu0 0.0
    %1177 = vmatmul.mubr.f32.gmra.mrb[0].mxu0 %v1110
    %v1178 = vpop.f32.mrb[0].mxu0
    %v1179 = vadd.f32 0.0, %v1178
    %v1180 = vpop.f32.mrb[0].mxu0
    %1181 = vdwg.mxu0
    %v1182 = vsel %vm1001, %v1106, -inf
    %1183 = vmax.xlane.f32.xlu0 %v1182
    %v1184 = vpop.xlane.xlu0 %1183
    %v1185 = vsel %vm1001, %v1179, -inf
    %1186 = vmax.xlane.f32.xlu0 %v1185
    %v1187 = vpop.xlane.xlu0 %1186
    %v1188 = vsub.f32 %v1106, %v1184
    %v1189 = vsub.f32 %v1179, %v1187
    %v1190 = vmul.f32 %v1188, 1.442695
    %v1191 = vpow.pop %v1190
    %v1192 = vmul.f32 %v1189, 1.442695
    %v1193 = vpow.pop %v1192
    %v1194 = vsel %vm1001, %v1191, 0.0
    %1195 = vadd.xlane.f32.xlu0 %v1194
    %v1196 = vpop.xlane.xlu0 %1195
    %v1197 = vsel %vm1001, %v1193, 0.0
    %1198 = vadd.xlane.f32.xlu0 %v1197
    %v1199 = vpop.xlane.xlu0 %1198
    %v1200 = vrcp.pop %v1196
    %v1201 = vrcp.pop %v1199
    %v1202 = vmul.f32 %v1191, %v1200
    %v1203 = vmul.f32 %v1193, %v1201
    %1205 = vrot.lane.b32.xlu0 %v1034, 64
    %v1206 = vpop.permute.xlu0 %1205
    %v1209 = vsel %vm1001, %v1202, 0
    %1211 = vmatprep.subr.mxu0 0.0
    %1212 = vmatpush1.msra.mxu0 %v1206
    %1213 = vmatprep.subr.mxu0 0.0
    %1214 = vmatpush1.msra.mxu0 0.0
    %1215 = vmatprep.subr.mxu0 0.0
    %1216 = vmatpush1.msra.mxu0 0.0
    %1217 = vmatprep.subr.mxu0 0.0
    %1218 = vmatpush1.msra.mxu0 0.0
    %1219 = vmatprep.subr.mxu0 0.0
    %1220 = vmatpush1.msra.mxu0 0.0
    %1221 = vmatprep.subr.mxu0 0.0
    %1222 = vmatpush1.msra.mxu0 0.0
    %1223 = vmatprep.subr.mxu0 0.0
    %1224 = vmatpush1.msra.mxu0 0.0
    %1225 = vmatprep.subr.mxu0 0.0
    %1226 = vmatpush1.msra.mxu0 0.0
    %1227 = vmatprep.subr.mxu0 0.0
    %1228 = vmatpush1.msra.mxu0 0.0
    %1229 = vmatprep.subr.mxu0 0.0
    %1230 = vmatpush1.msra.mxu0 0.0
    %1231 = vmatprep.subr.mxu0 0.0
    %1232 = vmatpush1.msra.mxu0 0.0
    %1233 = vmatprep.subr.mxu0 0.0
    %1234 = vmatpush1.msra.mxu0 0.0
    %1235 = vmatprep.subr.mxu0 0.0
    %1236 = vmatpush1.msra.mxu0 0.0
    %1237 = vmatprep.subr.mxu0 0.0
    %1238 = vmatpush1.msra.mxu0 0.0
    %1239 = vmatprep.subr.mxu0 0.0
    %1240 = vmatpush1.msra.mxu0 0.0
    %1241 = vmatprep.subr.mxu0 0.0
    %1242 = vmatpush1.msra.mxu0 0.0
    %1243 = vmatprep.subr.mxu0 0.0
    %1244 = vmatpush1.msra.mxu0 0.0
    %1245 = vmatprep.subr.mxu0 0.0
    %1246 = vmatpush1.msra.mxu0 0.0
    %1247 = vmatprep.subr.mxu0 0.0
    %1248 = vmatpush1.msra.mxu0 0.0
    %1249 = vmatprep.subr.mxu0 0.0
    %1250 = vmatpush1.msra.mxu0 0.0
    %1251 = vmatprep.subr.mxu0 0.0
    %1252 = vmatpush1.msra.mxu0 0.0
    %1253 = vmatprep.subr.mxu0 0.0
    %1254 = vmatpush1.msra.mxu0 0.0
    %1255 = vmatprep.subr.mxu0 0.0
    %1256 = vmatpush1.msra.mxu0 0.0
    %1257 = vmatprep.subr.mxu0 0.0
    %1258 = vmatpush1.msra.mxu0 0.0
    %1259 = vmatprep.subr.mxu0 0.0
    %1260 = vmatpush1.msra.mxu0 0.0
    %1261 = vmatprep.subr.mxu0 0.0
    %1262 = vmatpush1.msra.mxu0 0.0
    %1263 = vmatprep.subr.mxu0 0.0
    %1264 = vmatpush1.msra.mxu0 0.0
    %1265 = vmatprep.subr.mxu0 0.0
    %1266 = vmatpush1.msra.mxu0 0.0
    %1267 = vmatprep.subr.mxu0 0.0
    %1268 = vmatpush1.msra.mxu0 0.0
    %1269 = vmatprep.subr.mxu0 0.0
    %1270 = vmatpush1.msra.mxu0 0.0
    %1271 = vmatprep.subr.mxu0 0.0
    %1272 = vmatpush1.msra.mxu0 0.0
    %1273 = vmatprep.subr.mxu0 0.0
    %1274 = vmatpush1.msra.mxu0 0.0
    %1275 = vmatprep.mubr.f32.mxu0 0.0
    %1276 = vmatmul.mubr.f32.gmra.mrb[0].mxu0 %v1209
    %v1277 = vpop.f32.mrb[0].mxu0
    %v1278 = vadd.f32 0.0, %v1277
    %v1279 = vpop.f32.mrb[0].mxu0
    %1280 = vdwg.mxu0
    %1282 = vrot.lane.b32.xlu0 %v1035, 64
    %v1283 = vpop.permute.xlu0 %1282
    %v1286 = vsel %vm1001, %v1203, 0
    %1288 = vmatprep.subr.mxu0 0.0
    %1289 = vmatpush1.msra.mxu0 %v1283
    %1290 = vmatprep.subr.mxu0 0.0
    %1291 = vmatpush1.msra.mxu0 0.0
    %1292 = vmatprep.subr.mxu0 0.0
    %1293 = vmatpush1.msra.mxu0 0.0
    %1294 = vmatprep.subr.mxu0 0.0
    %1295 = vmatpush1.msra.mxu0 0.0
    %1296 = vmatprep.subr.mxu0 0.0
    %1297 = vmatpush1.msra.mxu0 0.0
    %1298 = vmatprep.subr.mxu0 0.0
    %1299 = vmatpush1.msra.mxu0 0.0
    %1300 = vmatprep.subr.mxu0 0.0
    %1301 = vmatpush1.msra.mxu0 0.0
    %1302 = vmatprep.subr.mxu0 0.0
    %1303 = vmatpush1.msra.mxu0 0.0
    %1304 = vmatprep.subr.mxu0 0.0
    %1305 = vmatpush1.msra.mxu0 0.0
    %1306 = vmatprep.subr.mxu0 0.0
    %1307 = vmatpush1.msra.mxu0 0.0
    %1308 = vmatprep.subr.mxu0 0.0
    %1309 = vmatpush1.msra.mxu0 0.0
    %1310 = vmatprep.subr.mxu0 0.0
    %1311 = vmatpush1.msra.mxu0 0.0
    %1312 = vmatprep.subr.mxu0 0.0
    %1313 = vmatpush1.msra.mxu0 0.0
    %1314 = vmatprep.subr.mxu0 0.0
    %1315 = vmatpush1.msra.mxu0 0.0
    %1316 = vmatprep.subr.mxu0 0.0
    %1317 = vmatpush1.msra.mxu0 0.0
    %1318 = vmatprep.subr.mxu0 0.0
    %1319 = vmatpush1.msra.mxu0 0.0
    %1320 = vmatprep.subr.mxu0 0.0
    %1321 = vmatpush1.msra.mxu0 0.0
    %1322 = vmatprep.subr.mxu0 0.0
    %1323 = vmatpush1.msra.mxu0 0.0
    %1324 = vmatprep.subr.mxu0 0.0
    %1325 = vmatpush1.msra.mxu0 0.0
    %1326 = vmatprep.subr.mxu0 0.0
    %1327 = vmatpush1.msra.mxu0 0.0
    %1328 = vmatprep.subr.mxu0 0.0
    %1329 = vmatpush1.msra.mxu0 0.0
    %1330 = vmatprep.subr.mxu0 0.0
    %1331 = vmatpush1.msra.mxu0 0.0
    %1332 = vmatprep.subr.mxu0 0.0
    %1333 = vmatpush1.msra.mxu0 0.0
    %1334 = vmatprep.subr.mxu0 0.0
    %1335 = vmatpush1.msra.mxu0 0.0
    %1336 = vmatprep.subr.mxu0 0.0
    %1337 = vmatpush1.msra.mxu0 0.0
    %1338 = vmatprep.subr.mxu0 0.0
    %1339 = vmatpush1.msra.mxu0 0.0
    %1340 = vmatprep.subr.mxu0 0.0
    %1341 = vmatpush1.msra.mxu0 0.0
    %1342 = vmatprep.subr.mxu0 0.0
    %1343 = vmatpush1.msra.mxu0 0.0
    %1344 = vmatprep.subr.mxu0 0.0
    %1345 = vmatpush1.msra.mxu0 0.0
    %1346 = vmatprep.subr.mxu0 0.0
    %1347 = vmatpush1.msra.mxu0 0.0
    %1348 = vmatprep.subr.mxu0 0.0
    %1349 = vmatpush1.msra.mxu0 0.0
    %1350 = vmatprep.subr.mxu0 0.0
    %1351 = vmatpush1.msra.mxu0 0.0
    %1352 = vmatprep.mubr.f32.mxu0 0.0
    %1353 = vmatmul.mubr.f32.gmra.mrb[0].mxu0 %v1286
    %v1354 = vpop.f32.mrb[0].mxu0
    %v1355 = vadd.f32 0.0, %v1354
    %v1356 = vpop.f32.mrb[0].mxu0
    %1357 = vdwg.mxu0
    %1359 = vrot.lane.b32.xlu0 %v843, 64
    %v1360 = vpop.permute.xlu0 %1359
    %v1363 = vsel %vm1001, %v1022, 0
    %1365 = vmatprep.subr.mxu0 0.0
    %1366 = vmatpush1.msra.mxu0 %v1360
    %1367 = vmatprep.subr.mxu0 0.0
    %1368 = vmatpush1.msra.mxu0 0.0
    %1369 = vmatprep.subr.mxu0 0.0
    %1370 = vmatpush1.msra.mxu0 0.0
    %1371 = vmatprep.subr.mxu0 0.0
    %1372 = vmatpush1.msra.mxu0 0.0
    %1373 = vmatprep.subr.mxu0 0.0
    %1374 = vmatpush1.msra.mxu0 0.0
    %1375 = vmatprep.subr.mxu0 0.0
    %1376 = vmatpush1.msra.mxu0 0.0
    %1377 = vmatprep.subr.mxu0 0.0
    %1378 = vmatpush1.msra.mxu0 0.0
    %1379 = vmatprep.subr.mxu0 0.0
    %1380 = vmatpush1.msra.mxu0 0.0
    %1381 = vmatprep.subr.mxu0 0.0
    %1382 = vmatpush1.msra.mxu0 0.0
    %1383 = vmatprep.subr.mxu0 0.0
    %1384 = vmatpush1.msra.mxu0 0.0
    %1385 = vmatprep.subr.mxu0 0.0
    %1386 = vmatpush1.msra.mxu0 0.0
    %1387 = vmatprep.subr.mxu0 0.0
    %1388 = vmatpush1.msra.mxu0 0.0
    %1389 = vmatprep.subr.mxu0 0.0
    %1390 = vmatpush1.msra.mxu0 0.0
    %1391 = vmatprep.subr.mxu0 0.0
    %1392 = vmatpush1.msra.mxu0 0.0
    %1393 = vmatprep.subr.mxu0 0.0
    %1394 = vmatpush1.msra.mxu0 0.0
    %1395 = vmatprep.subr.mxu0 0.0
    %1396 = vmatpush1.msra.mxu0 0.0
    %1397 = vmatprep.subr.mxu0 0.0
    %1398 = vmatpush1.msra.mxu0 0.0
    %1399 = vmatprep.subr.mxu0 0.0
    %1400 = vmatpush1.msra.mxu0 0.0
    %1401 = vmatprep.subr.mxu0 0.0
    %1402 = vmatpush1.msra.mxu0 0.0
    %1403 = vmatprep.subr.mxu0 0.0
    %1404 = vmatpush1.msra.mxu0 0.0
    %1405 = vmatprep.subr.mxu0 0.0
    %1406 = vmatpush1.msra.mxu0 0.0
    %1407 = vmatprep.subr.mxu0 0.0
    %1408 = vmatpush1.msra.mxu0 0.0
    %1409 = vmatprep.subr.mxu0 0.0
    %1410 = vmatpush1.msra.mxu0 0.0
    %1411 = vmatprep.subr.mxu0 0.0
    %1412 = vmatpush1.msra.mxu0 0.0
    %1413 = vmatprep.subr.mxu0 0.0
    %1414 = vmatpush1.msra.mxu0 0.0
    %1415 = vmatprep.subr.mxu0 0.0
    %1416 = vmatpush1.msra.mxu0 0.0
    %1417 = vmatprep.subr.mxu0 0.0
    %1418 = vmatpush1.msra.mxu0 0.0
    %1419 = vmatprep.subr.mxu0 0.0
    %1420 = vmatpush1.msra.mxu0 0.0
    %1421 = vmatprep.subr.mxu0 0.0
    %1422 = vmatpush1.msra.mxu0 0.0
    %1423 = vmatprep.subr.mxu0 0.0
    %1424 = vmatpush1.msra.mxu0 0.0
    %1425 = vmatprep.subr.mxu0 0.0
    %1426 = vmatpush1.msra.mxu0 0.0
    %1427 = vmatprep.subr.mxu0 0.0
    %1428 = vmatpush1.msra.mxu0 0.0
    %1429 = vmatprep.mubr.f32.mxu0 0.0
    %1430 = vmatmul.mubr.f32.gmra.mrb[0].mxu0 %v1363
    %v1431 = vpop.f32.mrb[0].mxu0
    %v1432 = vadd.f32 %v1278, %v1431
    %v1433 = vpop.f32.mrb[0].mxu0
    %1434 = vdwg.mxu0
    %1436 = vrot.lane.b32.xlu0 %v844, 64
    %v1437 = vpop.permute.xlu0 %1436
    %v1440 = vsel %vm1001, %v1023, 0
    %1442 = vmatprep.subr.mxu0 0.0
    %1443 = vmatpush1.msra.mxu0 %v1437
    %1444 = vmatprep.subr.mxu0 0.0
    %1445 = vmatpush1.msra.mxu0 0.0
    %1446 = vmatprep.subr.mxu0 0.0
    %1447 = vmatpush1.msra.mxu0 0.0
    %1448 = vmatprep.subr.mxu0 0.0
    %1449 = vmatpush1.msra.mxu0 0.0
    %1450 = vmatprep.subr.mxu0 0.0
    %1451 = vmatpush1.msra.mxu0 0.0
    %1452 = vmatprep.subr.mxu0 0.0
    %1453 = vmatpush1.msra.mxu0 0.0
    %1454 = vmatprep.subr.mxu0 0.0
    %1455 = vmatpush1.msra.mxu0 0.0
    %1456 = vmatprep.subr.mxu0 0.0
    %1457 = vmatpush1.msra.mxu0 0.0
    %1458 = vmatprep.subr.mxu0 0.0
    %1459 = vmatpush1.msra.mxu0 0.0
    %1460 = vmatprep.subr.mxu0 0.0
    %1461 = vmatpush1.msra.mxu0 0.0
    %1462 = vmatprep.subr.mxu0 0.0
    %1463 = vmatpush1.msra.mxu0 0.0
    %1464 = vmatprep.subr.mxu0 0.0
    %1465 = vmatpush1.msra.mxu0 0.0
    %1466 = vmatprep.subr.mxu0 0.0
    %1467 = vmatpush1.msra.mxu0 0.0
    %1468 = vmatprep.subr.mxu0 0.0
    %1469 = vmatpush1.msra.mxu0 0.0
    %1470 = vmatprep.subr.mxu0 0.0
    %1471 = vmatpush1.msra.mxu0 0.0
    %1472 = vmatprep.subr.mxu0 0.0
    %1473 = vmatpush1.msra.mxu0 0.0
    %1474 = vmatprep.subr.mxu0 0.0
    %1475 = vmatpush1.msra.mxu0 0.0
    %1476 = vmatprep.subr.mxu0 0.0
    %1477 = vmatpush1.msra.mxu0 0.0
    %1478 = vmatprep.subr.mxu0 0.0
    %1479 = vmatpush1.msra.mxu0 0.0
    %1480 = vmatprep.subr.mxu0 0.0
    %1481 = vmatpush1.msra.mxu0 0.0
    %1482 = vmatprep.subr.mxu0 0.0
    %1483 = vmatpush1.msra.mxu0 0.0
    %1484 = vmatprep.subr.mxu0 0.0
    %1485 = vmatpush1.msra.mxu0 0.0
    %1486 = vmatprep.subr.mxu0 0.0
    %1487 = vmatpush1.msra.mxu0 0.0
    %1488 = vmatprep.subr.mxu0 0.0
    %1489 = vmatpush1.msra.mxu0 0.0
    %1490 = vmatprep.subr.mxu0 0.0
    %1491 = vmatpush1.msra.mxu0 0.0
    %1492 = vmatprep.subr.mxu0 0.0
    %1493 = vmatpush1.msra.mxu0 0.0
    %1494 = vmatprep.subr.mxu0 0.0
    %1495 = vmatpush1.msra.mxu0 0.0
    %1496 = vmatprep.subr.mxu0 0.0
    %1497 = vmatpush1.msra.mxu0 0.0
    %1498 = vmatprep.subr.mxu0 0.0
    %1499 = vmatpush1.msra.mxu0 0.0
    %1500 = vmatprep.subr.mxu0 0.0
    %1501 = vmatpush1.msra.mxu0 0.0
    %1502 = vmatprep.subr.mxu0 0.0
    %1503 = vmatpush1.msra.mxu0 0.0
    %1504 = vmatprep.subr.mxu0 0.0
    %1505 = vmatpush1.msra.mxu0 0.0
    %1506 = vmatprep.mubr.f32.mxu0 0.0
    %1507 = vmatmul.mubr.f32.gmra.mrb[0].mxu0 %v1440
    %v1508 = vpop.f32.mrb[0].mxu0
    %v1509 = vadd.f32 %v1355, %v1508
    %v1510 = vpop.f32.mrb[0].mxu0
    %1511 = vdwg.mxu0
    %v1512 = vlaneseq
    %v1513 = vshrl.u32 %v1512, 7
    %v1514 = vsub.s32 2, %v1513
    %v1515 = vrot.slane %v832, %v1514
    %v1516 = vmul.f32 %v830, %v1515
    %v1517 = vmul.f32 %v831, %v1515
    %1519 = vrot.lane.b32.xlu0 %v1515, 64
    %v1520 = vpop.permute.xlu0 %1519
    %v1522 = vmul.f32 %v612, %v1520
    %v1523 = vmul.f32 %v617, %v1520
    %v1525 = vsel %vm484, %v1516, 0
    %1527 = vmatprep.subr.mxu0 0.0
    %1528 = vmatpush1.xpose.msra.mxu0 %v851
    %1529 = vmatprep.subr.mxu0 0.0
    %1530 = vmatpush1.xpose.msra.mxu0 0.0
    %1531 = vmatprep.subr.mxu0 0.0
    %1532 = vmatpush1.xpose.msra.mxu0 0.0
    %1533 = vmatprep.subr.mxu0 0.0
    %1534 = vmatpush1.xpose.msra.mxu0 0.0
    %1535 = vmatprep.subr.mxu0 0.0
    %1536 = vmatpush1.xpose.msra.mxu0 0.0
    %1537 = vmatprep.subr.mxu0 0.0
    %1538 = vmatpush1.xpose.msra.mxu0 0.0
    %1539 = vmatprep.subr.mxu0 0.0
    %1540 = vmatpush1.xpose.msra.mxu0 0.0
    %1541 = vmatprep.subr.mxu0 0.0
    %1542 = vmatpush1.xpose.msra.mxu0 0.0
    %1543 = vmatprep.subr.mxu0 0.0
    %1544 = vmatpush1.xpose.msra.mxu0 0.0
    %1545 = vmatprep.subr.mxu0 0.0
    %1546 = vmatpush1.xpose.msra.mxu0 0.0
    %1547 = vmatprep.subr.mxu0 0.0
    %1548 = vmatpush1.xpose.msra.mxu0 0.0
    %1549 = vmatprep.subr.mxu0 0.0
    %1550 = vmatpush1.xpose.msra.mxu0 0.0
    %1551 = vmatprep.subr.mxu0 0.0
    %1552 = vmatpush1.xpose.msra.mxu0 0.0
    %1553 = vmatprep.subr.mxu0 0.0
    %1554 = vmatpush1.xpose.msra.mxu0 0.0
    %1555 = vmatprep.subr.mxu0 0.0
    %1556 = vmatpush1.xpose.msra.mxu0 0.0
    %1557 = vmatprep.subr.mxu0 0.0
    %1558 = vmatpush1.xpose.msra.mxu0 0.0
    %1559 = vmatprep.subr.mxu0 0.0
    %1560 = vmatpush1.xpose.msra.mxu0 0.0
    %1561 = vmatprep.subr.mxu0 0.0
    %1562 = vmatpush1.xpose.msra.mxu0 0.0
    %1563 = vmatprep.subr.mxu0 0.0
    %1564 = vmatpush1.xpose.msra.mxu0 0.0
    %1565 = vmatprep.subr.mxu0 0.0
    %1566 = vmatpush1.xpose.msra.mxu0 0.0
    %1567 = vmatprep.subr.mxu0 0.0
    %1568 = vmatpush1.xpose.msra.mxu0 0.0
    %1569 = vmatprep.subr.mxu0 0.0
    %1570 = vmatpush1.xpose.msra.mxu0 0.0
    %1571 = vmatprep.subr.mxu0 0.0
    %1572 = vmatpush1.xpose.msra.mxu0 0.0
    %1573 = vmatprep.subr.mxu0 0.0
    %1574 = vmatpush1.xpose.msra.mxu0 0.0
    %1575 = vmatprep.subr.mxu0 0.0
    %1576 = vmatpush1.xpose.msra.mxu0 0.0
    %1577 = vmatprep.subr.mxu0 0.0
    %1578 = vmatpush1.xpose.msra.mxu0 0.0
    %1579 = vmatprep.subr.mxu0 0.0
    %1580 = vmatpush1.xpose.msra.mxu0 0.0
    %1581 = vmatprep.subr.mxu0 0.0
    %1582 = vmatpush1.xpose.msra.mxu0 0.0
    %1583 = vmatprep.subr.mxu0 0.0
    %1584 = vmatpush1.xpose.msra.mxu0 0.0
    %1585 = vmatprep.subr.mxu0 0.0
    %1586 = vmatpush1.xpose.msra.mxu0 0.0
    %1587 = vmatprep.subr.mxu0 0.0
    %1588 = vmatpush1.xpose.msra.mxu0 0.0
    %1589 = vmatprep.subr.mxu0 0.0
    %1590 = vmatpush1.xpose.msra.mxu0 0.0
    %1591 = vmatprep.mubr.f32.mxu0 0.0
    %1592 = vmatmul.mubr.f32.gmra.mrb[0].mxu0 %v1525
    %v1593 = vpop.f32.mrb[0].mxu0
    %v1594 = vadd.f32 0.0, %v1593
    %v1595 = vpop.f32.mrb[0].mxu0
    %1596 = vdwg.mxu0
    %v1598 = vsel %vm484, %v1517, 0
    %1600 = vmatprep.subr.mxu0 0.0
    %1601 = vmatpush1.xpose.msra.mxu0 %v929
    %1602 = vmatprep.subr.mxu0 0.0
    %1603 = vmatpush1.xpose.msra.mxu0 0.0
    %1604 = vmatprep.subr.mxu0 0.0
    %1605 = vmatpush1.xpose.msra.mxu0 0.0
    %1606 = vmatprep.subr.mxu0 0.0
    %1607 = vmatpush1.xpose.msra.mxu0 0.0
    %1608 = vmatprep.subr.mxu0 0.0
    %1609 = vmatpush1.xpose.msra.mxu0 0.0
    %1610 = vmatprep.subr.mxu0 0.0
    %1611 = vmatpush1.xpose.msra.mxu0 0.0
    %1612 = vmatprep.subr.mxu0 0.0
    %1613 = vmatpush1.xpose.msra.mxu0 0.0
    %1614 = vmatprep.subr.mxu0 0.0
    %1615 = vmatpush1.xpose.msra.mxu0 0.0
    %1616 = vmatprep.subr.mxu0 0.0
    %1617 = vmatpush1.xpose.msra.mxu0 0.0
    %1618 = vmatprep.subr.mxu0 0.0
    %1619 = vmatpush1.xpose.msra.mxu0 0.0
    %1620 = vmatprep.subr.mxu0 0.0
    %1621 = vmatpush1.xpose.msra.mxu0 0.0
    %1622 = vmatprep.subr.mxu0 0.0
    %1623 = vmatpush1.xpose.msra.mxu0 0.0
    %1624 = vmatprep.subr.mxu0 0.0
    %1625 = vmatpush1.xpose.msra.mxu0 0.0
    %1626 = vmatprep.subr.mxu0 0.0
    %1627 = vmatpush1.xpose.msra.mxu0 0.0
    %1628 = vmatprep.subr.mxu0 0.0
    %1629 = vmatpush1.xpose.msra.mxu0 0.0
    %1630 = vmatprep.subr.mxu0 0.0
    %1631 = vmatpush1.xpose.msra.mxu0 0.0
    %1632 = vmatprep.subr.mxu0 0.0
    %1633 = vmatpush1.xpose.msra.mxu0 0.0
    %1634 = vmatprep.subr.mxu0 0.0
    %1635 = vmatpush1.xpose.msra.mxu0 0.0
    %1636 = vmatprep.subr.mxu0 0.0
    %1637 = vmatpush1.xpose.msra.mxu0 0.0
    %1638 = vmatprep.subr.mxu0 0.0
    %1639 = vmatpush1.xpose.msra.mxu0 0.0
    %1640 = vmatprep.subr.mxu0 0.0
    %1641 = vmatpush1.xpose.msra.mxu0 0.0
    %1642 = vmatprep.subr.mxu0 0.0
    %1643 = vmatpush1.xpose.msra.mxu0 0.0
    %1644 = vmatprep.subr.mxu0 0.0
    %1645 = vmatpush1.xpose.msra.mxu0 0.0
    %1646 = vmatprep.subr.mxu0 0.0
    %1647 = vmatpush1.xpose.msra.mxu0 0.0
    %1648 = vmatprep.subr.mxu0 0.0
    %1649 = vmatpush1.xpose.msra.mxu0 0.0
    %1650 = vmatprep.subr.mxu0 0.0
    %1651 = vmatpush1.xpose.msra.mxu0 0.0
    %1652 = vmatprep.subr.mxu0 0.0
    %1653 = vmatpush1.xpose.msra.mxu0 0.0
    %1654 = vmatprep.subr.mxu0 0.0
    %1655 = vmatpush1.xpose.msra.mxu0 0.0
    %1656 = vmatprep.subr.mxu0 0.0
    %1657 = vmatpush1.xpose.msra.mxu0 0.0
    %1658 = vmatprep.subr.mxu0 0.0
    %1659 = vmatpush1.xpose.msra.mxu0 0.0
    %1660 = vmatprep.subr.mxu0 0.0
    %1661 = vmatpush1.xpose.msra.mxu0 0.0
    %1662 = vmatprep.subr.mxu0 0.0
    %1663 = vmatpush1.xpose.msra.mxu0 0.0
    %1664 = vmatprep.mubr.f32.mxu0 0.0
    %1665 = vmatmul.mubr.f32.gmra.mrb[0].mxu0 %v1598
    %v1666 = vpop.f32.mrb[0].mxu0
    %v1667 = vadd.f32 0.0, %v1666
    %v1668 = vpop.f32.mrb[0].mxu0
    %1669 = vdwg.mxu0
    %v1670 = vsel %vm1001, %v1594, -inf
    %1671 = vmax.xlane.f32.xlu0 %v1670
    %v1672 = vpop.xlane.xlu0 %1671
    %v1673 = vsel %vm1001, %v1667, -inf
    %1674 = vmax.xlane.f32.xlu0 %v1673
    %v1675 = vpop.xlane.xlu0 %1674
    %v1676 = vsub.f32 %v1594, %v1672
    %v1677 = vsub.f32 %v1667, %v1675
    %v1678 = vmul.f32 %v1676, 1.442695
    %v1679 = vpow.pop %v1678
    %v1680 = vmul.f32 %v1677, 1.442695
    %v1681 = vpow.pop %v1680
    %v1682 = vsel %vm1001, %v1679, 0.0
    %1683 = vadd.xlane.f32.xlu0 %v1682
    %v1684 = vpop.xlane.xlu0 %1683
    %v1685 = vsel %vm1001, %v1681, 0.0
    %1686 = vadd.xlane.f32.xlu0 %v1685
    %v1687 = vpop.xlane.xlu0 %1686
    %v1688 = vrcp.pop %v1684
    %v1689 = vrcp.pop %v1687
    %v1690 = vmul.f32 %v1679, %v1688
    %v1691 = vmul.f32 %v1681, %v1689
    %1693 = vrot.lane.b32.xlu0 %v1522, 64
    %v1694 = vpop.permute.xlu0 %1693
    %v1697 = vsel %vm1001, %v1690, 0
    %1699 = vmatprep.subr.mxu0 0.0
    %1700 = vmatpush1.msra.mxu0 %v1694
    %1701 = vmatprep.subr.mxu0 0.0
    %1702 = vmatpush1.msra.mxu0 0.0
    %1703 = vmatprep.subr.mxu0 0.0
    %1704 = vmatpush1.msra.mxu0 0.0
    %1705 = vmatprep.subr.mxu0 0.0
    %1706 = vmatpush1.msra.mxu0 0.0
    %1707 = vmatprep.subr.mxu0 0.0
    %1708 = vmatpush1.msra.mxu0 0.0
    %1709 = vmatprep.subr.mxu0 0.0
    %1710 = vmatpush1.msra.mxu0 0.0
    %1711 = vmatprep.subr.mxu0 0.0
    %1712 = vmatpush1.msra.mxu0 0.0
    %1713 = vmatprep.subr.mxu0 0.0
    %1714 = vmatpush1.msra.mxu0 0.0
    %1715 = vmatprep.subr.mxu0 0.0
    %1716 = vmatpush1.msra.mxu0 0.0
    %1717 = vmatprep.subr.mxu0 0.0
    %1718 = vmatpush1.msra.mxu0 0.0
    %1719 = vmatprep.subr.mxu0 0.0
    %1720 = vmatpush1.msra.mxu0 0.0
    %1721 = vmatprep.subr.mxu0 0.0
    %1722 = vmatpush1.msra.mxu0 0.0
    %1723 = vmatprep.subr.mxu0 0.0
    %1724 = vmatpush1.msra.mxu0 0.0
    %1725 = vmatprep.subr.mxu0 0.0
    %1726 = vmatpush1.msra.mxu0 0.0
    %1727 = vmatprep.subr.mxu0 0.0
    %1728 = vmatpush1.msra.mxu0 0.0
    %1729 = vmatprep.subr.mxu0 0.0
    %1730 = vmatpush1.msra.mxu0 0.0
    %1731 = vmatprep.subr.mxu0 0.0
    %1732 = vmatpush1.msra.mxu0 0.0
    %1733 = vmatprep.subr.mxu0 0.0
    %1734 = vmatpush1.msra.mxu0 0.0
    %1735 = vmatprep.subr.mxu0 0.0
    %1736 = vmatpush1.msra.mxu0 0.0
    %1737 = vmatprep.subr.mxu0 0.0
    %1738 = vmatpush1.msra.mxu0 0.0
    %1739 = vmatprep.subr.mxu0 0.0
    %1740 = vmatpush1.msra.mxu0 0.0
    %1741 = vmatprep.subr.mxu0 0.0
    %1742 = vmatpush1.msra.mxu0 0.0
    %1743 = vmatprep.subr.mxu0 0.0
    %1744 = vmatpush1.msra.mxu0 0.0
    %1745 = vmatprep.subr.mxu0 0.0
    %1746 = vmatpush1.msra.mxu0 0.0
    %1747 = vmatprep.subr.mxu0 0.0
    %1748 = vmatpush1.msra.mxu0 0.0
    %1749 = vmatprep.subr.mxu0 0.0
    %1750 = vmatpush1.msra.mxu0 0.0
    %1751 = vmatprep.subr.mxu0 0.0
    %1752 = vmatpush1.msra.mxu0 0.0
    %1753 = vmatprep.subr.mxu0 0.0
    %1754 = vmatpush1.msra.mxu0 0.0
    %1755 = vmatprep.subr.mxu0 0.0
    %1756 = vmatpush1.msra.mxu0 0.0
    %1757 = vmatprep.subr.mxu0 0.0
    %1758 = vmatpush1.msra.mxu0 0.0
    %1759 = vmatprep.subr.mxu0 0.0
    %1760 = vmatpush1.msra.mxu0 0.0
    %1761 = vmatprep.subr.mxu0 0.0
    %1762 = vmatpush1.msra.mxu0 0.0
    %1763 = vmatprep.mubr.f32.mxu0 0.0
    %1764 = vmatmul.mubr.f32.gmra.mrb[0].mxu0 %v1697
    %v1765 = vpop.f32.mrb[0].mxu0
    %v1766 = vadd.f32 0.0, %v1765
    %v1767 = vpop.f32.mrb[0].mxu0
    %1768 = vdwg.mxu0
    %1770 = vrot.lane.b32.xlu0 %v1523, 64
    %v1771 = vpop.permute.xlu0 %1770
    %v1774 = vsel %vm1001, %v1691, 0
    %1776 = vmatprep.subr.mxu0 0.0
    %1777 = vmatpush1.msra.mxu0 %v1771
    %1778 = vmatprep.subr.mxu0 0.0
    %1779 = vmatpush1.msra.mxu0 0.0
    %1780 = vmatprep.subr.mxu0 0.0
    %1781 = vmatpush1.msra.mxu0 0.0
    %1782 = vmatprep.subr.mxu0 0.0
    %1783 = vmatpush1.msra.mxu0 0.0
    %1784 = vmatprep.subr.mxu0 0.0
    %1785 = vmatpush1.msra.mxu0 0.0
    %1786 = vmatprep.subr.mxu0 0.0
    %1787 = vmatpush1.msra.mxu0 0.0
    %1788 = vmatprep.subr.mxu0 0.0
    %1789 = vmatpush1.msra.mxu0 0.0
    %1790 = vmatprep.subr.mxu0 0.0
    %1791 = vmatpush1.msra.mxu0 0.0
    %1792 = vmatprep.subr.mxu0 0.0
    %1793 = vmatpush1.msra.mxu0 0.0
    %1794 = vmatprep.subr.mxu0 0.0
    %1795 = vmatpush1.msra.mxu0 0.0
    %1796 = vmatprep.subr.mxu0 0.0
    %1797 = vmatpush1.msra.mxu0 0.0
    %1798 = vmatprep.subr.mxu0 0.0
    %1799 = vmatpush1.msra.mxu0 0.0
    %1800 = vmatprep.subr.mxu0 0.0
    %1801 = vmatpush1.msra.mxu0 0.0
    %1802 = vmatprep.subr.mxu0 0.0
    %1803 = vmatpush1.msra.mxu0 0.0
    %1804 = vmatprep.subr.mxu0 0.0
    %1805 = vmatpush1.msra.mxu0 0.0
    %1806 = vmatprep.subr.mxu0 0.0
    %1807 = vmatpush1.msra.mxu0 0.0
    %1808 = vmatprep.subr.mxu0 0.0
    %1809 = vmatpush1.msra.mxu0 0.0
    %1810 = vmatprep.subr.mxu0 0.0
    %1811 = vmatpush1.msra.mxu0 0.0
    %1812 = vmatprep.subr.mxu0 0.0
    %1813 = vmatpush1.msra.mxu0 0.0
    %1814 = vmatprep.subr.mxu0 0.0
    %1815 = vmatpush1.msra.mxu0 0.0
    %1816 = vmatprep.subr.mxu0 0.0
    %1817 = vmatpush1.msra.mxu0 0.0
    %1818 = vmatprep.subr.mxu0 0.0
    %1819 = vmatpush1.msra.mxu0 0.0
    %1820 = vmatprep.subr.mxu0 0.0
    %1821 = vmatpush1.msra.mxu0 0.0
    %1822 = vmatprep.subr.mxu0 0.0
    %1823 = vmatpush1.msra.mxu0 0.0
    %1824 = vmatprep.subr.mxu0 0.0
    %1825 = vmatpush1.msra.mxu0 0.0
    %1826 = vmatprep.subr.mxu0 0.0
    %1827 = vmatpush1.msra.mxu0 0.0
    %1828 = vmatprep.subr.mxu0 0.0
    %1829 = vmatpush1.msra.mxu0 0.0
    %1830 = vmatprep.subr.mxu0 0.0
    %1831 = vmatpush1.msra.mxu0 0.0
    %1832 = vmatprep.subr.mxu0 0.0
    %1833 = vmatpush1.msra.mxu0 0.0
    %1834 = vmatprep.subr.mxu0 0.0
    %1835 = vmatpush1.msra.mxu0 0.0
    %1836 = vmatprep.subr.mxu0 0.0
    %1837 = vmatpush1.msra.mxu0 0.0
    %1838 = vmatprep.subr.mxu0 0.0
    %1839 = vmatpush1.msra.mxu0 0.0
    %1840 = vmatprep.mubr.f32.mxu0 0.0
    %1841 = vmatmul.mubr.f32.gmra.mrb[0].mxu0 %v1774
    %v1842 = vpop.f32.mrb[0].mxu0
    %v1843 = vadd.f32 0.0, %v1842
    %v1844 = vpop.f32.mrb[0].mxu0
    %1845 = vdwg.mxu0
    %v1846 = vadd.f32 %v1432, %v1766
    %v1847 = vadd.f32 %v1509, %v1843
    %v1848 = vlaneseq
    %v1849 = vshrl.u32 %v1848, 7
    %v1850 = vsub.s32 3, %v1849
    %v1851 = vrot.slane %v832, %v1850
    %v1852 = vmul.f32 %v830, %v1851
    %v1853 = vmul.f32 %v831, %v1851
    %1855 = vrot.lane.b32.xlu0 %v1851, 64
    %v1856 = vpop.permute.xlu0 %1855
    %v1858 = vmul.f32 %v612, %v1856
    %v1859 = vmul.f32 %v617, %v1856
    %v1861 = vsel %vm484, %v1852, 0
    %1863 = vmatprep.subr.mxu0 0.0
    %1864 = vmatpush1.xpose.msra.mxu0 %v851
    %1865 = vmatprep.subr.mxu0 0.0
    %1866 = vmatpush1.xpose.msra.mxu0 0.0
    %1867 = vmatprep.subr.mxu0 0.0
    %1868 = vmatpush1.xpose.msra.mxu0 0.0
    %1869 = vmatprep.subr.mxu0 0.0
    %1870 = vmatpush1.xpose.msra.mxu0 0.0
    %1871 = vmatprep.subr.mxu0 0.0
    %1872 = vmatpush1.xpose.msra.mxu0 0.0
    %1873 = vmatprep.subr.mxu0 0.0
    %1874 = vmatpush1.xpose.msra.mxu0 0.0
    %1875 = vmatprep.subr.mxu0 0.0
    %1876 = vmatpush1.xpose.msra.mxu0 0.0
    %1877 = vmatprep.subr.mxu0 0.0
    %1878 = vmatpush1.xpose.msra.mxu0 0.0
    %1879 = vmatprep.subr.mxu0 0.0
    %1880 = vmatpush1.xpose.msra.mxu0 0.0
    %1881 = vmatprep.subr.mxu0 0.0
    %1882 = vmatpush1.xpose.msra.mxu0 0.0
    %1883 = vmatprep.subr.mxu0 0.0
    %1884 = vmatpush1.xpose.msra.mxu0 0.0
    %1885 = vmatprep.subr.mxu0 0.0
    %1886 = vmatpush1.xpose.msra.mxu0 0.0
    %1887 = vmatprep.subr.mxu0 0.0
    %1888 = vmatpush1.xpose.msra.mxu0 0.0
    %1889 = vmatprep.subr.mxu0 0.0
    %1890 = vmatpush1.xpose.msra.mxu0 0.0
    %1891 = vmatprep.subr.mxu0 0.0
    %1892 = vmatpush1.xpose.msra.mxu0 0.0
    %1893 = vmatprep.subr.mxu0 0.0
    %1894 = vmatpush1.xpose.msra.mxu0 0.0
    %1895 = vmatprep.subr.mxu0 0.0
    %1896 = vmatpush1.xpose.msra.mxu0 0.0
    %1897 = vmatprep.subr.mxu0 0.0
    %1898 = vmatpush1.xpose.msra.mxu0 0.0
    %1899 = vmatprep.subr.mxu0 0.0
    %1900 = vmatpush1.xpose.msra.mxu0 0.0
    %1901 = vmatprep.subr.mxu0 0.0
    %1902 = vmatpush1.xpose.msra.mxu0 0.0
    %1903 = vmatprep.subr.mxu0 0.0
    %1904 = vmatpush1.xpose.msra.mxu0 0.0
    %1905 = vmatprep.subr.mxu0 0.0
    %1906 = vmatpush1.xpose.msra.mxu0 0.0
    %1907 = vmatprep.subr.mxu0 0.0
    %1908 = vmatpush1.xpose.msra.mxu0 0.0
    %1909 = vmatprep.subr.mxu0 0.0
    %1910 = vmatpush1.xpose.msra.mxu0 0.0
    %1911 = vmatprep.subr.mxu0 0.0
    %1912 = vmatpush1.xpose.msra.mxu0 0.0
    %1913 = vmatprep.subr.mxu0 0.0
    %1914 = vmatpush1.xpose.msra.mxu0 0.0
    %1915 = vmatprep.subr.mxu0 0.0
    %1916 = vmatpush1.xpose.msra.mxu0 0.0
    %1917 = vmatprep.subr.mxu0 0.0
    %1918 = vmatpush1.xpose.msra.mxu0 0.0
    %1919 = vmatprep.subr.mxu0 0.0
    %1920 = vmatpush1.xpose.msra.mxu0 0.0
    %1921 = vmatprep.subr.mxu0 0.0
    %1922 = vmatpush1.xpose.msra.mxu0 0.0
    %1923 = vmatprep.subr.mxu0 0.0
    %1924 = vmatpush1.xpose.msra.mxu0 0.0
    %1925 = vmatprep.subr.mxu0 0.0
    %1926 = vmatpush1.xpose.msra.mxu0 0.0
    %1927 = vmatprep.mubr.f32.mxu0 0.0
    %1928 = vmatmul.mubr.f32.gmra.mrb[0].mxu0 %v1861
    %v1929 = vpop.f32.mrb[0].mxu0
    %v1930 = vadd.f32 0.0, %v1929
    %v1931 = vpop.f32.mrb[0].mxu0
    %1932 = vdwg.mxu0
    %v1934 = vsel %vm484, %v1853, 0
    %1936 = vmatprep.subr.mxu0 0.0
    %1937 = vmatpush1.xpose.msra.mxu0 %v929
    %1938 = vmatprep.subr.mxu0 0.0
    %1939 = vmatpush1.xpose.msra.mxu0 0.0
    %1940 = vmatprep.subr.mxu0 0.0
    %1941 = vmatpush1.xpose.msra.mxu0 0.0
    %1942 = vmatprep.subr.mxu0 0.0
    %1943 = vmatpush1.xpose.msra.mxu0 0.0
    %1944 = vmatprep.subr.mxu0 0.0
    %1945 = vmatpush1.xpose.msra.mxu0 0.0
    %1946 = vmatprep.subr.mxu0 0.0
    %1947 = vmatpush1.xpose.msra.mxu0 0.0
    %1948 = vmatprep.subr.mxu0 0.0
    %1949 = vmatpush1.xpose.msra.mxu0 0.0
    %1950 = vmatprep.subr.mxu0 0.0
    %1951 = vmatpush1.xpose.msra.mxu0 0.0
    %1952 = vmatprep.subr.mxu0 0.0
    %1953 = vmatpush1.xpose.msra.mxu0 0.0
    %1954 = vmatprep.subr.mxu0 0.0
    %1955 = vmatpush1.xpose.msra.mxu0 0.0
    %1956 = vmatprep.subr.mxu0 0.0
    %1957 = vmatpush1.xpose.msra.mxu0 0.0
    %1958 = vmatprep.subr.mxu0 0.0
    %1959 = vmatpush1.xpose.msra.mxu0 0.0
    %1960 = vmatprep.subr.mxu0 0.0
    %1961 = vmatpush1.xpose.msra.mxu0 0.0
    %1962 = vmatprep.subr.mxu0 0.0
    %1963 = vmatpush1.xpose.msra.mxu0 0.0
    %1964 = vmatprep.subr.mxu0 0.0
    %1965 = vmatpush1.xpose.msra.mxu0 0.0
    %1966 = vmatprep.subr.mxu0 0.0
    %1967 = vmatpush1.xpose.msra.mxu0 0.0
    %1968 = vmatprep.subr.mxu0 0.0
    %1969 = vmatpush1.xpose.msra.mxu0 0.0
    %1970 = vmatprep.subr.mxu0 0.0
    %1971 = vmatpush1.xpose.msra.mxu0 0.0
    %1972 = vmatprep.subr.mxu0 0.0
    %1973 = vmatpush1.xpose.msra.mxu0 0.0
    %1974 = vmatprep.subr.mxu0 0.0
    %1975 = vmatpush1.xpose.msra.mxu0 0.0
    %1976 = vmatprep.subr.mxu0 0.0
    %1977 = vmatpush1.xpose.msra.mxu0 0.0
    %1978 = vmatprep.subr.mxu0 0.0
    %1979 = vmatpush1.xpose.msra.mxu0 0.0
    %1980 = vmatprep.subr.mxu0 0.0
    %1981 = vmatpush1.xpose.msra.mxu0 0.0
    %1982 = vmatprep.subr.mxu0 0.0
    %1983 = vmatpush1.xpose.msra.mxu0 0.0
    %1984 = vmatprep.subr.mxu0 0.0
    %1985 = vmatpush1.xpose.msra.mxu0 0.0
    %1986 = vmatprep.subr.mxu0 0.0
    %1987 = vmatpush1.xpose.msra.mxu0 0.0
    %1988 = vmatprep.subr.mxu0 0.0
    %1989 = vmatpush1.xpose.msra.mxu0 0.0
    %1990 = vmatprep.subr.mxu0 0.0
    %1991 = vmatpush1.xpose.msra.mxu0 0.0
    %1992 = vmatprep.subr.mxu0 0.0
    %1993 = vmatpush1.xpose.msra.mxu0 0.0
    %1994 = vmatprep.subr.mxu0 0.0
    %1995 = vmatpush1.xpose.msra.mxu0 0.0
    %1996 = vmatprep.subr.mxu0 0.0
    %1997 = vmatpush1.xpose.msra.mxu0 0.0
    %1998 = vmatprep.subr.mxu0 0.0
    %1999 = vmatpush1.xpose.msra.mxu0 0.0
    %2000 = vmatprep.mubr.f32.mxu0 0.0
    %2001 = vmatmul.mubr.f32.gmra.mrb[0].mxu0 %v1934
    %v2002 = vpop.f32.mrb[0].mxu0
    %v2003 = vadd.f32 0.0, %v2002
    %v2004 = vpop.f32.mrb[0].mxu0
    %2005 = vdwg.mxu0
    %v2006 = vsel %vm1001, %v1930, -inf
    %2007 = vmax.xlane.f32.xlu0 %v2006
    %v2008 = vpop.xlane.xlu0 %2007
    %v2009 = vsel %vm1001, %v2003, -inf
    %2010 = vmax.xlane.f32.xlu0 %v2009
    %v2011 = vpop.xlane.xlu0 %2010
    %v2012 = vsub.f32 %v1930, %v2008
    %v2013 = vsub.f32 %v2003, %v2011
    %v2014 = vmul.f32 %v2012, 1.442695
    %v2015 = vpow.pop %v2014
    %v2016 = vmul.f32 %v2013, 1.442695
    %v2017 = vpow.pop %v2016
    %v2018 = vsel %vm1001, %v2015, 0.0
    %2019 = vadd.xlane.f32.xlu0 %v2018
    %v2020 = vpop.xlane.xlu0 %2019
    %v2021 = vsel %vm1001, %v2017, 0.0
    %2022 = vadd.xlane.f32.xlu0 %v2021
    %v2023 = vpop.xlane.xlu0 %2022
    %v2024 = vrcp.pop %v2020
    %v2025 = vrcp.pop %v2023
    %v2026 = vmul.f32 %v2015, %v2024
    %v2027 = vmul.f32 %v2017, %v2025
    %2029 = vrot.lane.b32.xlu0 %v1858, 64
    %v2030 = vpop.permute.xlu0 %2029
    %v2033 = vsel %vm1001, %v2026, 0
    %2035 = vmatprep.subr.mxu0 0.0
    %2036 = vmatpush1.msra.mxu0 %v2030
    %2037 = vmatprep.subr.mxu0 0.0
    %2038 = vmatpush1.msra.mxu0 0.0
    %2039 = vmatprep.subr.mxu0 0.0
    %2040 = vmatpush1.msra.mxu0 0.0
    %2041 = vmatprep.subr.mxu0 0.0
    %2042 = vmatpush1.msra.mxu0 0.0
    %2043 = vmatprep.subr.mxu0 0.0
    %2044 = vmatpush1.msra.mxu0 0.0
    %2045 = vmatprep.subr.mxu0 0.0
    %2046 = vmatpush1.msra.mxu0 0.0
    %2047 = vmatprep.subr.mxu0 0.0
    %2048 = vmatpush1.msra.mxu0 0.0
    %2049 = vmatprep.subr.mxu0 0.0
    %2050 = vmatpush1.msra.mxu0 0.0
    %2051 = vmatprep.subr.mxu0 0.0
    %2052 = vmatpush1.msra.mxu0 0.0
    %2053 = vmatprep.subr.mxu0 0.0
    %2054 = vmatpush1.msra.mxu0 0.0
    %2055 = vmatprep.subr.mxu0 0.0
    %2056 = vmatpush1.msra.mxu0 0.0
    %2057 = vmatprep.subr.mxu0 0.0
    %2058 = vmatpush1.msra.mxu0 0.0
    %2059 = vmatprep.subr.mxu0 0.0
    %2060 = vmatpush1.msra.mxu0 0.0
    %2061 = vmatprep.subr.mxu0 0.0
    %2062 = vmatpush1.msra.mxu0 0.0
    %2063 = vmatprep.subr.mxu0 0.0
    %2064 = vmatpush1.msra.mxu0 0.0
    %2065 = vmatprep.subr.mxu0 0.0
    %2066 = vmatpush1.msra.mxu0 0.0
    %2067 = vmatprep.subr.mxu0 0.0
    %2068 = vmatpush1.msra.mxu0 0.0
    %2069 = vmatprep.subr.mxu0 0.0
    %2070 = vmatpush1.msra.mxu0 0.0
    %2071 = vmatprep.subr.mxu0 0.0
    %2072 = vmatpush1.msra.mxu0 0.0
    %2073 = vmatprep.subr.mxu0 0.0
    %2074 = vmatpush1.msra.mxu0 0.0
    %2075 = vmatprep.subr.mxu0 0.0
    %2076 = vmatpush1.msra.mxu0 0.0
    %2077 = vmatprep.subr.mxu0 0.0
    %2078 = vmatpush1.msra.mxu0 0.0
    %2079 = vmatprep.subr.mxu0 0.0
    %2080 = vmatpush1.msra.mxu0 0.0
    %2081 = vmatprep.subr.mxu0 0.0
    %2082 = vmatpush1.msra.mxu0 0.0
    %2083 = vmatprep.subr.mxu0 0.0
    %2084 = vmatpush1.msra.mxu0 0.0
    %2085 = vmatprep.subr.mxu0 0.0
    %2086 = vmatpush1.msra.mxu0 0.0
    %2087 = vmatprep.subr.mxu0 0.0
    %2088 = vmatpush1.msra.mxu0 0.0
    %2089 = vmatprep.subr.mxu0 0.0
    %2090 = vmatpush1.msra.mxu0 0.0
    %2091 = vmatprep.subr.mxu0 0.0
    %2092 = vmatpush1.msra.mxu0 0.0
    %2093 = vmatprep.subr.mxu0 0.0
    %2094 = vmatpush1.msra.mxu0 0.0
    %2095 = vmatprep.subr.mxu0 0.0
    %2096 = vmatpush1.msra.mxu0 0.0
    %2097 = vmatprep.subr.mxu0 0.0
    %2098 = vmatpush1.msra.mxu0 0.0
    %2099 = vmatprep.mubr.f32.mxu0 0.0
    %2100 = vmatmul.mubr.f32.gmra.mrb[0].mxu0 %v2033
    %v2101 = vpop.f32.mrb[0].mxu0
    %v2102 = vadd.f32 0.0, %v2101
    %v2103 = vpop.f32.mrb[0].mxu0
    %2104 = vdwg.mxu0
    %2106 = vrot.lane.b32.xlu0 %v1859, 64
    %v2107 = vpop.permute.xlu0 %2106
    %v2110 = vsel %vm1001, %v2027, 0
    %2112 = vmatprep.subr.mxu0 0.0
    %2113 = vmatpush1.msra.mxu0 %v2107
    %2114 = vmatprep.subr.mxu0 0.0
    %2115 = vmatpush1.msra.mxu0 0.0
    %2116 = vmatprep.subr.mxu0 0.0
    %2117 = vmatpush1.msra.mxu0 0.0
    %2118 = vmatprep.subr.mxu0 0.0
    %2119 = vmatpush1.msra.mxu0 0.0
    %2120 = vmatprep.subr.mxu0 0.0
    %2121 = vmatpush1.msra.mxu0 0.0
    %2122 = vmatprep.subr.mxu0 0.0
    %2123 = vmatpush1.msra.mxu0 0.0
    %2124 = vmatprep.subr.mxu0 0.0
    %2125 = vmatpush1.msra.mxu0 0.0
    %2126 = vmatprep.subr.mxu0 0.0
    %2127 = vmatpush1.msra.mxu0 0.0
    %2128 = vmatprep.subr.mxu0 0.0
    %2129 = vmatpush1.msra.mxu0 0.0
    %2130 = vmatprep.subr.mxu0 0.0
    %2131 = vmatpush1.msra.mxu0 0.0
    %2132 = vmatprep.subr.mxu0 0.0
    %2133 = vmatpush1.msra.mxu0 0.0
    %2134 = vmatprep.subr.mxu0 0.0
    %2135 = vmatpush1.msra.mxu0 0.0
    %2136 = vmatprep.subr.mxu0 0.0
    %2137 = vmatpush1.msra.mxu0 0.0
    %2138 = vmatprep.subr.mxu0 0.0
    %2139 = vmatpush1.msra.mxu0 0.0
    %2140 = vmatprep.subr.mxu0 0.0
    %2141 = vmatpush1.msra.mxu0 0.0
    %2142 = vmatprep.subr.mxu0 0.0
    %2143 = vmatpush1.msra.mxu0 0.0
    %2144 = vmatprep.subr.mxu0 0.0
    %2145 = vmatpush1.msra.mxu0 0.0
    %2146 = vmatprep.subr.mxu0 0.0
    %2147 = vmatpush1.msra.mxu0 0.0
    %2148 = vmatprep.subr.mxu0 0.0
    %2149 = vmatpush1.msra.mxu0 0.0
    %2150 = vmatprep.subr.mxu0 0.0
    %2151 = vmatpush1.msra.mxu0 0.0
    %2152 = vmatprep.subr.mxu0 0.0
    %2153 = vmatpush1.msra.mxu0 0.0
    %2154 = vmatprep.subr.mxu0 0.0
    %2155 = vmatpush1.msra.mxu0 0.0
    %2156 = vmatprep.subr.mxu0 0.0
    %2157 = vmatpush1.msra.mxu0 0.0
    %2158 = vmatprep.subr.mxu0 0.0
    %2159 = vmatpush1.msra.mxu0 0.0
    %2160 = vmatprep.subr.mxu0 0.0
    %2161 = vmatpush1.msra.mxu0 0.0
    %2162 = vmatprep.subr.mxu0 0.0
    %2163 = vmatpush1.msra.mxu0 0.0
    %2164 = vmatprep.subr.mxu0 0.0
    %2165 = vmatpush1.msra.mxu0 0.0
    %2166 = vmatprep.subr.mxu0 0.0
    %2167 = vmatpush1.msra.mxu0 0.0
    %2168 = vmatprep.subr.mxu0 0.0
    %2169 = vmatpush1.msra.mxu0 0.0
    %2170 = vmatprep.subr.mxu0 0.0
    %2171 = vmatpush1.msra.mxu0 0.0
    %2172 = vmatprep.subr.mxu0 0.0
    %2173 = vmatpush1.msra.mxu0 0.0
    %2174 = vmatprep.subr.mxu0 0.0
    %2175 = vmatpush1.msra.mxu0 0.0
    %2176 = vmatprep.mubr.f32.mxu0 0.0
    %2177 = vmatmul.mubr.f32.gmra.mrb[0].mxu0 %v2110
    %v2178 = vpop.f32.mrb[0].mxu0
    %v2179 = vadd.f32 0.0, %v2178
    %v2180 = vpop.f32.mrb[0].mxu0
    %2181 = vdwg.mxu0
    %v2182 = vadd.f32 %v1846, %v2102
    %v2183 = vadd.f32 %v1847, %v2179
    %v2184 = vld [vmem:[#allocation22] sm:$0x7]
    %v2185 = vld [vmem:[#allocation23] sm:$0x1]
    %2188 = vrot.lane.b32.xlu0 %v612, 64
    %v2189 = vpop.permute.xlu0 %2188
    %2190 = vrot.lane.b32.xlu0 %v617, 64
    %v2191 = vpop.permute.xlu0 %2190
    %2194 = vmatprep.subr.mxu0 0.0
    %2195 = vmatpush1.msra.mxu0 %v2189
    %2196 = vmatprep.subr.mxu0 0.0
    %2197 = vmatpush1.msra.mxu0 %v2191
    %2198 = vmatprep.subr.mxu0 0.0
    %2199 = vmatpush1.msra.mxu0 0.0
    %2200 = vmatprep.subr.mxu0 0.0
    %2201 = vmatpush1.msra.mxu0 0.0
    %2202 = vmatprep.subr.mxu0 0.0
    %2203 = vmatpush1.msra.mxu0 0.0
    %2204 = vmatprep.subr.mxu0 0.0
    %2205 = vmatpush1.msra.mxu0 0.0
    %2206 = vmatprep.subr.mxu0 0.0
    %2207 = vmatpush1.msra.mxu0 0.0
    %2208 = vmatprep.subr.mxu0 0.0
    %2209 = vmatpush1.msra.mxu0 0.0
    %2210 = vmatprep.subr.mxu0 0.0
    %2211 = vmatpush1.msra.mxu0 0.0
    %2212 = vmatprep.subr.mxu0 0.0
    %2213 = vmatpush1.msra.mxu0 0.0
    %2214 = vmatprep.subr.mxu0 0.0
    %2215 = vmatpush1.msra.mxu0 0.0
    %2216 = vmatprep.subr.mxu0 0.0
    %2217 = vmatpush1.msra.mxu0 0.0
    %2218 = vmatprep.subr.mxu0 0.0
    %2219 = vmatpush1.msra.mxu0 0.0
    %2220 = vmatprep.subr.mxu0 0.0
    %2221 = vmatpush1.msra.mxu0 0.0
    %2222 = vmatprep.subr.mxu0 0.0
    %2223 = vmatpush1.msra.mxu0 0.0
    %2224 = vmatprep.subr.mxu0 0.0
    %2225 = vmatpush1.msra.mxu0 0.0
    %2226 = vmatprep.subr.mxu0 0.0
    %2227 = vmatpush1.msra.mxu0 0.0
    %2228 = vmatprep.subr.mxu0 0.0
    %2229 = vmatpush1.msra.mxu0 0.0
    %2230 = vmatprep.subr.mxu0 0.0
    %2231 = vmatpush1.msra.mxu0 0.0
    %2232 = vmatprep.subr.mxu0 0.0
    %2233 = vmatpush1.msra.mxu0 0.0
    %2234 = vmatprep.subr.mxu0 0.0
    %2235 = vmatpush1.msra.mxu0 0.0
    %2236 = vmatprep.subr.mxu0 0.0
    %2237 = vmatpush1.msra.mxu0 0.0
    %2238 = vmatprep.subr.mxu0 0.0
    %2239 = vmatpush1.msra.mxu0 0.0
    %2240 = vmatprep.subr.mxu0 0.0
    %2241 = vmatpush1.msra.mxu0 0.0
    %2242 = vmatprep.subr.mxu0 0.0
    %2243 = vmatpush1.msra.mxu0 0.0
    %2244 = vmatprep.subr.mxu0 0.0
    %2245 = vmatpush1.msra.mxu0 0.0
    %2246 = vmatprep.subr.mxu0 0.0
    %2247 = vmatpush1.msra.mxu0 0.0
    %2248 = vmatprep.subr.mxu0 0.0
    %2249 = vmatpush1.msra.mxu0 0.0
    %2250 = vmatprep.subr.mxu0 0.0
    %2251 = vmatpush1.msra.mxu0 0.0
    %2252 = vmatprep.subr.mxu0 0.0
    %2253 = vmatpush1.msra.mxu0 0.0
    %2254 = vmatprep.subr.mxu0 0.0
    %2255 = vmatpush1.msra.mxu0 0.0
    %2256 = vmatprep.subr.mxu0 0.0
    %2257 = vmatpush1.msra.mxu0 0.0
    %2258 = vmatprep.mubr.f32.mxu0 0.0
    %2259 = vmatmul.mubr.f32.gmra.mrb[0].mxu0 %v289
    %v2260 = vpop.f32.mrb[0].mxu0
    %v2261 = vadd.f32 0.0, %v2260
    %v2262 = vpop.f32.mrb[0].mxu0
    %2263 = vmatprep.mubr.f32.mxu0 0.0
    %2264 = vmatmul.mubr.f32.gmra.mrb[0].mxu0 %v292
    %v2265 = vpop.f32.mrb[0].mxu0
    %v2266 = vadd.f32 0.0, %v2265
    %v2267 = vpop.f32.mrb[0].mxu0
    %2268 = vdwg.mxu0
    %2269 = vmatprep.subr.mxu0 0.0
    %2270 = vmatpush1.msra.mxu0 %v2189
    %2271 = vmatprep.subr.mxu0 0.0
    %2272 = vmatpush1.msra.mxu0 %v2191
    %2273 = vmatprep.subr.mxu0 0.0
    %2274 = vmatpush1.msra.mxu0 0.0
    %2275 = vmatprep.subr.mxu0 0.0
    %2276 = vmatpush1.msra.mxu0 0.0
    %2277 = vmatprep.subr.mxu0 0.0
    %2278 = vmatpush1.msra.mxu0 0.0
    %2279 = vmatprep.subr.mxu0 0.0
    %2280 = vmatpush1.msra.mxu0 0.0
    %2281 = vmatprep.subr.mxu0 0.0
    %2282 = vmatpush1.msra.mxu0 0.0
    %2283 = vmatprep.subr.mxu0 0.0
    %2284 = vmatpush1.msra.mxu0 0.0
    %2285 = vmatprep.subr.mxu0 0.0
    %2286 = vmatpush1.msra.mxu0 0.0
    %2287 = vmatprep.subr.mxu0 0.0
    %2288 = vmatpush1.msra.mxu0 0.0
    %2289 = vmatprep.subr.mxu0 0.0
    %2290 = vmatpush1.msra.mxu0 0.0
    %2291 = vmatprep.subr.mxu0 0.0
    %2292 = vmatpush1.msra.mxu0 0.0
    %2293 = vmatprep.subr.mxu0 0.0
    %2294 = vmatpush1.msra.mxu0 0.0
    %2295 = vmatprep.subr.mxu0 0.0
    %2296 = vmatpush1.msra.mxu0 0.0
    %2297 = vmatprep.subr.mxu0 0.0
    %2298 = vmatpush1.msra.mxu0 0.0
    %2299 = vmatprep.subr.mxu0 0.0
    %2300 = vmatpush1.msra.mxu0 0.0
    %2301 = vmatprep.subr.mxu0 0.0
    %2302 = vmatpush1.msra.mxu0 0.0
    %2303 = vmatprep.subr.mxu0 0.0
    %2304 = vmatpush1.msra.mxu0 0.0
    %2305 = vmatprep.subr.mxu0 0.0
    %2306 = vmatpush1.msra.mxu0 0.0
    %2307 = vmatprep.subr.mxu0 0.0
    %2308 = vmatpush1.msra.mxu0 0.0
    %2309 = vmatprep.subr.mxu0 0.0
    %2310 = vmatpush1.msra.mxu0 0.0
    %2311 = vmatprep.subr.mxu0 0.0
    %2312 = vmatpush1.msra.mxu0 0.0
    %2313 = vmatprep.subr.mxu0 0.0
    %2314 = vmatpush1.msra.mxu0 0.0
    %2315 = vmatprep.subr.mxu0 0.0
    %2316 = vmatpush1.msra.mxu0 0.0
    %2317 = vmatprep.subr.mxu0 0.0
    %2318 = vmatpush1.msra.mxu0 0.0
    %2319 = vmatprep.subr.mxu0 0.0
    %2320 = vmatpush1.msra.mxu0 0.0
    %2321 = vmatprep.subr.mxu0 0.0
    %2322 = vmatpush1.msra.mxu0 0.0
    %2323 = vmatprep.subr.mxu0 0.0
    %2324 = vmatpush1.msra.mxu0 0.0
    %2325 = vmatprep.subr.mxu0 0.0
    %2326 = vmatpush1.msra.mxu0 0.0
    %2327 = vmatprep.subr.mxu0 0.0
    %2328 = vmatpush1.msra.mxu0 0.0
    %2329 = vmatprep.subr.mxu0 0.0
    %2330 = vmatpush1.msra.mxu0 0.0
    %2331 = vmatprep.subr.mxu0 0.0
    %2332 = vmatpush1.msra.mxu0 0.0
    %2333 = vmatprep.mubr.f32.mxu0 0.0
    %2334 = vmatmul.mubr.f32.gmra.mrb[0].mxu0 %v370
    %v2335 = vpop.f32.mrb[0].mxu0
    %v2336 = vadd.f32 0.0, %v2335
    %v2337 = vpop.f32.mrb[0].mxu0
    %2338 = vmatprep.mubr.f32.mxu0 0.0
    %2339 = vmatmul.mubr.f32.gmra.mrb[0].mxu0 %v373
    %v2340 = vpop.f32.mrb[0].mxu0
    %v2341 = vadd.f32 0.0, %v2340
    %v2342 = vpop.f32.mrb[0].mxu0
    %2343 = vdwg.mxu0
    %v2344 = vlaneseq
    %v2345 = vshrl.u32 %v2344, 7
    %v2346 = vsub.s32 0, %v2345
    %v2347 = vrot.slane %v2184, %v2346
    %v2348 = vmul.f32 %v2261, %v2347
    %v2349 = vmul.f32 %v2266, %v2347
    %v2350 = vlaneseq
    %v2351 = vshrl.u32 %v2350, 7
    %v2352 = vsub.s32 1, %v2351
    %v2353 = vrot.slane %v2184, %v2352
    %2355 = vrot.lane.b32.xlu0 %v2353, 64
    %v2356 = vpop.permute.xlu0 %2355
    %v2358 = vmul.f32 %v612, %v2356
    %v2359 = vmul.f32 %v617, %v2356
    %2362 = vrot.lane.b32.xlu0 %v2358, 64
    %v2363 = vpop.permute.xlu0 %2362
    %2364 = vrot.lane.b32.xlu0 %v2359, 64
    %v2365 = vpop.permute.xlu0 %2364
    %v2368 = vadd.f32 %v2348, %v2363
    %v2369 = vadd.f32 %v2349, %v2365
    %v2370 = vlaneseq
    %v2371 = vshrl.u32 %v2370, 7
    %v2372 = vsub.s32 2, %v2371
    %v2373 = vrot.slane %v2184, %v2372
    %v2374 = vmul.f32 %v2336, %v2373
    %v2375 = vmul.f32 %v2341, %v2373
    %v2376 = vadd.f32 %v2368, %v2374
    %v2377 = vadd.f32 %v2369, %v2375
    %v2379 = vlaneseq
    %v2380 = vshrl.u32 %v2379, 7
    %v2381 = vsub.s32 0, %v2380
    %v2382 = vrot.slane %v2185, %v2381
    %v2384 = vadd.f32 %v2376, %v2382
    %v2385 = vadd.f32 %v2377, %v2382
    %v2386 = vadd.f32 %v480, %v2182
    %v2387 = vadd.f32 %v481, %v2183
    %v2388 = vadd.f32 %v2386, %v2384
    %v2389 = vadd.f32 %v2387, %v2385
    %v2390 = vld [vmem:[#allocation25] sm:$0x1]
    %v2391 = vld [vmem:[#allocation26] sm:$0x1]
    %v2392 = vsel %vm484, %v2388, 0.0
    %2393 = vadd.xlane.f32.xlu0 %v2392
    %v2394 = vpop.xlane.xlu0 %2393
    %v2395 = vsel %vm484, %v2389, 0.0
    %2396 = vadd.xlane.f32.xlu0 %v2395
    %v2397 = vpop.xlane.xlu0 %2396
    %v2398 = vmul.f32 %v2394, %v491
    %v2399 = vmul.f32 %v2397, %v491
    %v2400 = vsub.f32 %v2388, %v2398
    %v2401 = vsub.f32 %v2389, %v2399
    %v2402 = vmul.f32 %v2400, %v2400
    %v2403 = vmul.f32 %v2401, %v2401
    %v2404 = vsel %vm484, %v2402, 0.0
    %2405 = vadd.xlane.f32.xlu0 %v2404
    %v2406 = vpop.xlane.xlu0 %2405
    %v2407 = vsel %vm484, %v2403, 0.0
    %2408 = vadd.xlane.f32.xlu0 %v2407
    %v2409 = vpop.xlane.xlu0 %2408
    %v2410 = vmul.f32 %v2406, %v491
    %v2411 = vmul.f32 %v2409, %v491
    %v2412 = vadd.f32 %v2410, 1e-05
    %v2413 = vadd.f32 %v2411, 1e-05
    %v2414 = vrsqrt.pop %v2412
    %v2415 = vrsqrt.pop %v2413
    %v2416 = vmul.f32 %v2400, %v2414
    %v2417 = vmul.f32 %v2401, %v2415
    %v2419 = vlaneseq
    %v2420 = vshrl.u32 %v2419, 7
    %v2421 = vsub.s32 0, %v2420
    %v2422 = vrot.slane %v2390, %v2421
    %v2424 = vmul.f32 %v2416, %v2422
    %v2425 = vmul.f32 %v2417, %v2422
    %v2427 = vlaneseq
    %v2428 = vshrl.u32 %v2427, 7
    %v2429 = vsub.s32 0, %v2428
    %v2430 = vrot.slane %v2391, %v2429
    %v2432 = vadd.f32 %v2424, %v2430
    %v2433 = vadd.f32 %v2425, %v2430
    %v2434 = vld [vmem:[%s17] sm:$0xff]
    %v2435 = vld [vmem:[%s17 + $0x8] sm:$0xff]
    %v2436 = vld [vmem:[%s17 + $0x10] sm:$0xff]
    %v2437 = vld [vmem:[%s17 + $0x18] sm:$0xff]
    %v2438 = vld [vmem:[%s18] sm:$0x1]
    %v2440 = vlaneseq
    %v2441 = vshrl.u32 %v2440, 7
    %v2442 = vsub.s32 0, %v2441
    %v2443 = vrot.slane %v2438, %v2442
    %v2446 = vsel %vm484, %v2432, 0
    %v2449 = vsel %vm484, %v2433, 0
    %2451 = vmatprep.subr.mxu0 0.0
    %2452 = vmatpush1.msra.mxu0 %v2434
    %2453 = vmatprep.subr.mxu0 0.0
    %2454 = vmatpush1.msra.mxu0 %v2435
    %2455 = vmatprep.subr.mxu0 0.0
    %2456 = vmatpush1.msra.mxu0 %v2436
    %2457 = vmatprep.subr.mxu0 0.0
    %2458 = vmatpush1.msra.mxu0 %v2437
    %2459 = vmatprep.subr.mxu0 0.0
    %2460 = vmatpush1.msra.mxu0 0.0
    %2461 = vmatprep.subr.mxu0 0.0
    %2462 = vmatpush1.msra.mxu0 0.0
    %2463 = vmatprep.subr.mxu0 0.0
    %2464 = vmatpush1.msra.mxu0 0.0
    %2465 = vmatprep.subr.mxu0 0.0
    %2466 = vmatpush1.msra.mxu0 0.0
    %2467 = vmatprep.subr.mxu0 0.0
    %2468 = vmatpush1.msra.mxu0 0.0
    %2469 = vmatprep.subr.mxu0 0.0
    %2470 = vmatpush1.msra.mxu0 0.0
    %2471 = vmatprep.subr.mxu0 0.0
    %2472 = vmatpush1.msra.mxu0 0.0
    %2473 = vmatprep.subr.mxu0 0.0
    %2474 = vmatpush1.msra.mxu0 0.0
    %2475 = vmatprep.subr.mxu0 0.0
    %2476 = vmatpush1.msra.mxu0 0.0
    %2477 = vmatprep.subr.mxu0 0.0
    %2478 = vmatpush1.msra.mxu0 0.0
    %2479 = vmatprep.subr.mxu0 0.0
    %2480 = vmatpush1.msra.mxu0 0.0
    %2481 = vmatprep.subr.mxu0 0.0
    %2482 = vmatpush1.msra.mxu0 0.0
    %2483 = vmatprep.subr.mxu0 0.0
    %2484 = vmatpush1.msra.mxu0 0.0
    %2485 = vmatprep.subr.mxu0 0.0
    %2486 = vmatpush1.msra.mxu0 0.0
    %2487 = vmatprep.subr.mxu0 0.0
    %2488 = vmatpush1.msra.mxu0 0.0
    %2489 = vmatprep.subr.mxu0 0.0
    %2490 = vmatpush1.msra.mxu0 0.0
    %2491 = vmatprep.subr.mxu0 0.0
    %2492 = vmatpush1.msra.mxu0 0.0
    %2493 = vmatprep.subr.mxu0 0.0
    %2494 = vmatpush1.msra.mxu0 0.0
    %2495 = vmatprep.subr.mxu0 0.0
    %2496 = vmatpush1.msra.mxu0 0.0
    %2497 = vmatprep.subr.mxu0 0.0
    %2498 = vmatpush1.msra.mxu0 0.0
    %2499 = vmatprep.subr.mxu0 0.0
    %2500 = vmatpush1.msra.mxu0 0.0
    %2501 = vmatprep.subr.mxu0 0.0
    %2502 = vmatpush1.msra.mxu0 0.0
    %2503 = vmatprep.subr.mxu0 0.0
    %2504 = vmatpush1.msra.mxu0 0.0
    %2505 = vmatprep.subr.mxu0 0.0
    %2506 = vmatpush1.msra.mxu0 0.0
    %2507 = vmatprep.subr.mxu0 0.0
    %2508 = vmatpush1.msra.mxu0 0.0
    %2509 = vmatprep.subr.mxu0 0.0
    %2510 = vmatpush1.msra.mxu0 0.0
    %2511 = vmatprep.subr.mxu0 0.0
    %2512 = vmatpush1.msra.mxu0 0.0
    %2513 = vmatprep.subr.mxu0 0.0
    %2514 = vmatpush1.msra.mxu0 0.0
    %2515 = vmatprep.mubr.f32.mxu0 0.0
    %2516 = vmatmul.mubr.f32.gmra.mrb[0].mxu0 %v2446
    %v2517 = vpop.f32.mrb[0].mxu0
    %v2518 = vadd.f32 %v2443, %v2517
    %v2519 = vpop.f32.mrb[0].mxu0
    %2520 = vmatprep.mubr.f32.mxu0 0.0
    %2521 = vmatmul.mubr.f32.gmra.mrb[0].mxu0 %v2449
    %v2522 = vpop.f32.mrb[0].mxu0
    %v2523 = vadd.f32 %v2443, %v2522
    %v2524 = vpop.f32.mrb[0].mxu0
    %2525 = vdwg.mxu0
    %v2526 = vmul.f32 %v2518, 0.5
    %v2527 = vmul.f32 %v2523, 0.5
    %v2528 = vmul.f32 %v2518, 0.70710677
    %v2529 = vmul.f32 %v2523, 0.70710677
    %v2530 = verf.f32.pop %v2528
    %v2531 = verf.f32.pop %v2529
    %v2532 = vadd.f32 %v2530, 1.0
    %v2533 = vadd.f32 %v2531, 1.0
    %v2534 = vmul.f32 %v2526, %v2532
    %v2535 = vmul.f32 %v2527, %v2533
    %v2536 = vld [vmem:[#allocation28] sm:$0xff]
    %v2537 = vld [vmem:[#allocation28 + $0x8] sm:$0xff]
    %v2538 = vld [vmem:[#allocation28 + $0x10] sm:$0xff]
    %v2539 = vld [vmem:[#allocation28 + $0x18] sm:$0xff]
    %v2540 = vld [vmem:[%s20] sm:$0x1]
    %v2542 = vlaneseq
    %v2543 = vshrl.u32 %v2542, 7
    %v2544 = vsub.s32 0, %v2543
    %v2545 = vrot.slane %v2540, %v2544
    %v2548 = vsel %vm484, %v2534, 0
    %v2551 = vsel %vm484, %v2535, 0
    %2553 = vmatprep.subr.mxu0 0.0
    %2554 = vmatpush1.msra.mxu0 %v2536
    %2555 = vmatprep.subr.mxu0 0.0
    %2556 = vmatpush1.msra.mxu0 %v2537
    %2557 = vmatprep.subr.mxu0 0.0
    %2558 = vmatpush1.msra.mxu0 %v2538
    %2559 = vmatprep.subr.mxu0 0.0
    %2560 = vmatpush1.msra.mxu0 %v2539
    %2561 = vmatprep.subr.mxu0 0.0
    %2562 = vmatpush1.msra.mxu0 0.0
    %2563 = vmatprep.subr.mxu0 0.0
    %2564 = vmatpush1.msra.mxu0 0.0
    %2565 = vmatprep.subr.mxu0 0.0
    %2566 = vmatpush1.msra.mxu0 0.0
    %2567 = vmatprep.subr.mxu0 0.0
    %2568 = vmatpush1.msra.mxu0 0.0
    %2569 = vmatprep.subr.mxu0 0.0
    %2570 = vmatpush1.msra.mxu0 0.0
    %2571 = vmatprep.subr.mxu0 0.0
    %2572 = vmatpush1.msra.mxu0 0.0
    %2573 = vmatprep.subr.mxu0 0.0
    %2574 = vmatpush1.msra.mxu0 0.0
    %2575 = vmatprep.subr.mxu0 0.0
    %2576 = vmatpush1.msra.mxu0 0.0
    %2577 = vmatprep.subr.mxu0 0.0
    %2578 = vmatpush1.msra.mxu0 0.0
    %2579 = vmatprep.subr.mxu0 0.0
    %2580 = vmatpush1.msra.mxu0 0.0
    %2581 = vmatprep.subr.mxu0 0.0
    %2582 = vmatpush1.msra.mxu0 0.0
    %2583 = vmatprep.subr.mxu0 0.0
    %2584 = vmatpush1.msra.mxu0 0.0
    %2585 = vmatprep.subr.mxu0 0.0
    %2586 = vmatpush1.msra.mxu0 0.0
    %2587 = vmatprep.subr.mxu0 0.0
    %2588 = vmatpush1.msra.mxu0 0.0
    %2589 = vmatprep.subr.mxu0 0.0
    %2590 = vmatpush1.msra.mxu0 0.0
    %2591 = vmatprep.subr.mxu0 0.0
    %2592 = vmatpush1.msra.mxu0 0.0
    %2593 = vmatprep.subr.mxu0 0.0
    %2594 = vmatpush1.msra.mxu0 0.0
    %2595 = vmatprep.subr.mxu0 0.0
    %2596 = vmatpush1.msra.mxu0 0.0
    %2597 = vmatprep.subr.mxu0 0.0
    %2598 = vmatpush1.msra.mxu0 0.0
    %2599 = vmatprep.subr.mxu0 0.0
    %2600 = vmatpush1.msra.mxu0 0.0
    %2601 = vmatprep.subr.mxu0 0.0
    %2602 = vmatpush1.msra.mxu0 0.0
    %2603 = vmatprep.subr.mxu0 0.0
    %2604 = vmatpush1.msra.mxu0 0.0
    %2605 = vmatprep.subr.mxu0 0.0
    %2606 = vmatpush1.msra.mxu0 0.0
    %2607 = vmatprep.subr.mxu0 0.0
    %2608 = vmatpush1.msra.mxu0 0.0
    %2609 = vmatprep.subr.mxu0 0.0
    %2610 = vmatpush1.msra.mxu0 0.0
    %2611 = vmatprep.subr.mxu0 0.0
    %2612 = vmatpush1.msra.mxu0 0.0
    %2613 = vmatprep.subr.mxu0 0.0
    %2614 = vmatpush1.msra.mxu0 0.0
    %2615 = vmatprep.subr.mxu0 0.0
    %2616 = vmatpush1.msra.mxu0 0.0
    %2617 = vmatprep.mubr.f32.mxu0 0.0
    %2618 = vmatmul.mubr.f32.gmra.mrb[0].mxu0 %v2548
    %v2619 = vpop.f32.mrb[0].mxu0
    %v2620 = vadd.f32 %v2545, %v2619
    %v2621 = vpop.f32.mrb[0].mxu0
    %2622 = vmatprep.mubr.f32.mxu0 0.0
    %2623 = vmatmul.mubr.f32.gmra.mrb[0].mxu0 %v2551
    %v2624 = vpop.f32.mrb[0].mxu0
    %v2625 = vadd.f32 %v2545, %v2624
    %v2626 = vpop.f32.mrb[0].mxu0
    %2627 = vdwg.mxu0
    %v2628 = vadd.f32 %v2388, %v2620
    %v2629 = vadd.f32 %v2389, %v2625
    %2630 = vst.msk [vmem:[#allocation29] sm:$0xff] %vm484, %v2628
    %2631 = vst.msk [vmem:[#allocation29 + $0x8] sm:$0xff] %vm484, %v2629
    // Predicated region
    $region154: #{tpu_custom_call.1} parent=1 // pred_check
      _
    $region155: #{tpu_custom_call.1} parent=1 // pred_check_branch
      %2633 = sbr.rel (0) target = $region157
    $region156: #{tpu_custom_call.1} parent=1 // pred_region
      %s2635 = ssub.s32 256, 256
      %2636 = vsyncadd [#allocation4], %s2635
      %s2637 = sshll.u32 [#allocation29], 4
      %s2638 = int_to_ptr.vmem [resolvable:$true] %s2637
      %2643 = dma.vmem_to_hbm [thread:$0]  %s2638, 256, %s21, [#allocation4], 128, 128, 8
    $region157: #{tpu_custom_call.1} parent=1 // pred_fallthru
      _
    // Predicated region
    $region158: #{tpu_custom_call.1} parent=1 // pred_check
      _
    $region159: #{tpu_custom_call.1} parent=1 // pred_check_branch
      %2645 = sbr.rel (0) target = $region161
    $region160: #{tpu_custom_call.1} parent=1 // pred_region
      %2646 = dma.done [#allocation4], 256
    $region161: #{tpu_custom_call.1} parent=1 // pred_fallthru
      _
    %2647 = vsyncpa [#allocation3], 1
    %2648 = vsyncpa [#allocation6], 1
    %2649 = vsyncpa [#allocation9], 1
    %2650 = vsyncpa [#allocation12], 1
    %2651 = vsyncpa [#allocation15], 1
    %2652 = vsyncpa [#allocation18], 1
    %2653 = vsyncpa [#allocation21], 1
    %2654 = vsyncpa [#allocation24], 1
    %2655 = vsyncpa [#allocation27], 1
    %2656 = vsyncpa [#allocation4], 1

</llo_original>
